<compile_context>
chip_gen: v7x
topology: tpu7x:2x2x1
jax: 0.10.0
libtpu: 0.0.40
codegen_flags: <defaults>
</compile_context>

<pallas_src>
import functools

import jax
import jax.numpy as jnp
import numpy as np
from jax import lax
from jax.experimental import pallas as pl
from jax.experimental.pallas import tpu as pltpu


def _resblock_kernel(mask_ref, x_ref, w1_ref, b1_ref, w2_ref, b2_ref, out_ref,
                     stack_ref, *, W, K, res_scale, compute_dtype):
    """Fused ResBlock over a (C, L) slab, L = N*H*W (batch folded into lanes).

    mask_ref : (K*K, 1, L)   compute_dtype  per-tap border masks (1 inside, 0 outside)
    x_ref    : (C, L)        input slab (channels in sublanes, batch*spatial in lanes)
    w*_ref   : (C, K*K*C)    compute_dtype  lane-dense fused-tap weight slabs
    b*_ref   : (C, 1)        f32 biases
    out_ref  : (C, L)
    stack_ref: (K*K*C, L)    compute_dtype  VMEM scratch for the stacked taps
    """
    C, L = x_ref.shape
    pad = K // 2

    x_f32 = x_ref[...].astype(jnp.float32)

    def conv(v_f32, w_ref, b_ref):
        # Build the (K*K*C, L) stacked-tap activation once (rolls go to the
        # XLU slot, masks implement zero "same" padding), then do a single
        # well-fed MXU matmul with f32 accumulation.
        v = v_f32.astype(compute_dtype)          # one cast per conv, not per tap
        t = 0
        for kh in range(K):
            for kw in range(K):
                off = (kh - pad) * W + (kw - pad)
                if off == 0:
                    vs = v                        # center tap: no roll, no mask
                else:
                    vs = pltpu.roll(v, shift=(-off) % L, axis=1) * mask_ref[t]
                stack_ref[pl.ds(t * C, C), :] = vs
                t += 1
        y = jnp.dot(w_ref[...], stack_ref[...],   # (C, K*K*C) @ (K*K*C, L)
                    preferred_element_type=jnp.float32)
        return y + b_ref[...].astype(jnp.float32)

    y1 = jnp.maximum(conv(x_f32, w1_ref, b1_ref), 0.0)    # conv1 + bias + ReLU
    y2 = conv(y1, w2_ref, b2_ref)                          # conv2 + bias
    res = y2 if res_scale == 1.0 else y2 * res_scale       # skip mul when 1.0
    out_ref[...] = (res + x_f32).astype(out_ref.dtype)


def _tap_masks(H, W, K, N):
    """(K*K, 1, N*H*W): 1.0 where the shifted source pixel is inside its image."""
    pad = K // 2
    hh = np.arange(H)[:, None]
    ww = np.arange(W)[None, :]
    masks = []
    for kh in range(K):
        for kw in range(K):
            dh, dw = kh - pad, kw - pad
            valid = ((hh + dh >= 0) & (hh + dh < H) &
                     (ww + dw >= 0) & (ww + dw < W))
            masks.append(np.tile(valid.reshape(1, H * W), (1, N)))
    return np.stack(masks, axis=0).astype(np.float32)


def resblock_pallas(x_nchw, w1_oihw, b1, w2_oihw, b2, *, res_scale=1.0,
                    compute_dtype=jnp.float32):
    """ResBlock forward.

    x_nchw : (N, C, H, W)  activations (PyTorch layout).
    w*_oihw: (C, C, K, K)  PyTorch Conv2d weights (out, in, kh, kw).
    b*     : (C,)          PyTorch Conv2d biases.
    """
    N, C, H, W = x_nchw.shape
    K = w1_oihw.shape[-1]
    HW = H * W
    L = N * HW
    KK = K * K

    # OIHW -> (Cout, kh, kw, Cin) -> lane-dense (Cout, K*K*Cin) slab so that
    # slot t*C + cin matches row t*C + cin of the stacked-tap activation.
    # Pre-cast to compute dtype (bf16 halves weight VMEM and hits the MXU fast
    # path; accumulation stays f32 via preferred_element_type).
    w1m = jnp.transpose(w1_oihw, (0, 2, 3, 1)).reshape(C, KK * C).astype(compute_dtype)
    w2m = jnp.transpose(w2_oihw, (0, 2, 3, 1)).reshape(C, KK * C).astype(compute_dtype)
    b1c = b1.reshape(C, 1).astype(jnp.float32)
    b2c = b2.reshape(C, 1).astype(jnp.float32)
    masks = jnp.asarray(_tap_masks(H, W, K, N)).astype(compute_dtype)

    # Fold batch into the lane dim: (N, C, H, W) -> (C, N*H*W).  Single grid
    # step (v5e/v6e are single-TC; grid=(N,) would just be a serial loop), and
    # the matmul lane width becomes N*HW.
    x = jnp.transpose(x_nchw.reshape(N, C, HW), (1, 0, 2)).reshape(C, L)

    kernel = functools.partial(_resblock_kernel, W=W, K=K,
                               res_scale=float(res_scale),
                               compute_dtype=compute_dtype)

    out = pl.pallas_call(
        kernel,
        out_shape=jax.ShapeDtypeStruct((C, L), x_nchw.dtype),
        grid=(1,),
        in_specs=[
            pl.BlockSpec((KK, 1, L), lambda n: (0, 0, 0)),   # tap masks
            pl.BlockSpec((C, L), lambda n: (0, 0)),          # x slab
            pl.BlockSpec((C, KK * C), lambda n: (0, 0)),     # w1 slab
            pl.BlockSpec((C, 1), lambda n: (0, 0)),          # b1
            pl.BlockSpec((C, KK * C), lambda n: (0, 0)),     # w2 slab
            pl.BlockSpec((C, 1), lambda n: (0, 0)),          # b2
        ],
        out_specs=pl.BlockSpec((C, L), lambda n: (0, 0)),
        scratch_shapes=[pltpu.VMEM((KK * C, L), compute_dtype)],
        compiler_params=pltpu.CompilerParams(
            dimension_semantics=("arbitrary",)),
        # TODO(synk): on v7x (2 TensorCores) with larger N, split the folded
        # batch/lane dim across cores (CORE_PARALLEL grid axis / core_map)
        # instead of a single step, and for large images add a spatial
        # row-tile grid axis with a +/-pad row halo sized to v7x's 64 MiB
        # (vs 128 MiB on v5e/v6e) VMEM, raising vmem_limit_bytes explicitly.
    )(masks, x, w1m, b1c, w2m, b2c)

    return jnp.transpose(out.reshape(C, N, HW), (1, 0, 2)).reshape(N, C, H, W)


def resblock_reference(x_nchw, w1_oihw, b1, w2_oihw, b2, *, res_scale=1.0):
    """Pure-JAX reference, identical to PyTorch Conv2d (cross-correlation) semantics."""
    dn = lax.conv_dimension_numbers(x_nchw.shape, w1_oihw.shape,
                                    ("NCHW", "OIHW", "NCHW"))
    y = lax.conv_general_dilated(x_nchw, w1_oihw, (1, 1), "SAME",
                                 dimension_numbers=dn,
                                 precision=lax.Precision.HIGHEST)
    y = jnp.maximum(y + b1.reshape(1, -1, 1, 1), 0.0)
    y = lax.conv_general_dilated(y, w2_oihw, (1, 1), "SAME",
                                 dimension_numbers=dn,
                                 precision=lax.Precision.HIGHEST)
    y = y + b2.reshape(1, -1, 1, 1)
    return y * res_scale + x_nchw


if __name__ == "__main__":
    # ResBlock(default_conv, n_feats=64, kernel_size=3, bias=True, bn=False,
    #          act=ReLU, res_scale=1) -- the standard EDSR configuration.
    N, C, H, W, K = 2, 64, 16, 16, 3
    res_scale = 1.0

    key = jax.random.PRNGKey(0)
    kx, k1, k2, k3, k4 = jax.random.split(key, 5)
    x = jax.random.normal(kx, (N, C, H, W), jnp.float32)
    w1 = jax.random.normal(k1, (C, C, K, K), jnp.float32) * 0.05   # OIHW, like PyTorch
    b1 = jax.random.normal(k2, (C,), jnp.float32) * 0.05
    w2 = jax.random.normal(k3, (C, C, K, K), jnp.float32) * 0.05
    b2 = jax.random.normal(k4, (C,), jnp.float32) * 0.05

    ref = resblock_reference(x, w1, b1, w2, b2, res_scale=res_scale)

    # f32 compute path: bit-tight check against the reference.
    out = resblock_pallas(x, w1, b1, w2, b2, res_scale=res_scale,
                          compute_dtype=jnp.float32)
    out = jax.block_until_ready(out)
    np.testing.assert_allclose(np.asarray(out), np.asarray(ref),
                               atol=2e-3, rtol=2e-3)

    # bf16 compute path (recommended on v6e/v7x): bf16 operands, f32 accumulate.
    out_bf16 = resblock_pallas(x, w1, b1, w2, b2, res_scale=res_scale,
                               compute_dtype=jnp.bfloat16)
    out_bf16 = jax.block_until_ready(out_bf16)
    np.testing.assert_allclose(np.asarray(out_bf16), np.asarray(ref),
                               atol=1e-1, rtol=1e-1)

    print("KERNEL_OK")
</pallas_src>

<mosaic_0001>
module attributes {stable_mosaic.version = 11 : i64} {
  func.func @_resblock_kernel(%arg0: i32, %arg1: memref<9x1x512xf32, #tpu.memory_space<vmem>>, %arg2: memref<64x512xf32, #tpu.memory_space<vmem>>, %arg3: memref<64x576xf32, #tpu.memory_space<vmem>>, %arg4: memref<64x1xf32, #tpu.memory_space<vmem>>, %arg5: memref<64x576xf32, #tpu.memory_space<vmem>>, %arg6: memref<64x1xf32, #tpu.memory_space<vmem>>, %arg7: memref<64x512xf32, #tpu.memory_space<vmem>>, %arg8: memref<576x512xf32, #tpu.memory_space<vmem>>) attributes {dimension_semantics = [#tpu.dimension_semantics<arbitrary>], iteration_bounds = array<i64: 1>, scalar_prefetch = 0 : i64, scratch_operands = 1 : i64, tpu.core_type = #tpu.core_type<tc>, window_params = [{pipeline_mode = #tpu.pipeline_mode<synchronous>, transform_indices = @transform_0, window_bounds = array<i64: 9, 1, 512>}, {pipeline_mode = #tpu.pipeline_mode<synchronous>, transform_indices = @transform_1, window_bounds = array<i64: 64, 512>}, {pipeline_mode = #tpu.pipeline_mode<synchronous>, transform_indices = @transform_2, window_bounds = array<i64: 64, 576>}, {pipeline_mode = #tpu.pipeline_mode<synchronous>, transform_indices = @transform_3, window_bounds = array<i64: 64, 1>}, {pipeline_mode = #tpu.pipeline_mode<synchronous>, transform_indices = @transform_4, window_bounds = array<i64: 64, 576>}, {pipeline_mode = #tpu.pipeline_mode<synchronous>, transform_indices = @transform_5, window_bounds = array<i64: 64, 1>}, {pipeline_mode = #tpu.pipeline_mode<synchronous>, transform_indices = @transform_6, window_bounds = array<i64: 64, 512>}]} {
    %c0 = arith.constant 0 : index
    %c0_0 = arith.constant 0 : index
    %0 = vector.load %arg2[%c0, %c0_0] : memref<64x512xf32, #tpu.memory_space<vmem>>, vector<64x512xf32>
    %c17_i32 = arith.constant 17 : i32
    %1 = tpu.dynamic_rotate %0 by %c17_i32 dim 1 : vector<64x512xf32>, i32 -> vector<64x512xf32>
    %c0_1 = arith.constant 0 : index
    %c0_2 = arith.constant 0 : index
    %c0_3 = arith.constant 0 : index
    %2 = vector.load %arg1[%c0_1, %c0_2, %c0_3] : memref<9x1x512xf32, #tpu.memory_space<vmem>>, vector<1x1x512xf32>
    %3 = vector.shape_cast %2 : vector<1x1x512xf32> to vector<1x512xf32>
    %4 = vector.broadcast %3 : vector<1x512xf32> to vector<64x512xf32>
    %5 = arith.mulf %1, %4 : vector<64x512xf32>
    %c0_4 = arith.constant 0 : index
    %c0_5 = arith.constant 0 : index
    %6 = vector.load %arg8[%c0_4, %c0_5] : memref<576x512xf32, #tpu.memory_space<vmem>>, vector<64x512xf32>
    tpu.vector_store %arg8[%c0_4, %c0_5], %5 {strides = array<i32>} : memref<576x512xf32, #tpu.memory_space<vmem>>, vector<64x512xf32>,
    %c16_i32 = arith.constant 16 : i32
    %7 = tpu.dynamic_rotate %0 by %c16_i32 dim 1 : vector<64x512xf32>, i32 -> vector<64x512xf32>
    %c1 = arith.constant 1 : index
    %c0_6 = arith.constant 0 : index
    %c0_7 = arith.constant 0 : index
    %8 = vector.load %arg1[%c1, %c0_6, %c0_7] : memref<9x1x512xf32, #tpu.memory_space<vmem>>, vector<1x1x512xf32>
    %9 = vector.shape_cast %8 : vector<1x1x512xf32> to vector<1x512xf32>
    %10 = vector.broadcast %9 : vector<1x512xf32> to vector<64x512xf32>
    %11 = arith.mulf %7, %10 : vector<64x512xf32>
    %c64 = arith.constant 64 : index
    %c0_8 = arith.constant 0 : index
    %12 = vector.load %arg8[%c64, %c0_8] : memref<576x512xf32, #tpu.memory_space<vmem>>, vector<64x512xf32>
    tpu.vector_store %arg8[%c64, %c0_8], %11 {strides = array<i32>} : memref<576x512xf32, #tpu.memory_space<vmem>>, vector<64x512xf32>,
    %c15_i32 = arith.constant 15 : i32
    %13 = tpu.dynamic_rotate %0 by %c15_i32 dim 1 : vector<64x512xf32>, i32 -> vector<64x512xf32>
    %c2 = arith.constant 2 : index
    %c0_9 = arith.constant 0 : index
    %c0_10 = arith.constant 0 : index
    %14 = vector.load %arg1[%c2, %c0_9, %c0_10] : memref<9x1x512xf32, #tpu.memory_space<vmem>>, vector<1x1x512xf32>
    %15 = vector.shape_cast %14 : vector<1x1x512xf32> to vector<1x512xf32>
    %16 = vector.broadcast %15 : vector<1x512xf32> to vector<64x512xf32>
    %17 = arith.mulf %13, %16 : vector<64x512xf32>
    %c128 = arith.constant 128 : index
    %c0_11 = arith.constant 0 : index
    %18 = vector.load %arg8[%c128, %c0_11] : memref<576x512xf32, #tpu.memory_space<vmem>>, vector<64x512xf32>
    tpu.vector_store %arg8[%c128, %c0_11], %17 {strides = array<i32>} : memref<576x512xf32, #tpu.memory_space<vmem>>, vector<64x512xf32>,
    %c1_i32 = arith.constant 1 : i32
    %19 = tpu.dynamic_rotate %0 by %c1_i32 dim 1 : vector<64x512xf32>, i32 -> vector<64x512xf32>
    %c3 = arith.constant 3 : index
    %c0_12 = arith.constant 0 : index
    %c0_13 = arith.constant 0 : index
    %20 = vector.load %arg1[%c3, %c0_12, %c0_13] : memref<9x1x512xf32, #tpu.memory_space<vmem>>, vector<1x1x512xf32>
    %21 = vector.shape_cast %20 : vector<1x1x512xf32> to vector<1x512xf32>
    %22 = vector.broadcast %21 : vector<1x512xf32> to vector<64x512xf32>
    %23 = arith.mulf %19, %22 : vector<64x512xf32>
    %c192 = arith.constant 192 : index
    %c0_14 = arith.constant 0 : index
    %24 = vector.load %arg8[%c192, %c0_14] : memref<576x512xf32, #tpu.memory_space<vmem>>, vector<64x512xf32>
    tpu.vector_store %arg8[%c192, %c0_14], %23 {strides = array<i32>} : memref<576x512xf32, #tpu.memory_space<vmem>>, vector<64x512xf32>,
    %c256 = arith.constant 256 : index
    %c0_15 = arith.constant 0 : index
    %25 = vector.load %arg8[%c256, %c0_15] : memref<576x512xf32, #tpu.memory_space<vmem>>, vector<64x512xf32>
    tpu.vector_store %arg8[%c256, %c0_15], %0 {strides = array<i32>} : memref<576x512xf32, #tpu.memory_space<vmem>>, vector<64x512xf32>,
    %c511_i32 = arith.constant 511 : i32
    %26 = tpu.dynamic_rotate %0 by %c511_i32 dim 1 : vector<64x512xf32>, i32 -> vector<64x512xf32>
    %c5 = arith.constant 5 : index
    %c0_16 = arith.constant 0 : index
    %c0_17 = arith.constant 0 : index
    %27 = vector.load %arg1[%c5, %c0_16, %c0_17] : memref<9x1x512xf32, #tpu.memory_space<vmem>>, vector<1x1x512xf32>
    %28 = vector.shape_cast %27 : vector<1x1x512xf32> to vector<1x512xf32>
    %29 = vector.broadcast %28 : vector<1x512xf32> to vector<64x512xf32>
    %30 = arith.mulf %26, %29 : vector<64x512xf32>
    %c320 = arith.constant 320 : index
    %c0_18 = arith.constant 0 : index
    %31 = vector.load %arg8[%c320, %c0_18] : memref<576x512xf32, #tpu.memory_space<vmem>>, vector<64x512xf32>
    tpu.vector_store %arg8[%c320, %c0_18], %30 {strides = array<i32>} : memref<576x512xf32, #tpu.memory_space<vmem>>, vector<64x512xf32>,
    %c497_i32 = arith.constant 497 : i32
    %32 = tpu.dynamic_rotate %0 by %c497_i32 dim 1 : vector<64x512xf32>, i32 -> vector<64x512xf32>
    %c6 = arith.constant 6 : index
    %c0_19 = arith.constant 0 : index
    %c0_20 = arith.constant 0 : index
    %33 = vector.load %arg1[%c6, %c0_19, %c0_20] : memref<9x1x512xf32, #tpu.memory_space<vmem>>, vector<1x1x512xf32>
    %34 = vector.shape_cast %33 : vector<1x1x512xf32> to vector<1x512xf32>
    %35 = vector.broadcast %34 : vector<1x512xf32> to vector<64x512xf32>
    %36 = arith.mulf %32, %35 : vector<64x512xf32>
    %c384 = arith.constant 384 : index
    %c0_21 = arith.constant 0 : index
    %37 = vector.load %arg8[%c384, %c0_21] : memref<576x512xf32, #tpu.memory_space<vmem>>, vector<64x512xf32>
    tpu.vector_store %arg8[%c384, %c0_21], %36 {strides = array<i32>} : memref<576x512xf32, #tpu.memory_space<vmem>>, vector<64x512xf32>,
    %c496_i32 = arith.constant 496 : i32
    %38 = tpu.dynamic_rotate %0 by %c496_i32 dim 1 : vector<64x512xf32>, i32 -> vector<64x512xf32>
    %c7 = arith.constant 7 : index
    %c0_22 = arith.constant 0 : index
    %c0_23 = arith.constant 0 : index
    %39 = vector.load %arg1[%c7, %c0_22, %c0_23] : memref<9x1x512xf32, #tpu.memory_space<vmem>>, vector<1x1x512xf32>
    %40 = vector.shape_cast %39 : vector<1x1x512xf32> to vector<1x512xf32>
    %41 = vector.broadcast %40 : vector<1x512xf32> to vector<64x512xf32>
    %42 = arith.mulf %38, %41 : vector<64x512xf32>
    %c448 = arith.constant 448 : index
    %c0_24 = arith.constant 0 : index
    %43 = vector.load %arg8[%c448, %c0_24] : memref<576x512xf32, #tpu.memory_space<vmem>>, vector<64x512xf32>
    tpu.vector_store %arg8[%c448, %c0_24], %42 {strides = array<i32>} : memref<576x512xf32, #tpu.memory_space<vmem>>, vector<64x512xf32>,
    %c495_i32 = arith.constant 495 : i32
    %44 = tpu.dynamic_rotate %0 by %c495_i32 dim 1 : vector<64x512xf32>, i32 -> vector<64x512xf32>
    %c8 = arith.constant 8 : index
    %c0_25 = arith.constant 0 : index
    %c0_26 = arith.constant 0 : index
    %45 = vector.load %arg1[%c8, %c0_25, %c0_26] : memref<9x1x512xf32, #tpu.memory_space<vmem>>, vector<1x1x512xf32>
    %46 = vector.shape_cast %45 : vector<1x1x512xf32> to vector<1x512xf32>
    %47 = vector.broadcast %46 : vector<1x512xf32> to vector<64x512xf32>
    %48 = arith.mulf %44, %47 : vector<64x512xf32>
    %c512 = arith.constant 512 : index
    %c0_27 = arith.constant 0 : index
    %49 = vector.load %arg8[%c512, %c0_27] : memref<576x512xf32, #tpu.memory_space<vmem>>, vector<64x512xf32>
    tpu.vector_store %arg8[%c512, %c0_27], %48 {strides = array<i32>} : memref<576x512xf32, #tpu.memory_space<vmem>>, vector<64x512xf32>,
    %c0_28 = arith.constant 0 : index
    %c0_29 = arith.constant 0 : index
    %50 = vector.load %arg3[%c0_28, %c0_29] : memref<64x576xf32, #tpu.memory_space<vmem>>, vector<64x576xf32>
    %c0_30 = arith.constant 0 : index
    %c0_31 = arith.constant 0 : index
    %51 = vector.load %arg8[%c0_30, %c0_31] : memref<576x512xf32, #tpu.memory_space<vmem>>, vector<576x512xf32>
    %cst = arith.constant dense<0.000000e+00> : vector<64x512xf32>
    %52 = tpu.matmul %50, %51, %cst {dimension_numbers = #tpu.dot_dimension_numbers<[1], [0], [0], [1], [0, 0, 1, 1], [], []>} : vector<64x576xf32>, vector<576x512xf32>, vector<64x512xf32> -> vector<64x512xf32>
    %c0_32 = arith.constant 0 : index
    %c0_33 = arith.constant 0 : index
    %53 = vector.load %arg4[%c0_32, %c0_33] : memref<64x1xf32, #tpu.memory_space<vmem>>, vector<64x1xf32>
    %54 = vector.broadcast %53 : vector<64x1xf32> to vector<64x512xf32>
    %55 = arith.addf %52, %54 : vector<64x512xf32>
    %cst_34 = arith.constant 0.000000e+00 : f32
    %56 = vector.broadcast %cst_34 : f32 to vector<64x512xf32>
    %57 = arith.maximumf %55, %56 : vector<64x512xf32>
    %c17_i32_35 = arith.constant 17 : i32
    %58 = tpu.dynamic_rotate %57 by %c17_i32_35 dim 1 : vector<64x512xf32>, i32 -> vector<64x512xf32>
    %c0_36 = arith.constant 0 : index
    %c0_37 = arith.constant 0 : index
    %c0_38 = arith.constant 0 : index
    %59 = vector.load %arg1[%c0_36, %c0_37, %c0_38] : memref<9x1x512xf32, #tpu.memory_space<vmem>>, vector<1x1x512xf32>
    %60 = vector.shape_cast %59 : vector<1x1x512xf32> to vector<1x512xf32>
    %61 = vector.broadcast %60 : vector<1x512xf32> to vector<64x512xf32>
    %62 = arith.mulf %58, %61 : vector<64x512xf32>
    %c0_39 = arith.constant 0 : index
    %c0_40 = arith.constant 0 : index
    %63 = vector.load %arg8[%c0_39, %c0_40] : memref<576x512xf32, #tpu.memory_space<vmem>>, vector<64x512xf32>
    tpu.vector_store %arg8[%c0_39, %c0_40], %62 {strides = array<i32>} : memref<576x512xf32, #tpu.memory_space<vmem>>, vector<64x512xf32>,
    %c16_i32_41 = arith.constant 16 : i32
    %64 = tpu.dynamic_rotate %57 by %c16_i32_41 dim 1 : vector<64x512xf32>, i32 -> vector<64x512xf32>
    %c1_42 = arith.constant 1 : index
    %c0_43 = arith.constant 0 : index
    %c0_44 = arith.constant 0 : index
    %65 = vector.load %arg1[%c1_42, %c0_43, %c0_44] : memref<9x1x512xf32, #tpu.memory_space<vmem>>, vector<1x1x512xf32>
    %66 = vector.shape_cast %65 : vector<1x1x512xf32> to vector<1x512xf32>
    %67 = vector.broadcast %66 : vector<1x512xf32> to vector<64x512xf32>
    %68 = arith.mulf %64, %67 : vector<64x512xf32>
    %c64_45 = arith.constant 64 : index
    %c0_46 = arith.constant 0 : index
    %69 = vector.load %arg8[%c64_45, %c0_46] : memref<576x512xf32, #tpu.memory_space<vmem>>, vector<64x512xf32>
    tpu.vector_store %arg8[%c64_45, %c0_46], %68 {strides = array<i32>} : memref<576x512xf32, #tpu.memory_space<vmem>>, vector<64x512xf32>,
    %c15_i32_47 = arith.constant 15 : i32
    %70 = tpu.dynamic_rotate %57 by %c15_i32_47 dim 1 : vector<64x512xf32>, i32 -> vector<64x512xf32>
    %c2_48 = arith.constant 2 : index
    %c0_49 = arith.constant 0 : index
    %c0_50 = arith.constant 0 : index
    %71 = vector.load %arg1[%c2_48, %c0_49, %c0_50] : memref<9x1x512xf32, #tpu.memory_space<vmem>>, vector<1x1x512xf32>
    %72 = vector.shape_cast %71 : vector<1x1x512xf32> to vector<1x512xf32>
    %73 = vector.broadcast %72 : vector<1x512xf32> to vector<64x512xf32>
    %74 = arith.mulf %70, %73 : vector<64x512xf32>
    %c128_51 = arith.constant 128 : index
    %c0_52 = arith.constant 0 : index
    %75 = vector.load %arg8[%c128_51, %c0_52] : memref<576x512xf32, #tpu.memory_space<vmem>>, vector<64x512xf32>
    tpu.vector_store %arg8[%c128_51, %c0_52], %74 {strides = array<i32>} : memref<576x512xf32, #tpu.memory_space<vmem>>, vector<64x512xf32>,
    %c1_i32_53 = arith.constant 1 : i32
    %76 = tpu.dynamic_rotate %57 by %c1_i32_53 dim 1 : vector<64x512xf32>, i32 -> vector<64x512xf32>
    %c3_54 = arith.constant 3 : index
    %c0_55 = arith.constant 0 : index
    %c0_56 = arith.constant 0 : index
    %77 = vector.load %arg1[%c3_54, %c0_55, %c0_56] : memref<9x1x512xf32, #tpu.memory_space<vmem>>, vector<1x1x512xf32>
    %78 = vector.shape_cast %77 : vector<1x1x512xf32> to vector<1x512xf32>
    %79 = vector.broadcast %78 : vector<1x512xf32> to vector<64x512xf32>
    %80 = arith.mulf %76, %79 : vector<64x512xf32>
    %c192_57 = arith.constant 192 : index
    %c0_58 = arith.constant 0 : index
    %81 = vector.load %arg8[%c192_57, %c0_58] : memref<576x512xf32, #tpu.memory_space<vmem>>, vector<64x512xf32>
    tpu.vector_store %arg8[%c192_57, %c0_58], %80 {strides = array<i32>} : memref<576x512xf32, #tpu.memory_space<vmem>>, vector<64x512xf32>,
    %c256_59 = arith.constant 256 : index
    %c0_60 = arith.constant 0 : index
    %82 = vector.load %arg8[%c256_59, %c0_60] : memref<576x512xf32, #tpu.memory_space<vmem>>, vector<64x512xf32>
    tpu.vector_store %arg8[%c256_59, %c0_60], %57 {strides = array<i32>} : memref<576x512xf32, #tpu.memory_space<vmem>>, vector<64x512xf32>,
    %c511_i32_61 = arith.constant 511 : i32
    %83 = tpu.dynamic_rotate %57 by %c511_i32_61 dim 1 : vector<64x512xf32>, i32 -> vector<64x512xf32>
    %c5_62 = arith.constant 5 : index
    %c0_63 = arith.constant 0 : index
    %c0_64 = arith.constant 0 : index
    %84 = vector.load %arg1[%c5_62, %c0_63, %c0_64] : memref<9x1x512xf32, #tpu.memory_space<vmem>>, vector<1x1x512xf32>
    %85 = vector.shape_cast %84 : vector<1x1x512xf32> to vector<1x512xf32>
    %86 = vector.broadcast %85 : vector<1x512xf32> to vector<64x512xf32>
    %87 = arith.mulf %83, %86 : vector<64x512xf32>
    %c320_65 = arith.constant 320 : index
    %c0_66 = arith.constant 0 : index
    %88 = vector.load %arg8[%c320_65, %c0_66] : memref<576x512xf32, #tpu.memory_space<vmem>>, vector<64x512xf32>
    tpu.vector_store %arg8[%c320_65, %c0_66], %87 {strides = array<i32>} : memref<576x512xf32, #tpu.memory_space<vmem>>, vector<64x512xf32>,
    %c497_i32_67 = arith.constant 497 : i32
    %89 = tpu.dynamic_rotate %57 by %c497_i32_67 dim 1 : vector<64x512xf32>, i32 -> vector<64x512xf32>
    %c6_68 = arith.constant 6 : index
    %c0_69 = arith.constant 0 : index
    %c0_70 = arith.constant 0 : index
    %90 = vector.load %arg1[%c6_68, %c0_69, %c0_70] : memref<9x1x512xf32, #tpu.memory_space<vmem>>, vector<1x1x512xf32>
    %91 = vector.shape_cast %90 : vector<1x1x512xf32> to vector<1x512xf32>
    %92 = vector.broadcast %91 : vector<1x512xf32> to vector<64x512xf32>
    %93 = arith.mulf %89, %92 : vector<64x512xf32>
    %c384_71 = arith.constant 384 : index
    %c0_72 = arith.constant 0 : index
    %94 = vector.load %arg8[%c384_71, %c0_72] : memref<576x512xf32, #tpu.memory_space<vmem>>, vector<64x512xf32>
    tpu.vector_store %arg8[%c384_71, %c0_72], %93 {strides = array<i32>} : memref<576x512xf32, #tpu.memory_space<vmem>>, vector<64x512xf32>,
    %c496_i32_73 = arith.constant 496 : i32
    %95 = tpu.dynamic_rotate %57 by %c496_i32_73 dim 1 : vector<64x512xf32>, i32 -> vector<64x512xf32>
    %c7_74 = arith.constant 7 : index
    %c0_75 = arith.constant 0 : index
    %c0_76 = arith.constant 0 : index
    %96 = vector.load %arg1[%c7_74, %c0_75, %c0_76] : memref<9x1x512xf32, #tpu.memory_space<vmem>>, vector<1x1x512xf32>
    %97 = vector.shape_cast %96 : vector<1x1x512xf32> to vector<1x512xf32>
    %98 = vector.broadcast %97 : vector<1x512xf32> to vector<64x512xf32>
    %99 = arith.mulf %95, %98 : vector<64x512xf32>
    %c448_77 = arith.constant 448 : index
    %c0_78 = arith.constant 0 : index
    %100 = vector.load %arg8[%c448_77, %c0_78] : memref<576x512xf32, #tpu.memory_space<vmem>>, vector<64x512xf32>
    tpu.vector_store %arg8[%c448_77, %c0_78], %99 {strides = array<i32>} : memref<576x512xf32, #tpu.memory_space<vmem>>, vector<64x512xf32>,
    %c495_i32_79 = arith.constant 495 : i32
    %101 = tpu.dynamic_rotate %57 by %c495_i32_79 dim 1 : vector<64x512xf32>, i32 -> vector<64x512xf32>
    %c8_80 = arith.constant 8 : index
    %c0_81 = arith.constant 0 : index
    %c0_82 = arith.constant 0 : index
    %102 = vector.load %arg1[%c8_80, %c0_81, %c0_82] : memref<9x1x512xf32, #tpu.memory_space<vmem>>, vector<1x1x512xf32>
    %103 = vector.shape_cast %102 : vector<1x1x512xf32> to vector<1x512xf32>
    %104 = vector.broadcast %103 : vector<1x512xf32> to vector<64x512xf32>
    %105 = arith.mulf %101, %104 : vector<64x512xf32>
    %c512_83 = arith.constant 512 : index
    %c0_84 = arith.constant 0 : index
    %106 = vector.load %arg8[%c512_83, %c0_84] : memref<576x512xf32, #tpu.memory_space<vmem>>, vector<64x512xf32>
    tpu.vector_store %arg8[%c512_83, %c0_84], %105 {strides = array<i32>} : memref<576x512xf32, #tpu.memory_space<vmem>>, vector<64x512xf32>,
    %c0_85 = arith.constant 0 : index
    %c0_86 = arith.constant 0 : index
    %107 = vector.load %arg5[%c0_85, %c0_86] : memref<64x576xf32, #tpu.memory_space<vmem>>, vector<64x576xf32>
    %c0_87 = arith.constant 0 : index
    %c0_88 = arith.constant 0 : index
    %108 = vector.load %arg8[%c0_87, %c0_88] : memref<576x512xf32, #tpu.memory_space<vmem>>, vector<576x512xf32>
    %cst_89 = arith.constant dense<0.000000e+00> : vector<64x512xf32>
    %109 = tpu.matmul %107, %108, %cst_89 {dimension_numbers = #tpu.dot_dimension_numbers<[1], [0], [0], [1], [0, 0, 1, 1], [], []>} : vector<64x576xf32>, vector<576x512xf32>, vector<64x512xf32> -> vector<64x512xf32>
    %c0_90 = arith.constant 0 : index
    %c0_91 = arith.constant 0 : index
    %110 = vector.load %arg6[%c0_90, %c0_91] : memref<64x1xf32, #tpu.memory_space<vmem>>, vector<64x1xf32>
    %111 = vector.broadcast %110 : vector<64x1xf32> to vector<64x512xf32>
    %112 = arith.addf %109, %111 : vector<64x512xf32>
    %113 = arith.addf %112, %0 : vector<64x512xf32>
    %c0_92 = arith.constant 0 : index
    %c0_93 = arith.constant 0 : index
    %114 = vector.load %arg7[%c0_92, %c0_93] : memref<64x512xf32, #tpu.memory_space<vmem>>, vector<64x512xf32>
    tpu.vector_store %arg7[%c0_92, %c0_93], %113 {strides = array<i32>} : memref<64x512xf32, #tpu.memory_space<vmem>>, vector<64x512xf32>,
    return
  }
  func.func @transform_0(%arg0: i32) -> (i32, i32, i32) {
    %c0_i32 = arith.constant 0 : i32
    %c0_i32_0 = arith.constant 0 : i32
    %c0_i32_1 = arith.constant 0 : i32
    %c0_i32_2 = arith.constant 0 : i32
    return %c0_i32, %c0_i32_0, %c0_i32_1 : i32, i32, i32
  }
  func.func @transform_1(%arg0: i32) -> (i32, i32) {
    %c0_i32 = arith.constant 0 : i32
    %c0_i32_0 = arith.constant 0 : i32
    %c0_i32_1 = arith.constant 0 : i32
    return %c0_i32, %c0_i32_0 : i32, i32
  }
  func.func @transform_2(%arg0: i32) -> (i32, i32) {
    %c0_i32 = arith.constant 0 : i32
    %c0_i32_0 = arith.constant 0 : i32
    %c0_i32_1 = arith.constant 0 : i32
    return %c0_i32, %c0_i32_0 : i32, i32
  }
  func.func @transform_3(%arg0: i32) -> (i32, i32) {
    %c0_i32 = arith.constant 0 : i32
    %c0_i32_0 = arith.constant 0 : i32
    %c0_i32_1 = arith.constant 0 : i32
    return %c0_i32, %c0_i32_0 : i32, i32
  }
  func.func @transform_4(%arg0: i32) -> (i32, i32) {
    %c0_i32 = arith.constant 0 : i32
    %c0_i32_0 = arith.constant 0 : i32
    %c0_i32_1 = arith.constant 0 : i32
    return %c0_i32, %c0_i32_0 : i32, i32
  }
  func.func @transform_5(%arg0: i32) -> (i32, i32) {
    %c0_i32 = arith.constant 0 : i32
    %c0_i32_0 = arith.constant 0 : i32
    %c0_i32_1 = arith.constant 0 : i32
    return %c0_i32, %c0_i32_0 : i32, i32
  }
  func.func @transform_6(%arg0: i32) -> (i32, i32) {
    %c0_i32 = arith.constant 0 : i32
    %c0_i32_0 = arith.constant 0 : i32
    %c0_i32_1 = arith.constant 0 : i32
    return %c0_i32, %c0_i32_0 : i32, i32
  }
}

</mosaic_0001>

<llo_original>
// kernel: tpu_custom_call.1
$region0: #{tpu_custom_call.1}
  #allocation0 [shape = 'u32[]', space=smem, size = 0x4, offset = 0x4, fixed_abs, tag = 'smem constant byte address 0x4 - core index']
  #allocation1 [shape = 'u32[144,128]{1,0:T(1,128)}', space=vmem, size = 0x12000, scoped, tag = 'internal scratch']
  #allocation2 [shape = 'f32[576,512]{1,0:T(8,128)}', space=vmem, size = 0x120000, scoped, tag = 'scratch operand']
  %s0 = inlined_call_operand.vmem [shape: f32[9,1,512], index: 0, kind: input, shape index: {}]
  %s1 = inlined_call_operand.hbm [shape: f32[64,512], index: 1, kind: input, shape index: {}]
  %s2 = inlined_call_operand.hbm [shape: f32[64,576], index: 2, kind: input, shape index: {}]
  %s3 = inlined_call_operand.vmem [shape: f32[64,1], index: 3, kind: input, shape index: {}]
  %s4 = inlined_call_operand.hbm [shape: f32[64,576], index: 4, kind: input, shape index: {}]
  %s5 = inlined_call_operand.vmem [shape: f32[64,1], index: 5, kind: input, shape index: {}]
  %s6 = inlined_call_operand.hbm [shape: f32[64,512], index: 6, kind: output, shape index: {}]
  %s7 = sld [smem:[#allocation0]]
  $region46: #{tpu_custom_call.1} parent=0
    _
  %s9 = ssub.s32 1, %s7
  %s10 = scalar_select 0, %s9, %s7
  $region1: #{tpu_custom_call.1} parent=0
    #allocation3 [shape = 'u8[131072]{0}', space=vmem, size = 0x20000, scoped, tag = 'input window, operand 1, single buffered']
    #allocation4 [shape = 's32[1]{0}', space=sflag, size = 0x4, scoped, tag = 'scoped memory for tpu_custom_call.1']
    #allocation5 [shape = 's32[1]{0}', space=sflag, size = 0x4, scoped, tag = 'scoped memory for tpu_custom_call.1']
    #allocation6 [shape = 'u8[163840]{0}', space=vmem, size = 0x28000, scoped, tag = 'input window, operand 2, single buffered']
    #allocation7 [shape = 's32[1]{0}', space=sflag, size = 0x4, scoped, tag = 'scoped memory for tpu_custom_call.1']
    #allocation8 [shape = 'u8[163840]{0}', space=vmem, size = 0x28000, scoped, tag = 'input window, operand 4, single buffered']
    #allocation9 [shape = 'u8[131072]{0}', space=vmem, size = 0x20000, scoped, tag = 'output window, operand 0, single buffered']
    %11 = vsyncpa [#allocation4], 0
    %12 = vsyncpa [#allocation7], 0
    %13 = vsyncpa [#allocation5], 0
    // Predicated region
    $region2: #{tpu_custom_call.1} parent=1 // pred_check
      _
    $region3: #{tpu_custom_call.1} parent=1 // pred_check_branch
      %15 = sbr.rel (0) target = $region5
    $region4: #{tpu_custom_call.1} parent=1 // pred_region
      _
    $region5: #{tpu_custom_call.1} parent=1 // pred_fallthru
      _
    // Predicated region
    $region6: #{tpu_custom_call.1} parent=1 // pred_check
      _
    $region7: #{tpu_custom_call.1} parent=1 // pred_check_branch
      %17 = sbr.rel (0) target = $region9
    $region8: #{tpu_custom_call.1} parent=1 // pred_region
      %s19 = ssub.s32 4096, 4096
      %20 = vsyncadd [#allocation4], %s19
      %s21 = sshll.u32 [#allocation3], 4
      %s22 = int_to_ptr.vmem [resolvable:$true] %s21
      %27 = dma.hbm_to_vmem [thread:$0]  %s1, 4096, %s22, [#allocation4], 512, 512, 32
    $region9: #{tpu_custom_call.1} parent=1 // pred_fallthru
      _
    // Predicated region
    $region10: #{tpu_custom_call.1} parent=1 // pred_check
      _
    $region11: #{tpu_custom_call.1} parent=1 // pred_check_branch
      %29 = sbr.rel (0) target = $region13
    $region12: #{tpu_custom_call.1} parent=1 // pred_region
      %s31 = ssub.s32 5120, 5120
      %32 = vsyncadd [#allocation7], %s31
      %s33 = sshll.u32 [#allocation6], 4
      %s34 = int_to_ptr.vmem [resolvable:$true] %s33
      %39 = dma.hbm_to_vmem [thread:$0]  %s2, 5120, %s34, [#allocation7], 640, 640, 40
    $region13: #{tpu_custom_call.1} parent=1 // pred_fallthru
      _
    // Predicated region
    $region14: #{tpu_custom_call.1} parent=1 // pred_check
      _
    $region15: #{tpu_custom_call.1} parent=1 // pred_check_branch
      %41 = sbr.rel (0) target = $region17
    $region16: #{tpu_custom_call.1} parent=1 // pred_region
      _
    $region17: #{tpu_custom_call.1} parent=1 // pred_fallthru
      _
    // Predicated region
    $region18: #{tpu_custom_call.1} parent=1 // pred_check
      _
    $region19: #{tpu_custom_call.1} parent=1 // pred_check_branch
      %43 = sbr.rel (0) target = $region21
    $region20: #{tpu_custom_call.1} parent=1 // pred_region
      %s45 = ssub.s32 5120, 5120
      %46 = vsyncadd [#allocation7], %s45
      %s47 = sshll.u32 [#allocation8], 4
      %s48 = int_to_ptr.vmem [resolvable:$true] %s47
      %53 = dma.hbm_to_vmem [thread:$0]  %s4, 5120, %s48, [#allocation7], 640, 640, 40
    $region21: #{tpu_custom_call.1} parent=1 // pred_fallthru
      _
    // Predicated region
    $region22: #{tpu_custom_call.1} parent=1 // pred_check
      _
    $region23: #{tpu_custom_call.1} parent=1 // pred_check_branch
      %55 = sbr.rel (0) target = $region25
    $region24: #{tpu_custom_call.1} parent=1 // pred_region
      _
    $region25: #{tpu_custom_call.1} parent=1 // pred_fallthru
      _
    // Predicated region
    $region26: #{tpu_custom_call.1} parent=1 // pred_check
      _
    $region27: #{tpu_custom_call.1} parent=1 // pred_check_branch
      %57 = sbr.rel (0) target = $region29
    $region28: #{tpu_custom_call.1} parent=1 // pred_region
      %58 = dma.done [#allocation4], 4096
    $region29: #{tpu_custom_call.1} parent=1 // pred_fallthru
      _
    // Predicated region
    $region30: #{tpu_custom_call.1} parent=1 // pred_check
      _
    $region31: #{tpu_custom_call.1} parent=1 // pred_check_branch
      %60 = sbr.rel (0) target = $region33
    $region32: #{tpu_custom_call.1} parent=1 // pred_region
      %61 = dma.done [#allocation7], 5120
    $region33: #{tpu_custom_call.1} parent=1 // pred_fallthru
      _
    // Predicated region
    $region34: #{tpu_custom_call.1} parent=1 // pred_check
      _
    $region35: #{tpu_custom_call.1} parent=1 // pred_check_branch
      %63 = sbr.rel (0) target = $region37
    $region36: #{tpu_custom_call.1} parent=1 // pred_region
      %64 = dma.done [#allocation7], 5120
    $region37: #{tpu_custom_call.1} parent=1 // pred_fallthru
      _
    %v65 = vld [vmem:[#allocation3] sm:$0xff]
    %v66 = vld [vmem:[#allocation3 + $0x8] sm:$0xff]
    %v67 = vld [vmem:[#allocation3 + $0x10] sm:$0xff]
    %v68 = vld [vmem:[#allocation3 + $0x18] sm:$0xff]
    %v69 = vld [vmem:[#allocation3 + $0x20] sm:$0xff]
    %v70 = vld [vmem:[#allocation3 + $0x28] sm:$0xff]
    %v71 = vld [vmem:[#allocation3 + $0x30] sm:$0xff]
    %v72 = vld [vmem:[#allocation3 + $0x38] sm:$0xff]
    %v73 = vld [vmem:[#allocation3 + $0x40] sm:$0xff]
    %v74 = vld [vmem:[#allocation3 + $0x48] sm:$0xff]
    %v75 = vld [vmem:[#allocation3 + $0x50] sm:$0xff]
    %v76 = vld [vmem:[#allocation3 + $0x58] sm:$0xff]
    %v77 = vld [vmem:[#allocation3 + $0x60] sm:$0xff]
    %v78 = vld [vmem:[#allocation3 + $0x68] sm:$0xff]
    %v79 = vld [vmem:[#allocation3 + $0x70] sm:$0xff]
    %v80 = vld [vmem:[#allocation3 + $0x78] sm:$0xff]
    %v81 = vld [vmem:[#allocation3 + $0x80] sm:$0xff]
    %v82 = vld [vmem:[#allocation3 + $0x88] sm:$0xff]
    %v83 = vld [vmem:[#allocation3 + $0x90] sm:$0xff]
    %v84 = vld [vmem:[#allocation3 + $0x98] sm:$0xff]
    %v85 = vld [vmem:[#allocation3 + $0xa0] sm:$0xff]
    %v86 = vld [vmem:[#allocation3 + $0xa8] sm:$0xff]
    %v87 = vld [vmem:[#allocation3 + $0xb0] sm:$0xff]
    %v88 = vld [vmem:[#allocation3 + $0xb8] sm:$0xff]
    %v89 = vld [vmem:[#allocation3 + $0xc0] sm:$0xff]
    %v90 = vld [vmem:[#allocation3 + $0xc8] sm:$0xff]
    %v91 = vld [vmem:[#allocation3 + $0xd0] sm:$0xff]
    %v92 = vld [vmem:[#allocation3 + $0xd8] sm:$0xff]
    %v93 = vld [vmem:[#allocation3 + $0xe0] sm:$0xff]
    %v94 = vld [vmem:[#allocation3 + $0xe8] sm:$0xff]
    %v95 = vld [vmem:[#allocation3 + $0xf0] sm:$0xff]
    %v96 = vld [vmem:[#allocation3 + $0xf8] sm:$0xff]
    %97 = vrot.lane.b32.xlu0 %v65, 17
    %v98 = vpop.permute.xlu0 %97
    %99 = vrot.lane.b32.xlu0 %v69, 17
    %v100 = vpop.permute.xlu0 %99
    %101 = vrot.lane.b32.xlu0 %v73, 17
    %v102 = vpop.permute.xlu0 %101
    %103 = vrot.lane.b32.xlu0 %v77, 17
    %v104 = vpop.permute.xlu0 %103
    %105 = vrot.lane.b32.xlu0 %v81, 17
    %v106 = vpop.permute.xlu0 %105
    %107 = vrot.lane.b32.xlu0 %v85, 17
    %v108 = vpop.permute.xlu0 %107
    %109 = vrot.lane.b32.xlu0 %v89, 17
    %v110 = vpop.permute.xlu0 %109
    %111 = vrot.lane.b32.xlu0 %v93, 17
    %v112 = vpop.permute.xlu0 %111
    %113 = vrot.lane.b32.xlu0 %v66, 17
    %v114 = vpop.permute.xlu0 %113
    %115 = vrot.lane.b32.xlu0 %v70, 17
    %v116 = vpop.permute.xlu0 %115
    %117 = vrot.lane.b32.xlu0 %v74, 17
    %v118 = vpop.permute.xlu0 %117
    %119 = vrot.lane.b32.xlu0 %v78, 17
    %v120 = vpop.permute.xlu0 %119
    %121 = vrot.lane.b32.xlu0 %v82, 17
    %v122 = vpop.permute.xlu0 %121
    %123 = vrot.lane.b32.xlu0 %v86, 17
    %v124 = vpop.permute.xlu0 %123
    %125 = vrot.lane.b32.xlu0 %v90, 17
    %v126 = vpop.permute.xlu0 %125
    %127 = vrot.lane.b32.xlu0 %v94, 17
    %v128 = vpop.permute.xlu0 %127
    %129 = vrot.lane.b32.xlu0 %v67, 17
    %v130 = vpop.permute.xlu0 %129
    %131 = vrot.lane.b32.xlu0 %v71, 17
    %v132 = vpop.permute.xlu0 %131
    %133 = vrot.lane.b32.xlu0 %v75, 17
    %v134 = vpop.permute.xlu0 %133
    %135 = vrot.lane.b32.xlu0 %v79, 17
    %v136 = vpop.permute.xlu0 %135
    %137 = vrot.lane.b32.xlu0 %v83, 17
    %v138 = vpop.permute.xlu0 %137
    %139 = vrot.lane.b32.xlu0 %v87, 17
    %v140 = vpop.permute.xlu0 %139
    %141 = vrot.lane.b32.xlu0 %v91, 17
    %v142 = vpop.permute.xlu0 %141
    %143 = vrot.lane.b32.xlu0 %v95, 17
    %v144 = vpop.permute.xlu0 %143
    %145 = vrot.lane.b32.xlu0 %v68, 17
    %v146 = vpop.permute.xlu0 %145
    %147 = vrot.lane.b32.xlu0 %v72, 17
    %v148 = vpop.permute.xlu0 %147
    %149 = vrot.lane.b32.xlu0 %v76, 17
    %v150 = vpop.permute.xlu0 %149
    %151 = vrot.lane.b32.xlu0 %v80, 17
    %v152 = vpop.permute.xlu0 %151
    %153 = vrot.lane.b32.xlu0 %v84, 17
    %v154 = vpop.permute.xlu0 %153
    %155 = vrot.lane.b32.xlu0 %v88, 17
    %v156 = vpop.permute.xlu0 %155
    %157 = vrot.lane.b32.xlu0 %v92, 17
    %v158 = vpop.permute.xlu0 %157
    %159 = vrot.lane.b32.xlu0 %v96, 17
    %v160 = vpop.permute.xlu0 %159
    %v161 = vlaneseq
    %v162 = vand.u32 %v161, 127
    %vm163 = vcmp.lt.s32.totalorder %v162, 17
    %v164 = vsel %vm163, %v130, %v146
    %v165 = vsel %vm163, %v132, %v148
    %v166 = vsel %vm163, %v134, %v150
    %v167 = vsel %vm163, %v136, %v152
    %v168 = vsel %vm163, %v138, %v154
    %v169 = vsel %vm163, %v140, %v156
    %v170 = vsel %vm163, %v142, %v158
    %v171 = vsel %vm163, %v144, %v160
    %v172 = vsel %vm163, %v114, %v130
    %v173 = vsel %vm163, %v116, %v132
    %v174 = vsel %vm163, %v118, %v134
    %v175 = vsel %vm163, %v120, %v136
    %v176 = vsel %vm163, %v122, %v138
    %v177 = vsel %vm163, %v124, %v140
    %v178 = vsel %vm163, %v126, %v142
    %v179 = vsel %vm163, %v128, %v144
    %v180 = vsel %vm163, %v98, %v114
    %v181 = vsel %vm163, %v100, %v116
    %v182 = vsel %vm163, %v102, %v118
    %v183 = vsel %vm163, %v104, %v120
    %v184 = vsel %vm163, %v106, %v122
    %v185 = vsel %vm163, %v108, %v124
    %v186 = vsel %vm163, %v110, %v126
    %v187 = vsel %vm163, %v112, %v128
    %v188 = vsel %vm163, %v146, %v98
    %v189 = vsel %vm163, %v148, %v100
    %v190 = vsel %vm163, %v150, %v102
    %v191 = vsel %vm163, %v152, %v104
    %v192 = vsel %vm163, %v154, %v106
    %v193 = vsel %vm163, %v156, %v108
    %v194 = vsel %vm163, %v158, %v110
    %v195 = vsel %vm163, %v160, %v112
    %v196 = vld [vmem:[%s0] sm:$0xf]
    %v198 = vlaneseq
    %v199 = vshrl.u32 %v198, 7
    %v200 = vsub.s32 0, %v199
    %v201 = vrot.slane %v196, %v200
    %v202 = vlaneseq
    %v203 = vshrl.u32 %v202, 7
    %v204 = vsub.s32 1, %v203
    %v205 = vrot.slane %v196, %v204
    %v206 = vlaneseq
    %v207 = vshrl.u32 %v206, 7
    %v208 = vsub.s32 2, %v207
    %v209 = vrot.slane %v196, %v208
    %v210 = vlaneseq
    %v211 = vshrl.u32 %v210, 7
    %v212 = vsub.s32 3, %v211
    %v213 = vrot.slane %v196, %v212
    %v218 = vmul.f32 %v188, %v201
    %v219 = vmul.f32 %v180, %v205
    %v220 = vmul.f32 %v172, %v209
    %v221 = vmul.f32 %v164, %v213
    %v222 = vmul.f32 %v189, %v201
    %v223 = vmul.f32 %v181, %v205
    %v224 = vmul.f32 %v173, %v209
    %v225 = vmul.f32 %v165, %v213
    %v226 = vmul.f32 %v190, %v201
    %v227 = vmul.f32 %v182, %v205
    %v228 = vmul.f32 %v174, %v209
    %v229 = vmul.f32 %v166, %v213
    %v230 = vmul.f32 %v191, %v201
    %v231 = vmul.f32 %v183, %v205
    %v232 = vmul.f32 %v175, %v209
    %v233 = vmul.f32 %v167, %v213
    %v234 = vmul.f32 %v192, %v201
    %v235 = vmul.f32 %v184, %v205
    %v236 = vmul.f32 %v176, %v209
    %v237 = vmul.f32 %v168, %v213
    %v238 = vmul.f32 %v193, %v201
    %v239 = vmul.f32 %v185, %v205
    %v240 = vmul.f32 %v177, %v209
    %v241 = vmul.f32 %v169, %v213
    %v242 = vmul.f32 %v194, %v201
    %v243 = vmul.f32 %v186, %v205
    %v244 = vmul.f32 %v178, %v209
    %v245 = vmul.f32 %v170, %v213
    %v246 = vmul.f32 %v195, %v201
    %v247 = vmul.f32 %v187, %v205
    %v248 = vmul.f32 %v179, %v209
    %v249 = vmul.f32 %v171, %v213
    %250 = vst [vmem:[#allocation2] sm:$0xff] %v218
    %251 = vst [vmem:[#allocation2 + $0x8] sm:$0xff] %v219
    %252 = vst [vmem:[#allocation2 + $0x10] sm:$0xff] %v220
    %253 = vst [vmem:[#allocation2 + $0x18] sm:$0xff] %v221
    %254 = vst [vmem:[#allocation2 + $0x20] sm:$0xff] %v222
    %255 = vst [vmem:[#allocation2 + $0x28] sm:$0xff] %v223
    %256 = vst [vmem:[#allocation2 + $0x30] sm:$0xff] %v224
    %257 = vst [vmem:[#allocation2 + $0x38] sm:$0xff] %v225
    %258 = vst [vmem:[#allocation2 + $0x40] sm:$0xff] %v226
    %259 = vst [vmem:[#allocation2 + $0x48] sm:$0xff] %v227
    %260 = vst [vmem:[#allocation2 + $0x50] sm:$0xff] %v228
    %261 = vst [vmem:[#allocation2 + $0x58] sm:$0xff] %v229
    %262 = vst [vmem:[#allocation2 + $0x60] sm:$0xff] %v230
    %263 = vst [vmem:[#allocation2 + $0x68] sm:$0xff] %v231
    %264 = vst [vmem:[#allocation2 + $0x70] sm:$0xff] %v232
    %265 = vst [vmem:[#allocation2 + $0x78] sm:$0xff] %v233
    %266 = vst [vmem:[#allocation2 + $0x80] sm:$0xff] %v234
    %267 = vst [vmem:[#allocation2 + $0x88] sm:$0xff] %v235
    %268 = vst [vmem:[#allocation2 + $0x90] sm:$0xff] %v236
    %269 = vst [vmem:[#allocation2 + $0x98] sm:$0xff] %v237
    %270 = vst [vmem:[#allocation2 + $0xa0] sm:$0xff] %v238
    %271 = vst [vmem:[#allocation2 + $0xa8] sm:$0xff] %v239
    %272 = vst [vmem:[#allocation2 + $0xb0] sm:$0xff] %v240
    %273 = vst [vmem:[#allocation2 + $0xb8] sm:$0xff] %v241
    %274 = vst [vmem:[#allocation2 + $0xc0] sm:$0xff] %v242
    %275 = vst [vmem:[#allocation2 + $0xc8] sm:$0xff] %v243
    %276 = vst [vmem:[#allocation2 + $0xd0] sm:$0xff] %v244
    %277 = vst [vmem:[#allocation2 + $0xd8] sm:$0xff] %v245
    %278 = vst [vmem:[#allocation2 + $0xe0] sm:$0xff] %v246
    %279 = vst [vmem:[#allocation2 + $0xe8] sm:$0xff] %v247
    %280 = vst [vmem:[#allocation2 + $0xf0] sm:$0xff] %v248
    %281 = vst [vmem:[#allocation2 + $0xf8] sm:$0xff] %v249
    %282 = vrot.lane.b32.xlu0 %v65, 16
    %v283 = vpop.permute.xlu0 %282
    %284 = vrot.lane.b32.xlu0 %v69, 16
    %v285 = vpop.permute.xlu0 %284
    %286 = vrot.lane.b32.xlu0 %v73, 16
    %v287 = vpop.permute.xlu0 %286
    %288 = vrot.lane.b32.xlu0 %v77, 16
    %v289 = vpop.permute.xlu0 %288
    %290 = vrot.lane.b32.xlu0 %v81, 16
    %v291 = vpop.permute.xlu0 %290
    %292 = vrot.lane.b32.xlu0 %v85, 16
    %v293 = vpop.permute.xlu0 %292
    %294 = vrot.lane.b32.xlu0 %v89, 16
    %v295 = vpop.permute.xlu0 %294
    %296 = vrot.lane.b32.xlu0 %v93, 16
    %v297 = vpop.permute.xlu0 %296
    %298 = vrot.lane.b32.xlu0 %v66, 16
    %v299 = vpop.permute.xlu0 %298
    %300 = vrot.lane.b32.xlu0 %v70, 16
    %v301 = vpop.permute.xlu0 %300
    %302 = vrot.lane.b32.xlu0 %v74, 16
    %v303 = vpop.permute.xlu0 %302
    %304 = vrot.lane.b32.xlu0 %v78, 16
    %v305 = vpop.permute.xlu0 %304
    %306 = vrot.lane.b32.xlu0 %v82, 16
    %v307 = vpop.permute.xlu0 %306
    %308 = vrot.lane.b32.xlu0 %v86, 16
    %v309 = vpop.permute.xlu0 %308
    %310 = vrot.lane.b32.xlu0 %v90, 16
    %v311 = vpop.permute.xlu0 %310
    %312 = vrot.lane.b32.xlu0 %v94, 16
    %v313 = vpop.permute.xlu0 %312
    %314 = vrot.lane.b32.xlu0 %v67, 16
    %v315 = vpop.permute.xlu0 %314
    %316 = vrot.lane.b32.xlu0 %v71, 16
    %v317 = vpop.permute.xlu0 %316
    %318 = vrot.lane.b32.xlu0 %v75, 16
    %v319 = vpop.permute.xlu0 %318
    %320 = vrot.lane.b32.xlu0 %v79, 16
    %v321 = vpop.permute.xlu0 %320
    %322 = vrot.lane.b32.xlu0 %v83, 16
    %v323 = vpop.permute.xlu0 %322
    %324 = vrot.lane.b32.xlu0 %v87, 16
    %v325 = vpop.permute.xlu0 %324
    %326 = vrot.lane.b32.xlu0 %v91, 16
    %v327 = vpop.permute.xlu0 %326
    %328 = vrot.lane.b32.xlu0 %v95, 16
    %v329 = vpop.permute.xlu0 %328
    %330 = vrot.lane.b32.xlu0 %v68, 16
    %v331 = vpop.permute.xlu0 %330
    %332 = vrot.lane.b32.xlu0 %v72, 16
    %v333 = vpop.permute.xlu0 %332
    %334 = vrot.lane.b32.xlu0 %v76, 16
    %v335 = vpop.permute.xlu0 %334
    %336 = vrot.lane.b32.xlu0 %v80, 16
    %v337 = vpop.permute.xlu0 %336
    %338 = vrot.lane.b32.xlu0 %v84, 16
    %v339 = vpop.permute.xlu0 %338
    %340 = vrot.lane.b32.xlu0 %v88, 16
    %v341 = vpop.permute.xlu0 %340
    %342 = vrot.lane.b32.xlu0 %v92, 16
    %v343 = vpop.permute.xlu0 %342
    %344 = vrot.lane.b32.xlu0 %v96, 16
    %v345 = vpop.permute.xlu0 %344
    %vm346 = vcmp.lt.s32.totalorder %v162, 16
    %v347 = vsel %vm346, %v315, %v331
    %v348 = vsel %vm346, %v317, %v333
    %v349 = vsel %vm346, %v319, %v335
    %v350 = vsel %vm346, %v321, %v337
    %v351 = vsel %vm346, %v323, %v339
    %v352 = vsel %vm346, %v325, %v341
    %v353 = vsel %vm346, %v327, %v343
    %v354 = vsel %vm346, %v329, %v345
    %v355 = vsel %vm346, %v299, %v315
    %v356 = vsel %vm346, %v301, %v317
    %v357 = vsel %vm346, %v303, %v319
    %v358 = vsel %vm346, %v305, %v321
    %v359 = vsel %vm346, %v307, %v323
    %v360 = vsel %vm346, %v309, %v325
    %v361 = vsel %vm346, %v311, %v327
    %v362 = vsel %vm346, %v313, %v329
    %v363 = vsel %vm346, %v283, %v299
    %v364 = vsel %vm346, %v285, %v301
    %v365 = vsel %vm346, %v287, %v303
    %v366 = vsel %vm346, %v289, %v305
    %v367 = vsel %vm346, %v291, %v307
    %v368 = vsel %vm346, %v293, %v309
    %v369 = vsel %vm346, %v295, %v311
    %v370 = vsel %vm346, %v297, %v313
    %v371 = vsel %vm346, %v331, %v283
    %v372 = vsel %vm346, %v333, %v285
    %v373 = vsel %vm346, %v335, %v287
    %v374 = vsel %vm346, %v337, %v289
    %v375 = vsel %vm346, %v339, %v291
    %v376 = vsel %vm346, %v341, %v293
    %v377 = vsel %vm346, %v343, %v295
    %v378 = vsel %vm346, %v345, %v297
    %s379 = scalar_lea.vmem %s0, 4
    %v380 = vld [vmem:[%s379] sm:$0xf]
    %v382 = vlaneseq
    %v383 = vshrl.u32 %v382, 7
    %v384 = vsub.s32 0, %v383
    %v385 = vrot.slane %v380, %v384
    %v386 = vlaneseq
    %v387 = vshrl.u32 %v386, 7
    %v388 = vsub.s32 1, %v387
    %v389 = vrot.slane %v380, %v388
    %v390 = vlaneseq
    %v391 = vshrl.u32 %v390, 7
    %v392 = vsub.s32 2, %v391
    %v393 = vrot.slane %v380, %v392
    %v394 = vlaneseq
    %v395 = vshrl.u32 %v394, 7
    %v396 = vsub.s32 3, %v395
    %v397 = vrot.slane %v380, %v396
    %v402 = vmul.f32 %v371, %v385
    %v403 = vmul.f32 %v363, %v389
    %v404 = vmul.f32 %v355, %v393
    %v405 = vmul.f32 %v347, %v397
    %v406 = vmul.f32 %v372, %v385
    %v407 = vmul.f32 %v364, %v389
    %v408 = vmul.f32 %v356, %v393
    %v409 = vmul.f32 %v348, %v397
    %v410 = vmul.f32 %v373, %v385
    %v411 = vmul.f32 %v365, %v389
    %v412 = vmul.f32 %v357, %v393
    %v413 = vmul.f32 %v349, %v397
    %v414 = vmul.f32 %v374, %v385
    %v415 = vmul.f32 %v366, %v389
    %v416 = vmul.f32 %v358, %v393
    %v417 = vmul.f32 %v350, %v397
    %v418 = vmul.f32 %v375, %v385
    %v419 = vmul.f32 %v367, %v389
    %v420 = vmul.f32 %v359, %v393
    %v421 = vmul.f32 %v351, %v397
    %v422 = vmul.f32 %v376, %v385
    %v423 = vmul.f32 %v368, %v389
    %v424 = vmul.f32 %v360, %v393
    %v425 = vmul.f32 %v352, %v397
    %v426 = vmul.f32 %v377, %v385
    %v427 = vmul.f32 %v369, %v389
    %v428 = vmul.f32 %v361, %v393
    %v429 = vmul.f32 %v353, %v397
    %v430 = vmul.f32 %v378, %v385
    %v431 = vmul.f32 %v370, %v389
    %v432 = vmul.f32 %v362, %v393
    %v433 = vmul.f32 %v354, %v397
    %434 = vst [vmem:[#allocation2 + $0x100] sm:$0xff] %v402
    %435 = vst [vmem:[#allocation2 + $0x108] sm:$0xff] %v403
    %436 = vst [vmem:[#allocation2 + $0x110] sm:$0xff] %v404
    %437 = vst [vmem:[#allocation2 + $0x118] sm:$0xff] %v405
    %438 = vst [vmem:[#allocation2 + $0x120] sm:$0xff] %v406
    %439 = vst [vmem:[#allocation2 + $0x128] sm:$0xff] %v407
    %440 = vst [vmem:[#allocation2 + $0x130] sm:$0xff] %v408
    %441 = vst [vmem:[#allocation2 + $0x138] sm:$0xff] %v409
    %442 = vst [vmem:[#allocation2 + $0x140] sm:$0xff] %v410
    %443 = vst [vmem:[#allocation2 + $0x148] sm:$0xff] %v411
    %444 = vst [vmem:[#allocation2 + $0x150] sm:$0xff] %v412
    %445 = vst [vmem:[#allocation2 + $0x158] sm:$0xff] %v413
    %446 = vst [vmem:[#allocation2 + $0x160] sm:$0xff] %v414
    %447 = vst [vmem:[#allocation2 + $0x168] sm:$0xff] %v415
    %448 = vst [vmem:[#allocation2 + $0x170] sm:$0xff] %v416
    %449 = vst [vmem:[#allocation2 + $0x178] sm:$0xff] %v417
    %450 = vst [vmem:[#allocation2 + $0x180] sm:$0xff] %v418
    %451 = vst [vmem:[#allocation2 + $0x188] sm:$0xff] %v419
    %452 = vst [vmem:[#allocation2 + $0x190] sm:$0xff] %v420
    %453 = vst [vmem:[#allocation2 + $0x198] sm:$0xff] %v421
    %454 = vst [vmem:[#allocation2 + $0x1a0] sm:$0xff] %v422
    %455 = vst [vmem:[#allocation2 + $0x1a8] sm:$0xff] %v423
    %456 = vst [vmem:[#allocation2 + $0x1b0] sm:$0xff] %v424
    %457 = vst [vmem:[#allocation2 + $0x1b8] sm:$0xff] %v425
    %458 = vst [vmem:[#allocation2 + $0x1c0] sm:$0xff] %v426
    %459 = vst [vmem:[#allocation2 + $0x1c8] sm:$0xff] %v427
    %460 = vst [vmem:[#allocation2 + $0x1d0] sm:$0xff] %v428
    %461 = vst [vmem:[#allocation2 + $0x1d8] sm:$0xff] %v429
    %462 = vst [vmem:[#allocation2 + $0x1e0] sm:$0xff] %v430
    %463 = vst [vmem:[#allocation2 + $0x1e8] sm:$0xff] %v431
    %464 = vst [vmem:[#allocation2 + $0x1f0] sm:$0xff] %v432
    %465 = vst [vmem:[#allocation2 + $0x1f8] sm:$0xff] %v433
    %466 = vrot.lane.b32.xlu0 %v65, 15
    %v467 = vpop.permute.xlu0 %466
    %468 = vrot.lane.b32.xlu0 %v69, 15
    %v469 = vpop.permute.xlu0 %468
    %470 = vrot.lane.b32.xlu0 %v73, 15
    %v471 = vpop.permute.xlu0 %470
    %472 = vrot.lane.b32.xlu0 %v77, 15
    %v473 = vpop.permute.xlu0 %472
    %474 = vrot.lane.b32.xlu0 %v81, 15
    %v475 = vpop.permute.xlu0 %474
    %476 = vrot.lane.b32.xlu0 %v85, 15
    %v477 = vpop.permute.xlu0 %476
    %478 = vrot.lane.b32.xlu0 %v89, 15
    %v479 = vpop.permute.xlu0 %478
    %480 = vrot.lane.b32.xlu0 %v93, 15
    %v481 = vpop.permute.xlu0 %480
    %482 = vrot.lane.b32.xlu0 %v66, 15
    %v483 = vpop.permute.xlu0 %482
    %484 = vrot.lane.b32.xlu0 %v70, 15
    %v485 = vpop.permute.xlu0 %484
    %486 = vrot.lane.b32.xlu0 %v74, 15
    %v487 = vpop.permute.xlu0 %486
    %488 = vrot.lane.b32.xlu0 %v78, 15
    %v489 = vpop.permute.xlu0 %488
    %490 = vrot.lane.b32.xlu0 %v82, 15
    %v491 = vpop.permute.xlu0 %490
    %492 = vrot.lane.b32.xlu0 %v86, 15
    %v493 = vpop.permute.xlu0 %492
    %494 = vrot.lane.b32.xlu0 %v90, 15
    %v495 = vpop.permute.xlu0 %494
    %496 = vrot.lane.b32.xlu0 %v94, 15
    %v497 = vpop.permute.xlu0 %496
    %498 = vrot.lane.b32.xlu0 %v67, 15
    %v499 = vpop.permute.xlu0 %498
    %500 = vrot.lane.b32.xlu0 %v71, 15
    %v501 = vpop.permute.xlu0 %500
    %502 = vrot.lane.b32.xlu0 %v75, 15
    %v503 = vpop.permute.xlu0 %502
    %504 = vrot.lane.b32.xlu0 %v79, 15
    %v505 = vpop.permute.xlu0 %504
    %506 = vrot.lane.b32.xlu0 %v83, 15
    %v507 = vpop.permute.xlu0 %506
    %508 = vrot.lane.b32.xlu0 %v87, 15
    %v509 = vpop.permute.xlu0 %508
    %510 = vrot.lane.b32.xlu0 %v91, 15
    %v511 = vpop.permute.xlu0 %510
    %512 = vrot.lane.b32.xlu0 %v95, 15
    %v513 = vpop.permute.xlu0 %512
    %514 = vrot.lane.b32.xlu0 %v68, 15
    %v515 = vpop.permute.xlu0 %514
    %516 = vrot.lane.b32.xlu0 %v72, 15
    %v517 = vpop.permute.xlu0 %516
    %518 = vrot.lane.b32.xlu0 %v76, 15
    %v519 = vpop.permute.xlu0 %518
    %520 = vrot.lane.b32.xlu0 %v80, 15
    %v521 = vpop.permute.xlu0 %520
    %522 = vrot.lane.b32.xlu0 %v84, 15
    %v523 = vpop.permute.xlu0 %522
    %524 = vrot.lane.b32.xlu0 %v88, 15
    %v525 = vpop.permute.xlu0 %524
    %526 = vrot.lane.b32.xlu0 %v92, 15
    %v527 = vpop.permute.xlu0 %526
    %528 = vrot.lane.b32.xlu0 %v96, 15
    %v529 = vpop.permute.xlu0 %528
    %vm530 = vcmp.lt.s32.totalorder %v162, 15
    %v531 = vsel %vm530, %v499, %v515
    %v532 = vsel %vm530, %v501, %v517
    %v533 = vsel %vm530, %v503, %v519
    %v534 = vsel %vm530, %v505, %v521
    %v535 = vsel %vm530, %v507, %v523
    %v536 = vsel %vm530, %v509, %v525
    %v537 = vsel %vm530, %v511, %v527
    %v538 = vsel %vm530, %v513, %v529
    %v539 = vsel %vm530, %v483, %v499
    %v540 = vsel %vm530, %v485, %v501
    %v541 = vsel %vm530, %v487, %v503
    %v542 = vsel %vm530, %v489, %v505
    %v543 = vsel %vm530, %v491, %v507
    %v544 = vsel %vm530, %v493, %v509
    %v545 = vsel %vm530, %v495, %v511
    %v546 = vsel %vm530, %v497, %v513
    %v547 = vsel %vm530, %v467, %v483
    %v548 = vsel %vm530, %v469, %v485
    %v549 = vsel %vm530, %v471, %v487
    %v550 = vsel %vm530, %v473, %v489
    %v551 = vsel %vm530, %v475, %v491
    %v552 = vsel %vm530, %v477, %v493
    %v553 = vsel %vm530, %v479, %v495
    %v554 = vsel %vm530, %v481, %v497
    %v555 = vsel %vm530, %v515, %v467
    %v556 = vsel %vm530, %v517, %v469
    %v557 = vsel %vm530, %v519, %v471
    %v558 = vsel %vm530, %v521, %v473
    %v559 = vsel %vm530, %v523, %v475
    %v560 = vsel %vm530, %v525, %v477
    %v561 = vsel %vm530, %v527, %v479
    %v562 = vsel %vm530, %v529, %v481
    %s563 = scalar_lea.vmem %s0, 8
    %v564 = vld [vmem:[%s563] sm:$0xf]
    %v566 = vlaneseq
    %v567 = vshrl.u32 %v566, 7
    %v568 = vsub.s32 0, %v567
    %v569 = vrot.slane %v564, %v568
    %v570 = vlaneseq
    %v571 = vshrl.u32 %v570, 7
    %v572 = vsub.s32 1, %v571
    %v573 = vrot.slane %v564, %v572
    %v574 = vlaneseq
    %v575 = vshrl.u32 %v574, 7
    %v576 = vsub.s32 2, %v575
    %v577 = vrot.slane %v564, %v576
    %v578 = vlaneseq
    %v579 = vshrl.u32 %v578, 7
    %v580 = vsub.s32 3, %v579
    %v581 = vrot.slane %v564, %v580
    %v586 = vmul.f32 %v555, %v569
    %v587 = vmul.f32 %v547, %v573
    %v588 = vmul.f32 %v539, %v577
    %v589 = vmul.f32 %v531, %v581
    %v590 = vmul.f32 %v556, %v569
    %v591 = vmul.f32 %v548, %v573
    %v592 = vmul.f32 %v540, %v577
    %v593 = vmul.f32 %v532, %v581
    %v594 = vmul.f32 %v557, %v569
    %v595 = vmul.f32 %v549, %v573
    %v596 = vmul.f32 %v541, %v577
    %v597 = vmul.f32 %v533, %v581
    %v598 = vmul.f32 %v558, %v569
    %v599 = vmul.f32 %v550, %v573
    %v600 = vmul.f32 %v542, %v577
    %v601 = vmul.f32 %v534, %v581
    %v602 = vmul.f32 %v559, %v569
    %v603 = vmul.f32 %v551, %v573
    %v604 = vmul.f32 %v543, %v577
    %v605 = vmul.f32 %v535, %v581
    %v606 = vmul.f32 %v560, %v569
    %v607 = vmul.f32 %v552, %v573
    %v608 = vmul.f32 %v544, %v577
    %v609 = vmul.f32 %v536, %v581
    %v610 = vmul.f32 %v561, %v569
    %v611 = vmul.f32 %v553, %v573
    %v612 = vmul.f32 %v545, %v577
    %v613 = vmul.f32 %v537, %v581
    %v614 = vmul.f32 %v562, %v569
    %v615 = vmul.f32 %v554, %v573
    %v616 = vmul.f32 %v546, %v577
    %v617 = vmul.f32 %v538, %v581
    %618 = vst [vmem:[#allocation2 + $0x200] sm:$0xff] %v586
    %619 = vst [vmem:[#allocation2 + $0x208] sm:$0xff] %v587
    %620 = vst [vmem:[#allocation2 + $0x210] sm:$0xff] %v588
    %621 = vst [vmem:[#allocation2 + $0x218] sm:$0xff] %v589
    %622 = vst [vmem:[#allocation2 + $0x220] sm:$0xff] %v590
    %623 = vst [vmem:[#allocation2 + $0x228] sm:$0xff] %v591
    %624 = vst [vmem:[#allocation2 + $0x230] sm:$0xff] %v592
    %625 = vst [vmem:[#allocation2 + $0x238] sm:$0xff] %v593
    %626 = vst [vmem:[#allocation2 + $0x240] sm:$0xff] %v594
    %627 = vst [vmem:[#allocation2 + $0x248] sm:$0xff] %v595
    %628 = vst [vmem:[#allocation2 + $0x250] sm:$0xff] %v596
    %629 = vst [vmem:[#allocation2 + $0x258] sm:$0xff] %v597
    %630 = vst [vmem:[#allocation2 + $0x260] sm:$0xff] %v598
    %631 = vst [vmem:[#allocation2 + $0x268] sm:$0xff] %v599
    %632 = vst [vmem:[#allocation2 + $0x270] sm:$0xff] %v600
    %633 = vst [vmem:[#allocation2 + $0x278] sm:$0xff] %v601
    %634 = vst [vmem:[#allocation2 + $0x280] sm:$0xff] %v602
    %635 = vst [vmem:[#allocation2 + $0x288] sm:$0xff] %v603
    %636 = vst [vmem:[#allocation2 + $0x290] sm:$0xff] %v604
    %637 = vst [vmem:[#allocation2 + $0x298] sm:$0xff] %v605
    %638 = vst [vmem:[#allocation2 + $0x2a0] sm:$0xff] %v606
    %639 = vst [vmem:[#allocation2 + $0x2a8] sm:$0xff] %v607
    %640 = vst [vmem:[#allocation2 + $0x2b0] sm:$0xff] %v608
    %641 = vst [vmem:[#allocation2 + $0x2b8] sm:$0xff] %v609
    %642 = vst [vmem:[#allocation2 + $0x2c0] sm:$0xff] %v610
    %643 = vst [vmem:[#allocation2 + $0x2c8] sm:$0xff] %v611
    %644 = vst [vmem:[#allocation2 + $0x2d0] sm:$0xff] %v612
    %645 = vst [vmem:[#allocation2 + $0x2d8] sm:$0xff] %v613
    %646 = vst [vmem:[#allocation2 + $0x2e0] sm:$0xff] %v614
    %647 = vst [vmem:[#allocation2 + $0x2e8] sm:$0xff] %v615
    %648 = vst [vmem:[#allocation2 + $0x2f0] sm:$0xff] %v616
    %649 = vst [vmem:[#allocation2 + $0x2f8] sm:$0xff] %v617
    %650 = vrot.lane.b32.xlu0 %v65, 1
    %v651 = vpop.permute.xlu0 %650
    %652 = vrot.lane.b32.xlu0 %v69, 1
    %v653 = vpop.permute.xlu0 %652
    %654 = vrot.lane.b32.xlu0 %v73, 1
    %v655 = vpop.permute.xlu0 %654
    %656 = vrot.lane.b32.xlu0 %v77, 1
    %v657 = vpop.permute.xlu0 %656
    %658 = vrot.lane.b32.xlu0 %v81, 1
    %v659 = vpop.permute.xlu0 %658
    %660 = vrot.lane.b32.xlu0 %v85, 1
    %v661 = vpop.permute.xlu0 %660
    %662 = vrot.lane.b32.xlu0 %v89, 1
    %v663 = vpop.permute.xlu0 %662
    %664 = vrot.lane.b32.xlu0 %v93, 1
    %v665 = vpop.permute.xlu0 %664
    %666 = vrot.lane.b32.xlu0 %v66, 1
    %v667 = vpop.permute.xlu0 %666
    %668 = vrot.lane.b32.xlu0 %v70, 1
    %v669 = vpop.permute.xlu0 %668
    %670 = vrot.lane.b32.xlu0 %v74, 1
    %v671 = vpop.permute.xlu0 %670
    %672 = vrot.lane.b32.xlu0 %v78, 1
    %v673 = vpop.permute.xlu0 %672
    %674 = vrot.lane.b32.xlu0 %v82, 1
    %v675 = vpop.permute.xlu0 %674
    %676 = vrot.lane.b32.xlu0 %v86, 1
    %v677 = vpop.permute.xlu0 %676
    %678 = vrot.lane.b32.xlu0 %v90, 1
    %v679 = vpop.permute.xlu0 %678
    %680 = vrot.lane.b32.xlu0 %v94, 1
    %v681 = vpop.permute.xlu0 %680
    %682 = vrot.lane.b32.xlu0 %v67, 1
    %v683 = vpop.permute.xlu0 %682
    %684 = vrot.lane.b32.xlu0 %v71, 1
    %v685 = vpop.permute.xlu0 %684
    %686 = vrot.lane.b32.xlu0 %v75, 1
    %v687 = vpop.permute.xlu0 %686
    %688 = vrot.lane.b32.xlu0 %v79, 1
    %v689 = vpop.permute.xlu0 %688
    %690 = vrot.lane.b32.xlu0 %v83, 1
    %v691 = vpop.permute.xlu0 %690
    %692 = vrot.lane.b32.xlu0 %v87, 1
    %v693 = vpop.permute.xlu0 %692
    %694 = vrot.lane.b32.xlu0 %v91, 1
    %v695 = vpop.permute.xlu0 %694
    %696 = vrot.lane.b32.xlu0 %v95, 1
    %v697 = vpop.permute.xlu0 %696
    %698 = vrot.lane.b32.xlu0 %v68, 1
    %v699 = vpop.permute.xlu0 %698
    %700 = vrot.lane.b32.xlu0 %v72, 1
    %v701 = vpop.permute.xlu0 %700
    %702 = vrot.lane.b32.xlu0 %v76, 1
    %v703 = vpop.permute.xlu0 %702
    %704 = vrot.lane.b32.xlu0 %v80, 1
    %v705 = vpop.permute.xlu0 %704
    %706 = vrot.lane.b32.xlu0 %v84, 1
    %v707 = vpop.permute.xlu0 %706
    %708 = vrot.lane.b32.xlu0 %v88, 1
    %v709 = vpop.permute.xlu0 %708
    %710 = vrot.lane.b32.xlu0 %v92, 1
    %v711 = vpop.permute.xlu0 %710
    %712 = vrot.lane.b32.xlu0 %v96, 1
    %v713 = vpop.permute.xlu0 %712
    %vm714 = vcmp.lt.s32.totalorder %v162, 1
    %v715 = vsel %vm714, %v683, %v699
    %v716 = vsel %vm714, %v685, %v701
    %v717 = vsel %vm714, %v687, %v703
    %v718 = vsel %vm714, %v689, %v705
    %v719 = vsel %vm714, %v691, %v707
    %v720 = vsel %vm714, %v693, %v709
    %v721 = vsel %vm714, %v695, %v711
    %v722 = vsel %vm714, %v697, %v713
    %v723 = vsel %vm714, %v667, %v683
    %v724 = vsel %vm714, %v669, %v685
    %v725 = vsel %vm714, %v671, %v687
    %v726 = vsel %vm714, %v673, %v689
    %v727 = vsel %vm714, %v675, %v691
    %v728 = vsel %vm714, %v677, %v693
    %v729 = vsel %vm714, %v679, %v695
    %v730 = vsel %vm714, %v681, %v697
    %v731 = vsel %vm714, %v651, %v667
    %v732 = vsel %vm714, %v653, %v669
    %v733 = vsel %vm714, %v655, %v671
    %v734 = vsel %vm714, %v657, %v673
    %v735 = vsel %vm714, %v659, %v675
    %v736 = vsel %vm714, %v661, %v677
    %v737 = vsel %vm714, %v663, %v679
    %v738 = vsel %vm714, %v665, %v681
    %v739 = vsel %vm714, %v699, %v651
    %v740 = vsel %vm714, %v701, %v653
    %v741 = vsel %vm714, %v703, %v655
    %v742 = vsel %vm714, %v705, %v657
    %v743 = vsel %vm714, %v707, %v659
    %v744 = vsel %vm714, %v709, %v661
    %v745 = vsel %vm714, %v711, %v663
    %v746 = vsel %vm714, %v713, %v665
    %s747 = scalar_lea.vmem %s0, 12
    %v748 = vld [vmem:[%s747] sm:$0xf]
    %v750 = vlaneseq
    %v751 = vshrl.u32 %v750, 7
    %v752 = vsub.s32 0, %v751
    %v753 = vrot.slane %v748, %v752
    %v754 = vlaneseq
    %v755 = vshrl.u32 %v754, 7
    %v756 = vsub.s32 1, %v755
    %v757 = vrot.slane %v748, %v756
    %v758 = vlaneseq
    %v759 = vshrl.u32 %v758, 7
    %v760 = vsub.s32 2, %v759
    %v761 = vrot.slane %v748, %v760
    %v762 = vlaneseq
    %v763 = vshrl.u32 %v762, 7
    %v764 = vsub.s32 3, %v763
    %v765 = vrot.slane %v748, %v764
    %v770 = vmul.f32 %v739, %v753
    %v771 = vmul.f32 %v731, %v757
    %v772 = vmul.f32 %v723, %v761
    %v773 = vmul.f32 %v715, %v765
    %v774 = vmul.f32 %v740, %v753
    %v775 = vmul.f32 %v732, %v757
    %v776 = vmul.f32 %v724, %v761
    %v777 = vmul.f32 %v716, %v765
    %v778 = vmul.f32 %v741, %v753
    %v779 = vmul.f32 %v733, %v757
    %v780 = vmul.f32 %v725, %v761
    %v781 = vmul.f32 %v717, %v765
    %v782 = vmul.f32 %v742, %v753
    %v783 = vmul.f32 %v734, %v757
    %v784 = vmul.f32 %v726, %v761
    %v785 = vmul.f32 %v718, %v765
    %v786 = vmul.f32 %v743, %v753
    %v787 = vmul.f32 %v735, %v757
    %v788 = vmul.f32 %v727, %v761
    %v789 = vmul.f32 %v719, %v765
    %v790 = vmul.f32 %v744, %v753
    %v791 = vmul.f32 %v736, %v757
    %v792 = vmul.f32 %v728, %v761
    %v793 = vmul.f32 %v720, %v765
    %v794 = vmul.f32 %v745, %v753
    %v795 = vmul.f32 %v737, %v757
    %v796 = vmul.f32 %v729, %v761
    %v797 = vmul.f32 %v721, %v765
    %v798 = vmul.f32 %v746, %v753
    %v799 = vmul.f32 %v738, %v757
    %v800 = vmul.f32 %v730, %v761
    %v801 = vmul.f32 %v722, %v765
    %802 = vst [vmem:[#allocation2 + $0x300] sm:$0xff] %v770
    %803 = vst [vmem:[#allocation2 + $0x308] sm:$0xff] %v771
    %804 = vst [vmem:[#allocation2 + $0x310] sm:$0xff] %v772
    %805 = vst [vmem:[#allocation2 + $0x318] sm:$0xff] %v773
    %806 = vst [vmem:[#allocation2 + $0x320] sm:$0xff] %v774
    %807 = vst [vmem:[#allocation2 + $0x328] sm:$0xff] %v775
    %808 = vst [vmem:[#allocation2 + $0x330] sm:$0xff] %v776
    %809 = vst [vmem:[#allocation2 + $0x338] sm:$0xff] %v777
    %810 = vst [vmem:[#allocation2 + $0x340] sm:$0xff] %v778
    %811 = vst [vmem:[#allocation2 + $0x348] sm:$0xff] %v779
    %812 = vst [vmem:[#allocation2 + $0x350] sm:$0xff] %v780
    %813 = vst [vmem:[#allocation2 + $0x358] sm:$0xff] %v781
    %814 = vst [vmem:[#allocation2 + $0x360] sm:$0xff] %v782
    %815 = vst [vmem:[#allocation2 + $0x368] sm:$0xff] %v783
    %816 = vst [vmem:[#allocation2 + $0x370] sm:$0xff] %v784
    %817 = vst [vmem:[#allocation2 + $0x378] sm:$0xff] %v785
    %818 = vst [vmem:[#allocation2 + $0x380] sm:$0xff] %v786
    %819 = vst [vmem:[#allocation2 + $0x388] sm:$0xff] %v787
    %820 = vst [vmem:[#allocation2 + $0x390] sm:$0xff] %v788
    %821 = vst [vmem:[#allocation2 + $0x398] sm:$0xff] %v789
    %822 = vst [vmem:[#allocation2 + $0x3a0] sm:$0xff] %v790
    %823 = vst [vmem:[#allocation2 + $0x3a8] sm:$0xff] %v791
    %824 = vst [vmem:[#allocation2 + $0x3b0] sm:$0xff] %v792
    %825 = vst [vmem:[#allocation2 + $0x3b8] sm:$0xff] %v793
    %826 = vst [vmem:[#allocation2 + $0x3c0] sm:$0xff] %v794
    %827 = vst [vmem:[#allocation2 + $0x3c8] sm:$0xff] %v795
    %828 = vst [vmem:[#allocation2 + $0x3d0] sm:$0xff] %v796
    %829 = vst [vmem:[#allocation2 + $0x3d8] sm:$0xff] %v797
    %830 = vst [vmem:[#allocation2 + $0x3e0] sm:$0xff] %v798
    %831 = vst [vmem:[#allocation2 + $0x3e8] sm:$0xff] %v799
    %832 = vst [vmem:[#allocation2 + $0x3f0] sm:$0xff] %v800
    %833 = vst [vmem:[#allocation2 + $0x3f8] sm:$0xff] %v801
    %834 = vst [vmem:[#allocation2 + $0x400] sm:$0xff] %v65
    %835 = vst [vmem:[#allocation2 + $0x408] sm:$0xff] %v66
    %836 = vst [vmem:[#allocation2 + $0x410] sm:$0xff] %v67
    %837 = vst [vmem:[#allocation2 + $0x418] sm:$0xff] %v68
    %838 = vst [vmem:[#allocation2 + $0x420] sm:$0xff] %v69
    %839 = vst [vmem:[#allocation2 + $0x428] sm:$0xff] %v70
    %840 = vst [vmem:[#allocation2 + $0x430] sm:$0xff] %v71
    %841 = vst [vmem:[#allocation2 + $0x438] sm:$0xff] %v72
    %842 = vst [vmem:[#allocation2 + $0x440] sm:$0xff] %v73
    %843 = vst [vmem:[#allocation2 + $0x448] sm:$0xff] %v74
    %844 = vst [vmem:[#allocation2 + $0x450] sm:$0xff] %v75
    %845 = vst [vmem:[#allocation2 + $0x458] sm:$0xff] %v76
    %846 = vst [vmem:[#allocation2 + $0x460] sm:$0xff] %v77
    %847 = vst [vmem:[#allocation2 + $0x468] sm:$0xff] %v78
    %848 = vst [vmem:[#allocation2 + $0x470] sm:$0xff] %v79
    %849 = vst [vmem:[#allocation2 + $0x478] sm:$0xff] %v80
    %850 = vst [vmem:[#allocation2 + $0x480] sm:$0xff] %v81
    %851 = vst [vmem:[#allocation2 + $0x488] sm:$0xff] %v82
    %852 = vst [vmem:[#allocation2 + $0x490] sm:$0xff] %v83
    %853 = vst [vmem:[#allocation2 + $0x498] sm:$0xff] %v84
    %854 = vst [vmem:[#allocation2 + $0x4a0] sm:$0xff] %v85
    %855 = vst [vmem:[#allocation2 + $0x4a8] sm:$0xff] %v86
    %856 = vst [vmem:[#allocation2 + $0x4b0] sm:$0xff] %v87
    %857 = vst [vmem:[#allocation2 + $0x4b8] sm:$0xff] %v88
    %858 = vst [vmem:[#allocation2 + $0x4c0] sm:$0xff] %v89
    %859 = vst [vmem:[#allocation2 + $0x4c8] sm:$0xff] %v90
    %860 = vst [vmem:[#allocation2 + $0x4d0] sm:$0xff] %v91
    %861 = vst [vmem:[#allocation2 + $0x4d8] sm:$0xff] %v92
    %862 = vst [vmem:[#allocation2 + $0x4e0] sm:$0xff] %v93
    %863 = vst [vmem:[#allocation2 + $0x4e8] sm:$0xff] %v94
    %864 = vst [vmem:[#allocation2 + $0x4f0] sm:$0xff] %v95
    %865 = vst [vmem:[#allocation2 + $0x4f8] sm:$0xff] %v96
    %866 = vrot.lane.b32.xlu0 %v65, 127
    %v867 = vpop.permute.xlu0 %866
    %868 = vrot.lane.b32.xlu0 %v69, 127
    %v869 = vpop.permute.xlu0 %868
    %870 = vrot.lane.b32.xlu0 %v73, 127
    %v871 = vpop.permute.xlu0 %870
    %872 = vrot.lane.b32.xlu0 %v77, 127
    %v873 = vpop.permute.xlu0 %872
    %874 = vrot.lane.b32.xlu0 %v81, 127
    %v875 = vpop.permute.xlu0 %874
    %876 = vrot.lane.b32.xlu0 %v85, 127
    %v877 = vpop.permute.xlu0 %876
    %878 = vrot.lane.b32.xlu0 %v89, 127
    %v879 = vpop.permute.xlu0 %878
    %880 = vrot.lane.b32.xlu0 %v93, 127
    %v881 = vpop.permute.xlu0 %880
    %882 = vrot.lane.b32.xlu0 %v66, 127
    %v883 = vpop.permute.xlu0 %882
    %884 = vrot.lane.b32.xlu0 %v70, 127
    %v885 = vpop.permute.xlu0 %884
    %886 = vrot.lane.b32.xlu0 %v74, 127
    %v887 = vpop.permute.xlu0 %886
    %888 = vrot.lane.b32.xlu0 %v78, 127
    %v889 = vpop.permute.xlu0 %888
    %890 = vrot.lane.b32.xlu0 %v82, 127
    %v891 = vpop.permute.xlu0 %890
    %892 = vrot.lane.b32.xlu0 %v86, 127
    %v893 = vpop.permute.xlu0 %892
    %894 = vrot.lane.b32.xlu0 %v90, 127
    %v895 = vpop.permute.xlu0 %894
    %896 = vrot.lane.b32.xlu0 %v94, 127
    %v897 = vpop.permute.xlu0 %896
    %898 = vrot.lane.b32.xlu0 %v67, 127
    %v899 = vpop.permute.xlu0 %898
    %900 = vrot.lane.b32.xlu0 %v71, 127
    %v901 = vpop.permute.xlu0 %900
    %902 = vrot.lane.b32.xlu0 %v75, 127
    %v903 = vpop.permute.xlu0 %902
    %904 = vrot.lane.b32.xlu0 %v79, 127
    %v905 = vpop.permute.xlu0 %904
    %906 = vrot.lane.b32.xlu0 %v83, 127
    %v907 = vpop.permute.xlu0 %906
    %908 = vrot.lane.b32.xlu0 %v87, 127
    %v909 = vpop.permute.xlu0 %908
    %910 = vrot.lane.b32.xlu0 %v91, 127
    %v911 = vpop.permute.xlu0 %910
    %912 = vrot.lane.b32.xlu0 %v95, 127
    %v913 = vpop.permute.xlu0 %912
    %914 = vrot.lane.b32.xlu0 %v68, 127
    %v915 = vpop.permute.xlu0 %914
    %916 = vrot.lane.b32.xlu0 %v72, 127
    %v917 = vpop.permute.xlu0 %916
    %918 = vrot.lane.b32.xlu0 %v76, 127
    %v919 = vpop.permute.xlu0 %918
    %920 = vrot.lane.b32.xlu0 %v80, 127
    %v921 = vpop.permute.xlu0 %920
    %922 = vrot.lane.b32.xlu0 %v84, 127
    %v923 = vpop.permute.xlu0 %922
    %924 = vrot.lane.b32.xlu0 %v88, 127
    %v925 = vpop.permute.xlu0 %924
    %926 = vrot.lane.b32.xlu0 %v92, 127
    %v927 = vpop.permute.xlu0 %926
    %928 = vrot.lane.b32.xlu0 %v96, 127
    %v929 = vpop.permute.xlu0 %928
    %vm930 = vcmp.lt.s32.totalorder %v162, 127
    %v931 = vsel %vm930, %v899, %v915
    %v932 = vsel %vm930, %v901, %v917
    %v933 = vsel %vm930, %v903, %v919
    %v934 = vsel %vm930, %v905, %v921
    %v935 = vsel %vm930, %v907, %v923
    %v936 = vsel %vm930, %v909, %v925
    %v937 = vsel %vm930, %v911, %v927
    %v938 = vsel %vm930, %v913, %v929
    %v939 = vsel %vm930, %v883, %v899
    %v940 = vsel %vm930, %v885, %v901
    %v941 = vsel %vm930, %v887, %v903
    %v942 = vsel %vm930, %v889, %v905
    %v943 = vsel %vm930, %v891, %v907
    %v944 = vsel %vm930, %v893, %v909
    %v945 = vsel %vm930, %v895, %v911
    %v946 = vsel %vm930, %v897, %v913
    %v947 = vsel %vm930, %v867, %v883
    %v948 = vsel %vm930, %v869, %v885
    %v949 = vsel %vm930, %v871, %v887
    %v950 = vsel %vm930, %v873, %v889
    %v951 = vsel %vm930, %v875, %v891
    %v952 = vsel %vm930, %v877, %v893
    %v953 = vsel %vm930, %v879, %v895
    %v954 = vsel %vm930, %v881, %v897
    %v955 = vsel %vm930, %v915, %v867
    %v956 = vsel %vm930, %v917, %v869
    %v957 = vsel %vm930, %v919, %v871
    %v958 = vsel %vm930, %v921, %v873
    %v959 = vsel %vm930, %v923, %v875
    %v960 = vsel %vm930, %v925, %v877
    %v961 = vsel %vm930, %v927, %v879
    %v962 = vsel %vm930, %v929, %v881
    %s963 = scalar_lea.vmem %s0, 20
    %v964 = vld [vmem:[%s963] sm:$0xf]
    %v966 = vlaneseq
    %v967 = vshrl.u32 %v966, 7
    %v968 = vsub.s32 0, %v967
    %v969 = vrot.slane %v964, %v968
    %v970 = vlaneseq
    %v971 = vshrl.u32 %v970, 7
    %v972 = vsub.s32 1, %v971
    %v973 = vrot.slane %v964, %v972
    %v974 = vlaneseq
    %v975 = vshrl.u32 %v974, 7
    %v976 = vsub.s32 2, %v975
    %v977 = vrot.slane %v964, %v976
    %v978 = vlaneseq
    %v979 = vshrl.u32 %v978, 7
    %v980 = vsub.s32 3, %v979
    %v981 = vrot.slane %v964, %v980
    %v986 = vmul.f32 %v947, %v969
    %v987 = vmul.f32 %v939, %v973
    %v988 = vmul.f32 %v931, %v977
    %v989 = vmul.f32 %v955, %v981
    %v990 = vmul.f32 %v948, %v969
    %v991 = vmul.f32 %v940, %v973
    %v992 = vmul.f32 %v932, %v977
    %v993 = vmul.f32 %v956, %v981
    %v994 = vmul.f32 %v949, %v969
    %v995 = vmul.f32 %v941, %v973
    %v996 = vmul.f32 %v933, %v977
    %v997 = vmul.f32 %v957, %v981
    %v998 = vmul.f32 %v950, %v969
    %v999 = vmul.f32 %v942, %v973
    %v1000 = vmul.f32 %v934, %v977
    %v1001 = vmul.f32 %v958, %v981
    %v1002 = vmul.f32 %v951, %v969
    %v1003 = vmul.f32 %v943, %v973
    %v1004 = vmul.f32 %v935, %v977
    %v1005 = vmul.f32 %v959, %v981
    %v1006 = vmul.f32 %v952, %v969
    %v1007 = vmul.f32 %v944, %v973
    %v1008 = vmul.f32 %v936, %v977
    %v1009 = vmul.f32 %v960, %v981
    %v1010 = vmul.f32 %v953, %v969
    %v1011 = vmul.f32 %v945, %v973
    %v1012 = vmul.f32 %v937, %v977
    %v1013 = vmul.f32 %v961, %v981
    %v1014 = vmul.f32 %v954, %v969
    %v1015 = vmul.f32 %v946, %v973
    %v1016 = vmul.f32 %v938, %v977
    %v1017 = vmul.f32 %v962, %v981
    %1018 = vst [vmem:[#allocation2 + $0x500] sm:$0xff] %v986
    %1019 = vst [vmem:[#allocation2 + $0x508] sm:$0xff] %v987
    %1020 = vst [vmem:[#allocation2 + $0x510] sm:$0xff] %v988
    %1021 = vst [vmem:[#allocation2 + $0x518] sm:$0xff] %v989
    %1022 = vst [vmem:[#allocation2 + $0x520] sm:$0xff] %v990
    %1023 = vst [vmem:[#allocation2 + $0x528] sm:$0xff] %v991
    %1024 = vst [vmem:[#allocation2 + $0x530] sm:$0xff] %v992
    %1025 = vst [vmem:[#allocation2 + $0x538] sm:$0xff] %v993
    %1026 = vst [vmem:[#allocation2 + $0x540] sm:$0xff] %v994
    %1027 = vst [vmem:[#allocation2 + $0x548] sm:$0xff] %v995
    %1028 = vst [vmem:[#allocation2 + $0x550] sm:$0xff] %v996
    %1029 = vst [vmem:[#allocation2 + $0x558] sm:$0xff] %v997
    %1030 = vst [vmem:[#allocation2 + $0x560] sm:$0xff] %v998
    %1031 = vst [vmem:[#allocation2 + $0x568] sm:$0xff] %v999
    %1032 = vst [vmem:[#allocation2 + $0x570] sm:$0xff] %v1000
    %1033 = vst [vmem:[#allocation2 + $0x578] sm:$0xff] %v1001
    %1034 = vst [vmem:[#allocation2 + $0x580] sm:$0xff] %v1002
    %1035 = vst [vmem:[#allocation2 + $0x588] sm:$0xff] %v1003
    %1036 = vst [vmem:[#allocation2 + $0x590] sm:$0xff] %v1004
    %1037 = vst [vmem:[#allocation2 + $0x598] sm:$0xff] %v1005
    %1038 = vst [vmem:[#allocation2 + $0x5a0] sm:$0xff] %v1006
    %1039 = vst [vmem:[#allocation2 + $0x5a8] sm:$0xff] %v1007
    %1040 = vst [vmem:[#allocation2 + $0x5b0] sm:$0xff] %v1008
    %1041 = vst [vmem:[#allocation2 + $0x5b8] sm:$0xff] %v1009
    %1042 = vst [vmem:[#allocation2 + $0x5c0] sm:$0xff] %v1010
    %1043 = vst [vmem:[#allocation2 + $0x5c8] sm:$0xff] %v1011
    %1044 = vst [vmem:[#allocation2 + $0x5d0] sm:$0xff] %v1012
    %1045 = vst [vmem:[#allocation2 + $0x5d8] sm:$0xff] %v1013
    %1046 = vst [vmem:[#allocation2 + $0x5e0] sm:$0xff] %v1014
    %1047 = vst [vmem:[#allocation2 + $0x5e8] sm:$0xff] %v1015
    %1048 = vst [vmem:[#allocation2 + $0x5f0] sm:$0xff] %v1016
    %1049 = vst [vmem:[#allocation2 + $0x5f8] sm:$0xff] %v1017
    %1050 = vrot.lane.b32.xlu0 %v65, 113
    %v1051 = vpop.permute.xlu0 %1050
    %1052 = vrot.lane.b32.xlu0 %v69, 113
    %v1053 = vpop.permute.xlu0 %1052
    %1054 = vrot.lane.b32.xlu0 %v73, 113
    %v1055 = vpop.permute.xlu0 %1054
    %1056 = vrot.lane.b32.xlu0 %v77, 113
    %v1057 = vpop.permute.xlu0 %1056
    %1058 = vrot.lane.b32.xlu0 %v81, 113
    %v1059 = vpop.permute.xlu0 %1058
    %1060 = vrot.lane.b32.xlu0 %v85, 113
    %v1061 = vpop.permute.xlu0 %1060
    %1062 = vrot.lane.b32.xlu0 %v89, 113
    %v1063 = vpop.permute.xlu0 %1062
    %1064 = vrot.lane.b32.xlu0 %v93, 113
    %v1065 = vpop.permute.xlu0 %1064
    %1066 = vrot.lane.b32.xlu0 %v66, 113
    %v1067 = vpop.permute.xlu0 %1066
    %1068 = vrot.lane.b32.xlu0 %v70, 113
    %v1069 = vpop.permute.xlu0 %1068
    %1070 = vrot.lane.b32.xlu0 %v74, 113
    %v1071 = vpop.permute.xlu0 %1070
    %1072 = vrot.lane.b32.xlu0 %v78, 113
    %v1073 = vpop.permute.xlu0 %1072
    %1074 = vrot.lane.b32.xlu0 %v82, 113
    %v1075 = vpop.permute.xlu0 %1074
    %1076 = vrot.lane.b32.xlu0 %v86, 113
    %v1077 = vpop.permute.xlu0 %1076
    %1078 = vrot.lane.b32.xlu0 %v90, 113
    %v1079 = vpop.permute.xlu0 %1078
    %1080 = vrot.lane.b32.xlu0 %v94, 113
    %v1081 = vpop.permute.xlu0 %1080
    %1082 = vrot.lane.b32.xlu0 %v67, 113
    %v1083 = vpop.permute.xlu0 %1082
    %1084 = vrot.lane.b32.xlu0 %v71, 113
    %v1085 = vpop.permute.xlu0 %1084
    %1086 = vrot.lane.b32.xlu0 %v75, 113
    %v1087 = vpop.permute.xlu0 %1086
    %1088 = vrot.lane.b32.xlu0 %v79, 113
    %v1089 = vpop.permute.xlu0 %1088
    %1090 = vrot.lane.b32.xlu0 %v83, 113
    %v1091 = vpop.permute.xlu0 %1090
    %1092 = vrot.lane.b32.xlu0 %v87, 113
    %v1093 = vpop.permute.xlu0 %1092
    %1094 = vrot.lane.b32.xlu0 %v91, 113
    %v1095 = vpop.permute.xlu0 %1094
    %1096 = vrot.lane.b32.xlu0 %v95, 113
    %v1097 = vpop.permute.xlu0 %1096
    %1098 = vrot.lane.b32.xlu0 %v68, 113
    %v1099 = vpop.permute.xlu0 %1098
    %1100 = vrot.lane.b32.xlu0 %v72, 113
    %v1101 = vpop.permute.xlu0 %1100
    %1102 = vrot.lane.b32.xlu0 %v76, 113
    %v1103 = vpop.permute.xlu0 %1102
    %1104 = vrot.lane.b32.xlu0 %v80, 113
    %v1105 = vpop.permute.xlu0 %1104
    %1106 = vrot.lane.b32.xlu0 %v84, 113
    %v1107 = vpop.permute.xlu0 %1106
    %1108 = vrot.lane.b32.xlu0 %v88, 113
    %v1109 = vpop.permute.xlu0 %1108
    %1110 = vrot.lane.b32.xlu0 %v92, 113
    %v1111 = vpop.permute.xlu0 %1110
    %1112 = vrot.lane.b32.xlu0 %v96, 113
    %v1113 = vpop.permute.xlu0 %1112
    %vm1114 = vcmp.lt.s32.totalorder %v162, 113
    %v1115 = vsel %vm1114, %v1083, %v1099
    %v1116 = vsel %vm1114, %v1085, %v1101
    %v1117 = vsel %vm1114, %v1087, %v1103
    %v1118 = vsel %vm1114, %v1089, %v1105
    %v1119 = vsel %vm1114, %v1091, %v1107
    %v1120 = vsel %vm1114, %v1093, %v1109
    %v1121 = vsel %vm1114, %v1095, %v1111
    %v1122 = vsel %vm1114, %v1097, %v1113
    %v1123 = vsel %vm1114, %v1067, %v1083
    %v1124 = vsel %vm1114, %v1069, %v1085
    %v1125 = vsel %vm1114, %v1071, %v1087
    %v1126 = vsel %vm1114, %v1073, %v1089
    %v1127 = vsel %vm1114, %v1075, %v1091
    %v1128 = vsel %vm1114, %v1077, %v1093
    %v1129 = vsel %vm1114, %v1079, %v1095
    %v1130 = vsel %vm1114, %v1081, %v1097
    %v1131 = vsel %vm1114, %v1051, %v1067
    %v1132 = vsel %vm1114, %v1053, %v1069
    %v1133 = vsel %vm1114, %v1055, %v1071
    %v1134 = vsel %vm1114, %v1057, %v1073
    %v1135 = vsel %vm1114, %v1059, %v1075
    %v1136 = vsel %vm1114, %v1061, %v1077
    %v1137 = vsel %vm1114, %v1063, %v1079
    %v1138 = vsel %vm1114, %v1065, %v1081
    %v1139 = vsel %vm1114, %v1099, %v1051
    %v1140 = vsel %vm1114, %v1101, %v1053
    %v1141 = vsel %vm1114, %v1103, %v1055
    %v1142 = vsel %vm1114, %v1105, %v1057
    %v1143 = vsel %vm1114, %v1107, %v1059
    %v1144 = vsel %vm1114, %v1109, %v1061
    %v1145 = vsel %vm1114, %v1111, %v1063
    %v1146 = vsel %vm1114, %v1113, %v1065
    %s1147 = scalar_lea.vmem %s0, 24
    %v1148 = vld [vmem:[%s1147] sm:$0xf]
    %v1150 = vlaneseq
    %v1151 = vshrl.u32 %v1150, 7
    %v1152 = vsub.s32 0, %v1151
    %v1153 = vrot.slane %v1148, %v1152
    %v1154 = vlaneseq
    %v1155 = vshrl.u32 %v1154, 7
    %v1156 = vsub.s32 1, %v1155
    %v1157 = vrot.slane %v1148, %v1156
    %v1158 = vlaneseq
    %v1159 = vshrl.u32 %v1158, 7
    %v1160 = vsub.s32 2, %v1159
    %v1161 = vrot.slane %v1148, %v1160
    %v1162 = vlaneseq
    %v1163 = vshrl.u32 %v1162, 7
    %v1164 = vsub.s32 3, %v1163
    %v1165 = vrot.slane %v1148, %v1164
    %v1170 = vmul.f32 %v1131, %v1153
    %v1171 = vmul.f32 %v1123, %v1157
    %v1172 = vmul.f32 %v1115, %v1161
    %v1173 = vmul.f32 %v1139, %v1165
    %v1174 = vmul.f32 %v1132, %v1153
    %v1175 = vmul.f32 %v1124, %v1157
    %v1176 = vmul.f32 %v1116, %v1161
    %v1177 = vmul.f32 %v1140, %v1165
    %v1178 = vmul.f32 %v1133, %v1153
    %v1179 = vmul.f32 %v1125, %v1157
    %v1180 = vmul.f32 %v1117, %v1161
    %v1181 = vmul.f32 %v1141, %v1165
    %v1182 = vmul.f32 %v1134, %v1153
    %v1183 = vmul.f32 %v1126, %v1157
    %v1184 = vmul.f32 %v1118, %v1161
    %v1185 = vmul.f32 %v1142, %v1165
    %v1186 = vmul.f32 %v1135, %v1153
    %v1187 = vmul.f32 %v1127, %v1157
    %v1188 = vmul.f32 %v1119, %v1161
    %v1189 = vmul.f32 %v1143, %v1165
    %v1190 = vmul.f32 %v1136, %v1153
    %v1191 = vmul.f32 %v1128, %v1157
    %v1192 = vmul.f32 %v1120, %v1161
    %v1193 = vmul.f32 %v1144, %v1165
    %v1194 = vmul.f32 %v1137, %v1153
    %v1195 = vmul.f32 %v1129, %v1157
    %v1196 = vmul.f32 %v1121, %v1161
    %v1197 = vmul.f32 %v1145, %v1165
    %v1198 = vmul.f32 %v1138, %v1153
    %v1199 = vmul.f32 %v1130, %v1157
    %v1200 = vmul.f32 %v1122, %v1161
    %v1201 = vmul.f32 %v1146, %v1165
    %1202 = vst [vmem:[#allocation2 + $0x600] sm:$0xff] %v1170
    %1203 = vst [vmem:[#allocation2 + $0x608] sm:$0xff] %v1171
    %1204 = vst [vmem:[#allocation2 + $0x610] sm:$0xff] %v1172
    %1205 = vst [vmem:[#allocation2 + $0x618] sm:$0xff] %v1173
    %1206 = vst [vmem:[#allocation2 + $0x620] sm:$0xff] %v1174
    %1207 = vst [vmem:[#allocation2 + $0x628] sm:$0xff] %v1175
    %1208 = vst [vmem:[#allocation2 + $0x630] sm:$0xff] %v1176
    %1209 = vst [vmem:[#allocation2 + $0x638] sm:$0xff] %v1177
    %1210 = vst [vmem:[#allocation2 + $0x640] sm:$0xff] %v1178
    %1211 = vst [vmem:[#allocation2 + $0x648] sm:$0xff] %v1179
    %1212 = vst [vmem:[#allocation2 + $0x650] sm:$0xff] %v1180
    %1213 = vst [vmem:[#allocation2 + $0x658] sm:$0xff] %v1181
    %1214 = vst [vmem:[#allocation2 + $0x660] sm:$0xff] %v1182
    %1215 = vst [vmem:[#allocation2 + $0x668] sm:$0xff] %v1183
    %1216 = vst [vmem:[#allocation2 + $0x670] sm:$0xff] %v1184
    %1217 = vst [vmem:[#allocation2 + $0x678] sm:$0xff] %v1185
    %1218 = vst [vmem:[#allocation2 + $0x680] sm:$0xff] %v1186
    %1219 = vst [vmem:[#allocation2 + $0x688] sm:$0xff] %v1187
    %1220 = vst [vmem:[#allocation2 + $0x690] sm:$0xff] %v1188
    %1221 = vst [vmem:[#allocation2 + $0x698] sm:$0xff] %v1189
    %1222 = vst [vmem:[#allocation2 + $0x6a0] sm:$0xff] %v1190
    %1223 = vst [vmem:[#allocation2 + $0x6a8] sm:$0xff] %v1191
    %1224 = vst [vmem:[#allocation2 + $0x6b0] sm:$0xff] %v1192
    %1225 = vst [vmem:[#allocation2 + $0x6b8] sm:$0xff] %v1193
    %1226 = vst [vmem:[#allocation2 + $0x6c0] sm:$0xff] %v1194
    %1227 = vst [vmem:[#allocation2 + $0x6c8] sm:$0xff] %v1195
    %1228 = vst [vmem:[#allocation2 + $0x6d0] sm:$0xff] %v1196
    %1229 = vst [vmem:[#allocation2 + $0x6d8] sm:$0xff] %v1197
    %1230 = vst [vmem:[#allocation2 + $0x6e0] sm:$0xff] %v1198
    %1231 = vst [vmem:[#allocation2 + $0x6e8] sm:$0xff] %v1199
    %1232 = vst [vmem:[#allocation2 + $0x6f0] sm:$0xff] %v1200
    %1233 = vst [vmem:[#allocation2 + $0x6f8] sm:$0xff] %v1201
    %1234 = vrot.lane.b32.xlu0 %v65, 112
    %v1235 = vpop.permute.xlu0 %1234
    %1236 = vrot.lane.b32.xlu0 %v69, 112
    %v1237 = vpop.permute.xlu0 %1236
    %1238 = vrot.lane.b32.xlu0 %v73, 112
    %v1239 = vpop.permute.xlu0 %1238
    %1240 = vrot.lane.b32.xlu0 %v77, 112
    %v1241 = vpop.permute.xlu0 %1240
    %1242 = vrot.lane.b32.xlu0 %v81, 112
    %v1243 = vpop.permute.xlu0 %1242
    %1244 = vrot.lane.b32.xlu0 %v85, 112
    %v1245 = vpop.permute.xlu0 %1244
    %1246 = vrot.lane.b32.xlu0 %v89, 112
    %v1247 = vpop.permute.xlu0 %1246
    %1248 = vrot.lane.b32.xlu0 %v93, 112
    %v1249 = vpop.permute.xlu0 %1248
    %1250 = vrot.lane.b32.xlu0 %v66, 112
    %v1251 = vpop.permute.xlu0 %1250
    %1252 = vrot.lane.b32.xlu0 %v70, 112
    %v1253 = vpop.permute.xlu0 %1252
    %1254 = vrot.lane.b32.xlu0 %v74, 112
    %v1255 = vpop.permute.xlu0 %1254
    %1256 = vrot.lane.b32.xlu0 %v78, 112
    %v1257 = vpop.permute.xlu0 %1256
    %1258 = vrot.lane.b32.xlu0 %v82, 112
    %v1259 = vpop.permute.xlu0 %1258
    %1260 = vrot.lane.b32.xlu0 %v86, 112
    %v1261 = vpop.permute.xlu0 %1260
    %1262 = vrot.lane.b32.xlu0 %v90, 112
    %v1263 = vpop.permute.xlu0 %1262
    %1264 = vrot.lane.b32.xlu0 %v94, 112
    %v1265 = vpop.permute.xlu0 %1264
    %1266 = vrot.lane.b32.xlu0 %v67, 112
    %v1267 = vpop.permute.xlu0 %1266
    %1268 = vrot.lane.b32.xlu0 %v71, 112
    %v1269 = vpop.permute.xlu0 %1268
    %1270 = vrot.lane.b32.xlu0 %v75, 112
    %v1271 = vpop.permute.xlu0 %1270
    %1272 = vrot.lane.b32.xlu0 %v79, 112
    %v1273 = vpop.permute.xlu0 %1272
    %1274 = vrot.lane.b32.xlu0 %v83, 112
    %v1275 = vpop.permute.xlu0 %1274
    %1276 = vrot.lane.b32.xlu0 %v87, 112
    %v1277 = vpop.permute.xlu0 %1276
    %1278 = vrot.lane.b32.xlu0 %v91, 112
    %v1279 = vpop.permute.xlu0 %1278
    %1280 = vrot.lane.b32.xlu0 %v95, 112
    %v1281 = vpop.permute.xlu0 %1280
    %1282 = vrot.lane.b32.xlu0 %v68, 112
    %v1283 = vpop.permute.xlu0 %1282
    %1284 = vrot.lane.b32.xlu0 %v72, 112
    %v1285 = vpop.permute.xlu0 %1284
    %1286 = vrot.lane.b32.xlu0 %v76, 112
    %v1287 = vpop.permute.xlu0 %1286
    %1288 = vrot.lane.b32.xlu0 %v80, 112
    %v1289 = vpop.permute.xlu0 %1288
    %1290 = vrot.lane.b32.xlu0 %v84, 112
    %v1291 = vpop.permute.xlu0 %1290
    %1292 = vrot.lane.b32.xlu0 %v88, 112
    %v1293 = vpop.permute.xlu0 %1292
    %1294 = vrot.lane.b32.xlu0 %v92, 112
    %v1295 = vpop.permute.xlu0 %1294
    %1296 = vrot.lane.b32.xlu0 %v96, 112
    %v1297 = vpop.permute.xlu0 %1296
    %vm1298 = vcmp.lt.s32.totalorder %v162, 112
    %v1299 = vsel %vm1298, %v1267, %v1283
    %v1300 = vsel %vm1298, %v1269, %v1285
    %v1301 = vsel %vm1298, %v1271, %v1287
    %v1302 = vsel %vm1298, %v1273, %v1289
    %v1303 = vsel %vm1298, %v1275, %v1291
    %v1304 = vsel %vm1298, %v1277, %v1293
    %v1305 = vsel %vm1298, %v1279, %v1295
    %v1306 = vsel %vm1298, %v1281, %v1297
    %v1307 = vsel %vm1298, %v1251, %v1267
    %v1308 = vsel %vm1298, %v1253, %v1269
    %v1309 = vsel %vm1298, %v1255, %v1271
    %v1310 = vsel %vm1298, %v1257, %v1273
    %v1311 = vsel %vm1298, %v1259, %v1275
    %v1312 = vsel %vm1298, %v1261, %v1277
    %v1313 = vsel %vm1298, %v1263, %v1279
    %v1314 = vsel %vm1298, %v1265, %v1281
    %v1315 = vsel %vm1298, %v1235, %v1251
    %v1316 = vsel %vm1298, %v1237, %v1253
    %v1317 = vsel %vm1298, %v1239, %v1255
    %v1318 = vsel %vm1298, %v1241, %v1257
    %v1319 = vsel %vm1298, %v1243, %v1259
    %v1320 = vsel %vm1298, %v1245, %v1261
    %v1321 = vsel %vm1298, %v1247, %v1263
    %v1322 = vsel %vm1298, %v1249, %v1265
    %v1323 = vsel %vm1298, %v1283, %v1235
    %v1324 = vsel %vm1298, %v1285, %v1237
    %v1325 = vsel %vm1298, %v1287, %v1239
    %v1326 = vsel %vm1298, %v1289, %v1241
    %v1327 = vsel %vm1298, %v1291, %v1243
    %v1328 = vsel %vm1298, %v1293, %v1245
    %v1329 = vsel %vm1298, %v1295, %v1247
    %v1330 = vsel %vm1298, %v1297, %v1249
    %s1331 = scalar_lea.vmem %s0, 28
    %v1332 = vld [vmem:[%s1331] sm:$0xf]
    %v1334 = vlaneseq
    %v1335 = vshrl.u32 %v1334, 7
    %v1336 = vsub.s32 0, %v1335
    %v1337 = vrot.slane %v1332, %v1336
    %v1338 = vlaneseq
    %v1339 = vshrl.u32 %v1338, 7
    %v1340 = vsub.s32 1, %v1339
    %v1341 = vrot.slane %v1332, %v1340
    %v1342 = vlaneseq
    %v1343 = vshrl.u32 %v1342, 7
    %v1344 = vsub.s32 2, %v1343
    %v1345 = vrot.slane %v1332, %v1344
    %v1346 = vlaneseq
    %v1347 = vshrl.u32 %v1346, 7
    %v1348 = vsub.s32 3, %v1347
    %v1349 = vrot.slane %v1332, %v1348
    %v1354 = vmul.f32 %v1315, %v1337
    %v1355 = vmul.f32 %v1307, %v1341
    %v1356 = vmul.f32 %v1299, %v1345
    %v1357 = vmul.f32 %v1323, %v1349
    %v1358 = vmul.f32 %v1316, %v1337
    %v1359 = vmul.f32 %v1308, %v1341
    %v1360 = vmul.f32 %v1300, %v1345
    %v1361 = vmul.f32 %v1324, %v1349
    %v1362 = vmul.f32 %v1317, %v1337
    %v1363 = vmul.f32 %v1309, %v1341
    %v1364 = vmul.f32 %v1301, %v1345
    %v1365 = vmul.f32 %v1325, %v1349
    %v1366 = vmul.f32 %v1318, %v1337
    %v1367 = vmul.f32 %v1310, %v1341
    %v1368 = vmul.f32 %v1302, %v1345
    %v1369 = vmul.f32 %v1326, %v1349
    %v1370 = vmul.f32 %v1319, %v1337
    %v1371 = vmul.f32 %v1311, %v1341
    %v1372 = vmul.f32 %v1303, %v1345
    %v1373 = vmul.f32 %v1327, %v1349
    %v1374 = vmul.f32 %v1320, %v1337
    %v1375 = vmul.f32 %v1312, %v1341
    %v1376 = vmul.f32 %v1304, %v1345
    %v1377 = vmul.f32 %v1328, %v1349
    %v1378 = vmul.f32 %v1321, %v1337
    %v1379 = vmul.f32 %v1313, %v1341
    %v1380 = vmul.f32 %v1305, %v1345
    %v1381 = vmul.f32 %v1329, %v1349
    %v1382 = vmul.f32 %v1322, %v1337
    %v1383 = vmul.f32 %v1314, %v1341
    %v1384 = vmul.f32 %v1306, %v1345
    %v1385 = vmul.f32 %v1330, %v1349
    %1386 = vst [vmem:[#allocation2 + $0x700] sm:$0xff] %v1354
    %1387 = vst [vmem:[#allocation2 + $0x708] sm:$0xff] %v1355
    %1388 = vst [vmem:[#allocation2 + $0x710] sm:$0xff] %v1356
    %1389 = vst [vmem:[#allocation2 + $0x718] sm:$0xff] %v1357
    %1390 = vst [vmem:[#allocation2 + $0x720] sm:$0xff] %v1358
    %1391 = vst [vmem:[#allocation2 + $0x728] sm:$0xff] %v1359
    %1392 = vst [vmem:[#allocation2 + $0x730] sm:$0xff] %v1360
    %1393 = vst [vmem:[#allocation2 + $0x738] sm:$0xff] %v1361
    %1394 = vst [vmem:[#allocation2 + $0x740] sm:$0xff] %v1362
    %1395 = vst [vmem:[#allocation2 + $0x748] sm:$0xff] %v1363
    %1396 = vst [vmem:[#allocation2 + $0x750] sm:$0xff] %v1364
    %1397 = vst [vmem:[#allocation2 + $0x758] sm:$0xff] %v1365
    %1398 = vst [vmem:[#allocation2 + $0x760] sm:$0xff] %v1366
    %1399 = vst [vmem:[#allocation2 + $0x768] sm:$0xff] %v1367
    %1400 = vst [vmem:[#allocation2 + $0x770] sm:$0xff] %v1368
    %1401 = vst [vmem:[#allocation2 + $0x778] sm:$0xff] %v1369
    %1402 = vst [vmem:[#allocation2 + $0x780] sm:$0xff] %v1370
    %1403 = vst [vmem:[#allocation2 + $0x788] sm:$0xff] %v1371
    %1404 = vst [vmem:[#allocation2 + $0x790] sm:$0xff] %v1372
    %1405 = vst [vmem:[#allocation2 + $0x798] sm:$0xff] %v1373
    %1406 = vst [vmem:[#allocation2 + $0x7a0] sm:$0xff] %v1374
    %1407 = vst [vmem:[#allocation2 + $0x7a8] sm:$0xff] %v1375
    %1408 = vst [vmem:[#allocation2 + $0x7b0] sm:$0xff] %v1376
    %1409 = vst [vmem:[#allocation2 + $0x7b8] sm:$0xff] %v1377
    %1410 = vst [vmem:[#allocation2 + $0x7c0] sm:$0xff] %v1378
    %1411 = vst [vmem:[#allocation2 + $0x7c8] sm:$0xff] %v1379
    %1412 = vst [vmem:[#allocation2 + $0x7d0] sm:$0xff] %v1380
    %1413 = vst [vmem:[#allocation2 + $0x7d8] sm:$0xff] %v1381
    %1414 = vst [vmem:[#allocation2 + $0x7e0] sm:$0xff] %v1382
    %1415 = vst [vmem:[#allocation2 + $0x7e8] sm:$0xff] %v1383
    %1416 = vst [vmem:[#allocation2 + $0x7f0] sm:$0xff] %v1384
    %1417 = vst [vmem:[#allocation2 + $0x7f8] sm:$0xff] %v1385
    %1418 = vrot.lane.b32.xlu0 %v65, 111
    %v1419 = vpop.permute.xlu0 %1418
    %1420 = vrot.lane.b32.xlu0 %v69, 111
    %v1421 = vpop.permute.xlu0 %1420
    %1422 = vrot.lane.b32.xlu0 %v73, 111
    %v1423 = vpop.permute.xlu0 %1422
    %1424 = vrot.lane.b32.xlu0 %v77, 111
    %v1425 = vpop.permute.xlu0 %1424
    %1426 = vrot.lane.b32.xlu0 %v81, 111
    %v1427 = vpop.permute.xlu0 %1426
    %1428 = vrot.lane.b32.xlu0 %v85, 111
    %v1429 = vpop.permute.xlu0 %1428
    %1430 = vrot.lane.b32.xlu0 %v89, 111
    %v1431 = vpop.permute.xlu0 %1430
    %1432 = vrot.lane.b32.xlu0 %v93, 111
    %v1433 = vpop.permute.xlu0 %1432
    %1434 = vrot.lane.b32.xlu0 %v66, 111
    %v1435 = vpop.permute.xlu0 %1434
    %1436 = vrot.lane.b32.xlu0 %v70, 111
    %v1437 = vpop.permute.xlu0 %1436
    %1438 = vrot.lane.b32.xlu0 %v74, 111
    %v1439 = vpop.permute.xlu0 %1438
    %1440 = vrot.lane.b32.xlu0 %v78, 111
    %v1441 = vpop.permute.xlu0 %1440
    %1442 = vrot.lane.b32.xlu0 %v82, 111
    %v1443 = vpop.permute.xlu0 %1442
    %1444 = vrot.lane.b32.xlu0 %v86, 111
    %v1445 = vpop.permute.xlu0 %1444
    %1446 = vrot.lane.b32.xlu0 %v90, 111
    %v1447 = vpop.permute.xlu0 %1446
    %1448 = vrot.lane.b32.xlu0 %v94, 111
    %v1449 = vpop.permute.xlu0 %1448
    %1450 = vrot.lane.b32.xlu0 %v67, 111
    %v1451 = vpop.permute.xlu0 %1450
    %1452 = vrot.lane.b32.xlu0 %v71, 111
    %v1453 = vpop.permute.xlu0 %1452
    %1454 = vrot.lane.b32.xlu0 %v75, 111
    %v1455 = vpop.permute.xlu0 %1454
    %1456 = vrot.lane.b32.xlu0 %v79, 111
    %v1457 = vpop.permute.xlu0 %1456
    %1458 = vrot.lane.b32.xlu0 %v83, 111
    %v1459 = vpop.permute.xlu0 %1458
    %1460 = vrot.lane.b32.xlu0 %v87, 111
    %v1461 = vpop.permute.xlu0 %1460
    %1462 = vrot.lane.b32.xlu0 %v91, 111
    %v1463 = vpop.permute.xlu0 %1462
    %1464 = vrot.lane.b32.xlu0 %v95, 111
    %v1465 = vpop.permute.xlu0 %1464
    %1466 = vrot.lane.b32.xlu0 %v68, 111
    %v1467 = vpop.permute.xlu0 %1466
    %1468 = vrot.lane.b32.xlu0 %v72, 111
    %v1469 = vpop.permute.xlu0 %1468
    %1470 = vrot.lane.b32.xlu0 %v76, 111
    %v1471 = vpop.permute.xlu0 %1470
    %1472 = vrot.lane.b32.xlu0 %v80, 111
    %v1473 = vpop.permute.xlu0 %1472
    %1474 = vrot.lane.b32.xlu0 %v84, 111
    %v1475 = vpop.permute.xlu0 %1474
    %1476 = vrot.lane.b32.xlu0 %v88, 111
    %v1477 = vpop.permute.xlu0 %1476
    %1478 = vrot.lane.b32.xlu0 %v92, 111
    %v1479 = vpop.permute.xlu0 %1478
    %1480 = vrot.lane.b32.xlu0 %v96, 111
    %v1481 = vpop.permute.xlu0 %1480
    %vm1482 = vcmp.lt.s32.totalorder %v162, 111
    %v1483 = vsel %vm1482, %v1451, %v1467
    %v1484 = vsel %vm1482, %v1453, %v1469
    %v1485 = vsel %vm1482, %v1455, %v1471
    %v1486 = vsel %vm1482, %v1457, %v1473
    %v1487 = vsel %vm1482, %v1459, %v1475
    %v1488 = vsel %vm1482, %v1461, %v1477
    %v1489 = vsel %vm1482, %v1463, %v1479
    %v1490 = vsel %vm1482, %v1465, %v1481
    %v1491 = vsel %vm1482, %v1435, %v1451
    %v1492 = vsel %vm1482, %v1437, %v1453
    %v1493 = vsel %vm1482, %v1439, %v1455
    %v1494 = vsel %vm1482, %v1441, %v1457
    %v1495 = vsel %vm1482, %v1443, %v1459
    %v1496 = vsel %vm1482, %v1445, %v1461
    %v1497 = vsel %vm1482, %v1447, %v1463
    %v1498 = vsel %vm1482, %v1449, %v1465
    %v1499 = vsel %vm1482, %v1419, %v1435
    %v1500 = vsel %vm1482, %v1421, %v1437
    %v1501 = vsel %vm1482, %v1423, %v1439
    %v1502 = vsel %vm1482, %v1425, %v1441
    %v1503 = vsel %vm1482, %v1427, %v1443
    %v1504 = vsel %vm1482, %v1429, %v1445
    %v1505 = vsel %vm1482, %v1431, %v1447
    %v1506 = vsel %vm1482, %v1433, %v1449
    %v1507 = vsel %vm1482, %v1467, %v1419
    %v1508 = vsel %vm1482, %v1469, %v1421
    %v1509 = vsel %vm1482, %v1471, %v1423
    %v1510 = vsel %vm1482, %v1473, %v1425
    %v1511 = vsel %vm1482, %v1475, %v1427
    %v1512 = vsel %vm1482, %v1477, %v1429
    %v1513 = vsel %vm1482, %v1479, %v1431
    %v1514 = vsel %vm1482, %v1481, %v1433
    %s1515 = scalar_lea.vmem %s0, 32
    %v1516 = vld [vmem:[%s1515] sm:$0xf]
    %v1518 = vlaneseq
    %v1519 = vshrl.u32 %v1518, 7
    %v1520 = vsub.s32 0, %v1519
    %v1521 = vrot.slane %v1516, %v1520
    %v1522 = vlaneseq
    %v1523 = vshrl.u32 %v1522, 7
    %v1524 = vsub.s32 1, %v1523
    %v1525 = vrot.slane %v1516, %v1524
    %v1526 = vlaneseq
    %v1527 = vshrl.u32 %v1526, 7
    %v1528 = vsub.s32 2, %v1527
    %v1529 = vrot.slane %v1516, %v1528
    %v1530 = vlaneseq
    %v1531 = vshrl.u32 %v1530, 7
    %v1532 = vsub.s32 3, %v1531
    %v1533 = vrot.slane %v1516, %v1532
    %v1538 = vmul.f32 %v1499, %v1521
    %v1539 = vmul.f32 %v1491, %v1525
    %v1540 = vmul.f32 %v1483, %v1529
    %v1541 = vmul.f32 %v1507, %v1533
    %v1542 = vmul.f32 %v1500, %v1521
    %v1543 = vmul.f32 %v1492, %v1525
    %v1544 = vmul.f32 %v1484, %v1529
    %v1545 = vmul.f32 %v1508, %v1533
    %v1546 = vmul.f32 %v1501, %v1521
    %v1547 = vmul.f32 %v1493, %v1525
    %v1548 = vmul.f32 %v1485, %v1529
    %v1549 = vmul.f32 %v1509, %v1533
    %v1550 = vmul.f32 %v1502, %v1521
    %v1551 = vmul.f32 %v1494, %v1525
    %v1552 = vmul.f32 %v1486, %v1529
    %v1553 = vmul.f32 %v1510, %v1533
    %v1554 = vmul.f32 %v1503, %v1521
    %v1555 = vmul.f32 %v1495, %v1525
    %v1556 = vmul.f32 %v1487, %v1529
    %v1557 = vmul.f32 %v1511, %v1533
    %v1558 = vmul.f32 %v1504, %v1521
    %v1559 = vmul.f32 %v1496, %v1525
    %v1560 = vmul.f32 %v1488, %v1529
    %v1561 = vmul.f32 %v1512, %v1533
    %v1562 = vmul.f32 %v1505, %v1521
    %v1563 = vmul.f32 %v1497, %v1525
    %v1564 = vmul.f32 %v1489, %v1529
    %v1565 = vmul.f32 %v1513, %v1533
    %v1566 = vmul.f32 %v1506, %v1521
    %v1567 = vmul.f32 %v1498, %v1525
    %v1568 = vmul.f32 %v1490, %v1529
    %v1569 = vmul.f32 %v1514, %v1533
    %1570 = vst [vmem:[#allocation2 + $0x800] sm:$0xff] %v1538
    %1571 = vst [vmem:[#allocation2 + $0x808] sm:$0xff] %v1539
    %1572 = vst [vmem:[#allocation2 + $0x810] sm:$0xff] %v1540
    %1573 = vst [vmem:[#allocation2 + $0x818] sm:$0xff] %v1541
    %1574 = vst [vmem:[#allocation2 + $0x820] sm:$0xff] %v1542
    %1575 = vst [vmem:[#allocation2 + $0x828] sm:$0xff] %v1543
    %1576 = vst [vmem:[#allocation2 + $0x830] sm:$0xff] %v1544
    %1577 = vst [vmem:[#allocation2 + $0x838] sm:$0xff] %v1545
    %1578 = vst [vmem:[#allocation2 + $0x840] sm:$0xff] %v1546
    %1579 = vst [vmem:[#allocation2 + $0x848] sm:$0xff] %v1547
    %1580 = vst [vmem:[#allocation2 + $0x850] sm:$0xff] %v1548
    %1581 = vst [vmem:[#allocation2 + $0x858] sm:$0xff] %v1549
    %1582 = vst [vmem:[#allocation2 + $0x860] sm:$0xff] %v1550
    %1583 = vst [vmem:[#allocation2 + $0x868] sm:$0xff] %v1551
    %1584 = vst [vmem:[#allocation2 + $0x870] sm:$0xff] %v1552
    %1585 = vst [vmem:[#allocation2 + $0x878] sm:$0xff] %v1553
    %1586 = vst [vmem:[#allocation2 + $0x880] sm:$0xff] %v1554
    %1587 = vst [vmem:[#allocation2 + $0x888] sm:$0xff] %v1555
    %1588 = vst [vmem:[#allocation2 + $0x890] sm:$0xff] %v1556
    %1589 = vst [vmem:[#allocation2 + $0x898] sm:$0xff] %v1557
    %1590 = vst [vmem:[#allocation2 + $0x8a0] sm:$0xff] %v1558
    %1591 = vst [vmem:[#allocation2 + $0x8a8] sm:$0xff] %v1559
    %1592 = vst [vmem:[#allocation2 + $0x8b0] sm:$0xff] %v1560
    %1593 = vst [vmem:[#allocation2 + $0x8b8] sm:$0xff] %v1561
    %1594 = vst [vmem:[#allocation2 + $0x8c0] sm:$0xff] %v1562
    %1595 = vst [vmem:[#allocation2 + $0x8c8] sm:$0xff] %v1563
    %1596 = vst [vmem:[#allocation2 + $0x8d0] sm:$0xff] %v1564
    %1597 = vst [vmem:[#allocation2 + $0x8d8] sm:$0xff] %v1565
    %1598 = vst [vmem:[#allocation2 + $0x8e0] sm:$0xff] %v1566
    %1599 = vst [vmem:[#allocation2 + $0x8e8] sm:$0xff] %v1567
    %1600 = vst [vmem:[#allocation2 + $0x8f0] sm:$0xff] %v1568
    %1601 = vst [vmem:[#allocation2 + $0x8f8] sm:$0xff] %v1569
    %v1602 = vld [vmem:[#allocation6] sm:$0xff]
    %v1603 = vld [vmem:[#allocation6 + $0x8] sm:$0xff]
    %v1604 = vld [vmem:[#allocation6 + $0x10] sm:$0xff]
    %v1605 = vld [vmem:[#allocation6 + $0x18] sm:$0xff]
    %v1606 = vld [vmem:[#allocation6 + $0x20] sm:$0xff]
    %v1607 = vld [vmem:[#allocation6 + $0x28] sm:$0xff]
    %v1608 = vld [vmem:[#allocation6 + $0x30] sm:$0xff]
    %v1609 = vld [vmem:[#allocation6 + $0x38] sm:$0xff]
    %v1610 = vld [vmem:[#allocation6 + $0x40] sm:$0xff]
    %v1611 = vld [vmem:[#allocation6 + $0x48] sm:$0xff]
    %v1612 = vld [vmem:[#allocation6 + $0x50] sm:$0xff]
    %v1613 = vld [vmem:[#allocation6 + $0x58] sm:$0xff]
    %v1614 = vld [vmem:[#allocation6 + $0x60] sm:$0xff]
    %v1615 = vld [vmem:[#allocation6 + $0x68] sm:$0xff]
    %v1616 = vld [vmem:[#allocation6 + $0x70] sm:$0xff]
    %v1617 = vld [vmem:[#allocation6 + $0x78] sm:$0xff]
    %v1618 = vld [vmem:[#allocation6 + $0x80] sm:$0xff]
    %v1619 = vld [vmem:[#allocation6 + $0x88] sm:$0xff]
    %v1620 = vld [vmem:[#allocation6 + $0x90] sm:$0xff]
    %v1621 = vld [vmem:[#allocation6 + $0x98] sm:$0xff]
    %v1622 = vld [vmem:[#allocation6 + $0xa0] sm:$0xff]
    %v1623 = vld [vmem:[#allocation6 + $0xa8] sm:$0xff]
    %v1624 = vld [vmem:[#allocation6 + $0xb0] sm:$0xff]
    %v1625 = vld [vmem:[#allocation6 + $0xb8] sm:$0xff]
    %v1626 = vld [vmem:[#allocation6 + $0xc0] sm:$0xff]
    %v1627 = vld [vmem:[#allocation6 + $0xc8] sm:$0xff]
    %v1628 = vld [vmem:[#allocation6 + $0xd0] sm:$0xff]
    %v1629 = vld [vmem:[#allocation6 + $0xd8] sm:$0xff]
    %v1630 = vld [vmem:[#allocation6 + $0xe0] sm:$0xff]
    %v1631 = vld [vmem:[#allocation6 + $0xe8] sm:$0xff]
    %v1632 = vld [vmem:[#allocation6 + $0xf0] sm:$0xff]
    %v1633 = vld [vmem:[#allocation6 + $0xf8] sm:$0xff]
    %v1634 = vld [vmem:[#allocation6 + $0x100] sm:$0xff]
    %v1635 = vld [vmem:[#allocation6 + $0x108] sm:$0xff]
    %v1636 = vld [vmem:[#allocation6 + $0x110] sm:$0xff]
    %v1637 = vld [vmem:[#allocation6 + $0x118] sm:$0xff]
    %v1638 = vld [vmem:[#allocation6 + $0x120] sm:$0xff]
    %v1639 = vld [vmem:[#allocation6 + $0x128] sm:$0xff]
    %v1640 = vld [vmem:[#allocation6 + $0x130] sm:$0xff]
    %v1641 = vld [vmem:[#allocation6 + $0x138] sm:$0xff]
    %v1642 = vld [vmem:[#allocation2] sm:$0xff]
    %v1643 = vld [vmem:[#allocation2 + $0x8] sm:$0xff]
    %v1644 = vld [vmem:[#allocation2 + $0x10] sm:$0xff]
    %v1645 = vld [vmem:[#allocation2 + $0x18] sm:$0xff]
    %v1646 = vld [vmem:[#allocation2 + $0x20] sm:$0xff]
    %v1647 = vld [vmem:[#allocation2 + $0x28] sm:$0xff]
    %v1648 = vld [vmem:[#allocation2 + $0x30] sm:$0xff]
    %v1649 = vld [vmem:[#allocation2 + $0x38] sm:$0xff]
    %v1650 = vld [vmem:[#allocation2 + $0x40] sm:$0xff]
    %v1651 = vld [vmem:[#allocation2 + $0x48] sm:$0xff]
    %v1652 = vld [vmem:[#allocation2 + $0x50] sm:$0xff]
    %v1653 = vld [vmem:[#allocation2 + $0x58] sm:$0xff]
    %v1654 = vld [vmem:[#allocation2 + $0x60] sm:$0xff]
    %v1655 = vld [vmem:[#allocation2 + $0x68] sm:$0xff]
    %v1656 = vld [vmem:[#allocation2 + $0x70] sm:$0xff]
    %v1657 = vld [vmem:[#allocation2 + $0x78] sm:$0xff]
    %v1658 = vld [vmem:[#allocation2 + $0x80] sm:$0xff]
    %v1659 = vld [vmem:[#allocation2 + $0x88] sm:$0xff]
    %v1660 = vld [vmem:[#allocation2 + $0x90] sm:$0xff]
    %v1661 = vld [vmem:[#allocation2 + $0x98] sm:$0xff]
    %v1662 = vld [vmem:[#allocation2 + $0xa0] sm:$0xff]
    %v1663 = vld [vmem:[#allocation2 + $0xa8] sm:$0xff]
    %v1664 = vld [vmem:[#allocation2 + $0xb0] sm:$0xff]
    %v1665 = vld [vmem:[#allocation2 + $0xb8] sm:$0xff]
    %v1666 = vld [vmem:[#allocation2 + $0xc0] sm:$0xff]
    %v1667 = vld [vmem:[#allocation2 + $0xc8] sm:$0xff]
    %v1668 = vld [vmem:[#allocation2 + $0xd0] sm:$0xff]
    %v1669 = vld [vmem:[#allocation2 + $0xd8] sm:$0xff]
    %v1670 = vld [vmem:[#allocation2 + $0xe0] sm:$0xff]
    %v1671 = vld [vmem:[#allocation2 + $0xe8] sm:$0xff]
    %v1672 = vld [vmem:[#allocation2 + $0xf0] sm:$0xff]
    %v1673 = vld [vmem:[#allocation2 + $0xf8] sm:$0xff]
    %v1674 = vld [vmem:[#allocation2 + $0x100] sm:$0xff]
    %v1675 = vld [vmem:[#allocation2 + $0x108] sm:$0xff]
    %v1676 = vld [vmem:[#allocation2 + $0x110] sm:$0xff]
    %v1677 = vld [vmem:[#allocation2 + $0x118] sm:$0xff]
    %v1678 = vld [vmem:[#allocation2 + $0x120] sm:$0xff]
    %v1679 = vld [vmem:[#allocation2 + $0x128] sm:$0xff]
    %v1680 = vld [vmem:[#allocation2 + $0x130] sm:$0xff]
    %v1681 = vld [vmem:[#allocation2 + $0x138] sm:$0xff]
    %v1682 = vld [vmem:[#allocation2 + $0x140] sm:$0xff]
    %v1683 = vld [vmem:[#allocation2 + $0x148] sm:$0xff]
    %v1684 = vld [vmem:[#allocation2 + $0x150] sm:$0xff]
    %v1685 = vld [vmem:[#allocation2 + $0x158] sm:$0xff]
    %v1686 = vld [vmem:[#allocation2 + $0x160] sm:$0xff]
    %v1687 = vld [vmem:[#allocation2 + $0x168] sm:$0xff]
    %v1688 = vld [vmem:[#allocation2 + $0x170] sm:$0xff]
    %v1689 = vld [vmem:[#allocation2 + $0x178] sm:$0xff]
    %v1690 = vld [vmem:[#allocation2 + $0x180] sm:$0xff]
    %v1691 = vld [vmem:[#allocation2 + $0x188] sm:$0xff]
    %v1692 = vld [vmem:[#allocation2 + $0x190] sm:$0xff]
    %v1693 = vld [vmem:[#allocation2 + $0x198] sm:$0xff]
    %v1694 = vld [vmem:[#allocation2 + $0x1a0] sm:$0xff]
    %v1695 = vld [vmem:[#allocation2 + $0x1a8] sm:$0xff]
    %v1696 = vld [vmem:[#allocation2 + $0x1b0] sm:$0xff]
    %v1697 = vld [vmem:[#allocation2 + $0x1b8] sm:$0xff]
    %v1698 = vld [vmem:[#allocation2 + $0x1c0] sm:$0xff]
    %v1699 = vld [vmem:[#allocation2 + $0x1c8] sm:$0xff]
    %v1700 = vld [vmem:[#allocation2 + $0x1d0] sm:$0xff]
    %v1701 = vld [vmem:[#allocation2 + $0x1d8] sm:$0xff]
    %v1702 = vld [vmem:[#allocation2 + $0x1e0] sm:$0xff]
    %v1703 = vld [vmem:[#allocation2 + $0x1e8] sm:$0xff]
    %v1704 = vld [vmem:[#allocation2 + $0x1f0] sm:$0xff]
    %v1705 = vld [vmem:[#allocation2 + $0x1f8] sm:$0xff]
    %v1706 = vld [vmem:[#allocation2 + $0x200] sm:$0xff]
    %v1707 = vld [vmem:[#allocation2 + $0x208] sm:$0xff]
    %v1708 = vld [vmem:[#allocation2 + $0x210] sm:$0xff]
    %v1709 = vld [vmem:[#allocation2 + $0x218] sm:$0xff]
    %v1710 = vld [vmem:[#allocation2 + $0x220] sm:$0xff]
    %v1711 = vld [vmem:[#allocation2 + $0x228] sm:$0xff]
    %v1712 = vld [vmem:[#allocation2 + $0x230] sm:$0xff]
    %v1713 = vld [vmem:[#allocation2 + $0x238] sm:$0xff]
    %v1714 = vld [vmem:[#allocation2 + $0x240] sm:$0xff]
    %v1715 = vld [vmem:[#allocation2 + $0x248] sm:$0xff]
    %v1716 = vld [vmem:[#allocation2 + $0x250] sm:$0xff]
    %v1717 = vld [vmem:[#allocation2 + $0x258] sm:$0xff]
    %v1718 = vld [vmem:[#allocation2 + $0x260] sm:$0xff]
    %v1719 = vld [vmem:[#allocation2 + $0x268] sm:$0xff]
    %v1720 = vld [vmem:[#allocation2 + $0x270] sm:$0xff]
    %v1721 = vld [vmem:[#allocation2 + $0x278] sm:$0xff]
    %v1722 = vld [vmem:[#allocation2 + $0x280] sm:$0xff]
    %v1723 = vld [vmem:[#allocation2 + $0x288] sm:$0xff]
    %v1724 = vld [vmem:[#allocation2 + $0x290] sm:$0xff]
    %v1725 = vld [vmem:[#allocation2 + $0x298] sm:$0xff]
    %v1726 = vld [vmem:[#allocation2 + $0x2a0] sm:$0xff]
    %v1727 = vld [vmem:[#allocation2 + $0x2a8] sm:$0xff]
    %v1728 = vld [vmem:[#allocation2 + $0x2b0] sm:$0xff]
    %v1729 = vld [vmem:[#allocation2 + $0x2b8] sm:$0xff]
    %v1730 = vld [vmem:[#allocation2 + $0x2c0] sm:$0xff]
    %v1731 = vld [vmem:[#allocation2 + $0x2c8] sm:$0xff]
    %v1732 = vld [vmem:[#allocation2 + $0x2d0] sm:$0xff]
    %v1733 = vld [vmem:[#allocation2 + $0x2d8] sm:$0xff]
    %v1734 = vld [vmem:[#allocation2 + $0x2e0] sm:$0xff]
    %v1735 = vld [vmem:[#allocation2 + $0x2e8] sm:$0xff]
    %v1736 = vld [vmem:[#allocation2 + $0x2f0] sm:$0xff]
    %v1737 = vld [vmem:[#allocation2 + $0x2f8] sm:$0xff]
    %v1738 = vld [vmem:[#allocation2 + $0x300] sm:$0xff]
    %v1739 = vld [vmem:[#allocation2 + $0x308] sm:$0xff]
    %v1740 = vld [vmem:[#allocation2 + $0x310] sm:$0xff]
    %v1741 = vld [vmem:[#allocation2 + $0x318] sm:$0xff]
    %v1742 = vld [vmem:[#allocation2 + $0x320] sm:$0xff]
    %v1743 = vld [vmem:[#allocation2 + $0x328] sm:$0xff]
    %v1744 = vld [vmem:[#allocation2 + $0x330] sm:$0xff]
    %v1745 = vld [vmem:[#allocation2 + $0x338] sm:$0xff]
    %v1746 = vld [vmem:[#allocation2 + $0x340] sm:$0xff]
    %v1747 = vld [vmem:[#allocation2 + $0x348] sm:$0xff]
    %v1748 = vld [vmem:[#allocation2 + $0x350] sm:$0xff]
    %v1749 = vld [vmem:[#allocation2 + $0x358] sm:$0xff]
    %v1750 = vld [vmem:[#allocation2 + $0x360] sm:$0xff]
    %v1751 = vld [vmem:[#allocation2 + $0x368] sm:$0xff]
    %v1752 = vld [vmem:[#allocation2 + $0x370] sm:$0xff]
    %v1753 = vld [vmem:[#allocation2 + $0x378] sm:$0xff]
    %v1754 = vld [vmem:[#allocation2 + $0x380] sm:$0xff]
    %v1755 = vld [vmem:[#allocation2 + $0x388] sm:$0xff]
    %v1756 = vld [vmem:[#allocation2 + $0x390] sm:$0xff]
    %v1757 = vld [vmem:[#allocation2 + $0x398] sm:$0xff]
    %v1758 = vld [vmem:[#allocation2 + $0x3a0] sm:$0xff]
    %v1759 = vld [vmem:[#allocation2 + $0x3a8] sm:$0xff]
    %v1760 = vld [vmem:[#allocation2 + $0x3b0] sm:$0xff]
    %v1761 = vld [vmem:[#allocation2 + $0x3b8] sm:$0xff]
    %v1762 = vld [vmem:[#allocation2 + $0x3c0] sm:$0xff]
    %v1763 = vld [vmem:[#allocation2 + $0x3c8] sm:$0xff]
    %v1764 = vld [vmem:[#allocation2 + $0x3d0] sm:$0xff]
    %v1765 = vld [vmem:[#allocation2 + $0x3d8] sm:$0xff]
    %v1766 = vld [vmem:[#allocation2 + $0x3e0] sm:$0xff]
    %v1767 = vld [vmem:[#allocation2 + $0x3e8] sm:$0xff]
    %v1768 = vld [vmem:[#allocation2 + $0x3f0] sm:$0xff]
    %v1769 = vld [vmem:[#allocation2 + $0x3f8] sm:$0xff]
    %v1770 = vld [vmem:[#allocation2 + $0x400] sm:$0xff]
    %v1771 = vld [vmem:[#allocation2 + $0x408] sm:$0xff]
    %v1772 = vld [vmem:[#allocation2 + $0x410] sm:$0xff]
    %v1773 = vld [vmem:[#allocation2 + $0x418] sm:$0xff]
    %v1774 = vld [vmem:[#allocation2 + $0x420] sm:$0xff]
    %v1775 = vld [vmem:[#allocation2 + $0x428] sm:$0xff]
    %v1776 = vld [vmem:[#allocation2 + $0x430] sm:$0xff]
    %v1777 = vld [vmem:[#allocation2 + $0x438] sm:$0xff]
    %v1778 = vld [vmem:[#allocation2 + $0x440] sm:$0xff]
    %v1779 = vld [vmem:[#allocation2 + $0x448] sm:$0xff]
    %v1780 = vld [vmem:[#allocation2 + $0x450] sm:$0xff]
    %v1781 = vld [vmem:[#allocation2 + $0x458] sm:$0xff]
    %v1782 = vld [vmem:[#allocation2 + $0x460] sm:$0xff]
    %v1783 = vld [vmem:[#allocation2 + $0x468] sm:$0xff]
    %v1784 = vld [vmem:[#allocation2 + $0x470] sm:$0xff]
    %v1785 = vld [vmem:[#allocation2 + $0x478] sm:$0xff]
    %v1786 = vld [vmem:[#allocation2 + $0x480] sm:$0xff]
    %v1787 = vld [vmem:[#allocation2 + $0x488] sm:$0xff]
    %v1788 = vld [vmem:[#allocation2 + $0x490] sm:$0xff]
    %v1789 = vld [vmem:[#allocation2 + $0x498] sm:$0xff]
    %v1790 = vld [vmem:[#allocation2 + $0x4a0] sm:$0xff]
    %v1791 = vld [vmem:[#allocation2 + $0x4a8] sm:$0xff]
    %v1792 = vld [vmem:[#allocation2 + $0x4b0] sm:$0xff]
    %v1793 = vld [vmem:[#allocation2 + $0x4b8] sm:$0xff]
    %v1794 = vld [vmem:[#allocation2 + $0x4c0] sm:$0xff]
    %v1795 = vld [vmem:[#allocation2 + $0x4c8] sm:$0xff]
    %v1796 = vld [vmem:[#allocation2 + $0x4d0] sm:$0xff]
    %v1797 = vld [vmem:[#allocation2 + $0x4d8] sm:$0xff]
    %v1798 = vld [vmem:[#allocation2 + $0x4e0] sm:$0xff]
    %v1799 = vld [vmem:[#allocation2 + $0x4e8] sm:$0xff]
    %v1800 = vld [vmem:[#allocation2 + $0x4f0] sm:$0xff]
    %v1801 = vld [vmem:[#allocation2 + $0x4f8] sm:$0xff]
    %v1802 = vld [vmem:[#allocation2 + $0x500] sm:$0xff]
    %v1803 = vld [vmem:[#allocation2 + $0x508] sm:$0xff]
    %v1804 = vld [vmem:[#allocation2 + $0x510] sm:$0xff]
    %v1805 = vld [vmem:[#allocation2 + $0x518] sm:$0xff]
    %v1806 = vld [vmem:[#allocation2 + $0x520] sm:$0xff]
    %v1807 = vld [vmem:[#allocation2 + $0x528] sm:$0xff]
    %v1808 = vld [vmem:[#allocation2 + $0x530] sm:$0xff]
    %v1809 = vld [vmem:[#allocation2 + $0x538] sm:$0xff]
    %v1810 = vld [vmem:[#allocation2 + $0x540] sm:$0xff]
    %v1811 = vld [vmem:[#allocation2 + $0x548] sm:$0xff]
    %v1812 = vld [vmem:[#allocation2 + $0x550] sm:$0xff]
    %v1813 = vld [vmem:[#allocation2 + $0x558] sm:$0xff]
    %v1814 = vld [vmem:[#allocation2 + $0x560] sm:$0xff]
    %v1815 = vld [vmem:[#allocation2 + $0x568] sm:$0xff]
    %v1816 = vld [vmem:[#allocation2 + $0x570] sm:$0xff]
    %v1817 = vld [vmem:[#allocation2 + $0x578] sm:$0xff]
    %v1818 = vld [vmem:[#allocation2 + $0x580] sm:$0xff]
    %v1819 = vld [vmem:[#allocation2 + $0x588] sm:$0xff]
    %v1820 = vld [vmem:[#allocation2 + $0x590] sm:$0xff]
    %v1821 = vld [vmem:[#allocation2 + $0x598] sm:$0xff]
    %v1822 = vld [vmem:[#allocation2 + $0x5a0] sm:$0xff]
    %v1823 = vld [vmem:[#allocation2 + $0x5a8] sm:$0xff]
    %v1824 = vld [vmem:[#allocation2 + $0x5b0] sm:$0xff]
    %v1825 = vld [vmem:[#allocation2 + $0x5b8] sm:$0xff]
    %v1826 = vld [vmem:[#allocation2 + $0x5c0] sm:$0xff]
    %v1827 = vld [vmem:[#allocation2 + $0x5c8] sm:$0xff]
    %v1828 = vld [vmem:[#allocation2 + $0x5d0] sm:$0xff]
    %v1829 = vld [vmem:[#allocation2 + $0x5d8] sm:$0xff]
    %v1830 = vld [vmem:[#allocation2 + $0x5e0] sm:$0xff]
    %v1831 = vld [vmem:[#allocation2 + $0x5e8] sm:$0xff]
    %v1832 = vld [vmem:[#allocation2 + $0x5f0] sm:$0xff]
    %v1833 = vld [vmem:[#allocation2 + $0x5f8] sm:$0xff]
    %v1834 = vld [vmem:[#allocation2 + $0x600] sm:$0xff]
    %v1835 = vld [vmem:[#allocation2 + $0x608] sm:$0xff]
    %v1836 = vld [vmem:[#allocation2 + $0x610] sm:$0xff]
    %v1837 = vld [vmem:[#allocation2 + $0x618] sm:$0xff]
    %v1838 = vld [vmem:[#allocation2 + $0x620] sm:$0xff]
    %v1839 = vld [vmem:[#allocation2 + $0x628] sm:$0xff]
    %v1840 = vld [vmem:[#allocation2 + $0x630] sm:$0xff]
    %v1841 = vld [vmem:[#allocation2 + $0x638] sm:$0xff]
    %v1842 = vld [vmem:[#allocation2 + $0x640] sm:$0xff]
    %v1843 = vld [vmem:[#allocation2 + $0x648] sm:$0xff]
    %v1844 = vld [vmem:[#allocation2 + $0x650] sm:$0xff]
    %v1845 = vld [vmem:[#allocation2 + $0x658] sm:$0xff]
    %v1846 = vld [vmem:[#allocation2 + $0x660] sm:$0xff]
    %v1847 = vld [vmem:[#allocation2 + $0x668] sm:$0xff]
    %v1848 = vld [vmem:[#allocation2 + $0x670] sm:$0xff]
    %v1849 = vld [vmem:[#allocation2 + $0x678] sm:$0xff]
    %v1850 = vld [vmem:[#allocation2 + $0x680] sm:$0xff]
    %v1851 = vld [vmem:[#allocation2 + $0x688] sm:$0xff]
    %v1852 = vld [vmem:[#allocation2 + $0x690] sm:$0xff]
    %v1853 = vld [vmem:[#allocation2 + $0x698] sm:$0xff]
    %v1854 = vld [vmem:[#allocation2 + $0x6a0] sm:$0xff]
    %v1855 = vld [vmem:[#allocation2 + $0x6a8] sm:$0xff]
    %v1856 = vld [vmem:[#allocation2 + $0x6b0] sm:$0xff]
    %v1857 = vld [vmem:[#allocation2 + $0x6b8] sm:$0xff]
    %v1858 = vld [vmem:[#allocation2 + $0x6c0] sm:$0xff]
    %v1859 = vld [vmem:[#allocation2 + $0x6c8] sm:$0xff]
    %v1860 = vld [vmem:[#allocation2 + $0x6d0] sm:$0xff]
    %v1861 = vld [vmem:[#allocation2 + $0x6d8] sm:$0xff]
    %v1862 = vld [vmem:[#allocation2 + $0x6e0] sm:$0xff]
    %v1863 = vld [vmem:[#allocation2 + $0x6e8] sm:$0xff]
    %v1864 = vld [vmem:[#allocation2 + $0x6f0] sm:$0xff]
    %v1865 = vld [vmem:[#allocation2 + $0x6f8] sm:$0xff]
    %v1866 = vld [vmem:[#allocation2 + $0x700] sm:$0xff]
    %v1867 = vld [vmem:[#allocation2 + $0x708] sm:$0xff]
    %v1868 = vld [vmem:[#allocation2 + $0x710] sm:$0xff]
    %v1869 = vld [vmem:[#allocation2 + $0x718] sm:$0xff]
    %v1870 = vld [vmem:[#allocation2 + $0x720] sm:$0xff]
    %v1871 = vld [vmem:[#allocation2 + $0x728] sm:$0xff]
    %v1872 = vld [vmem:[#allocation2 + $0x730] sm:$0xff]
    %v1873 = vld [vmem:[#allocation2 + $0x738] sm:$0xff]
    %v1874 = vld [vmem:[#allocation2 + $0x740] sm:$0xff]
    %v1875 = vld [vmem:[#allocation2 + $0x748] sm:$0xff]
    %v1876 = vld [vmem:[#allocation2 + $0x750] sm:$0xff]
    %v1877 = vld [vmem:[#allocation2 + $0x758] sm:$0xff]
    %v1878 = vld [vmem:[#allocation2 + $0x760] sm:$0xff]
    %v1879 = vld [vmem:[#allocation2 + $0x768] sm:$0xff]
    %v1880 = vld [vmem:[#allocation2 + $0x770] sm:$0xff]
    %v1881 = vld [vmem:[#allocation2 + $0x778] sm:$0xff]
    %v1882 = vld [vmem:[#allocation2 + $0x780] sm:$0xff]
    %v1883 = vld [vmem:[#allocation2 + $0x788] sm:$0xff]
    %v1884 = vld [vmem:[#allocation2 + $0x790] sm:$0xff]
    %v1885 = vld [vmem:[#allocation2 + $0x798] sm:$0xff]
    %v1886 = vld [vmem:[#allocation2 + $0x7a0] sm:$0xff]
    %v1887 = vld [vmem:[#allocation2 + $0x7a8] sm:$0xff]
    %v1888 = vld [vmem:[#allocation2 + $0x7b0] sm:$0xff]
    %v1889 = vld [vmem:[#allocation2 + $0x7b8] sm:$0xff]
    %v1890 = vld [vmem:[#allocation2 + $0x7c0] sm:$0xff]
    %v1891 = vld [vmem:[#allocation2 + $0x7c8] sm:$0xff]
    %v1892 = vld [vmem:[#allocation2 + $0x7d0] sm:$0xff]
    %v1893 = vld [vmem:[#allocation2 + $0x7d8] sm:$0xff]
    %v1894 = vld [vmem:[#allocation2 + $0x7e0] sm:$0xff]
    %v1895 = vld [vmem:[#allocation2 + $0x7e8] sm:$0xff]
    %v1896 = vld [vmem:[#allocation2 + $0x7f0] sm:$0xff]
    %v1897 = vld [vmem:[#allocation2 + $0x7f8] sm:$0xff]
    %v1898 = vld [vmem:[#allocation2 + $0x800] sm:$0xff]
    %v1899 = vld [vmem:[#allocation2 + $0x808] sm:$0xff]
    %v1900 = vld [vmem:[#allocation2 + $0x810] sm:$0xff]
    %v1901 = vld [vmem:[#allocation2 + $0x818] sm:$0xff]
    %v1902 = vld [vmem:[#allocation2 + $0x820] sm:$0xff]
    %v1903 = vld [vmem:[#allocation2 + $0x828] sm:$0xff]
    %v1904 = vld [vmem:[#allocation2 + $0x830] sm:$0xff]
    %v1905 = vld [vmem:[#allocation2 + $0x838] sm:$0xff]
    %v1906 = vld [vmem:[#allocation2 + $0x840] sm:$0xff]
    %v1907 = vld [vmem:[#allocation2 + $0x848] sm:$0xff]
    %v1908 = vld [vmem:[#allocation2 + $0x850] sm:$0xff]
    %v1909 = vld [vmem:[#allocation2 + $0x858] sm:$0xff]
    %v1910 = vld [vmem:[#allocation2 + $0x860] sm:$0xff]
    %v1911 = vld [vmem:[#allocation2 + $0x868] sm:$0xff]
    %v1912 = vld [vmem:[#allocation2 + $0x870] sm:$0xff]
    %v1913 = vld [vmem:[#allocation2 + $0x878] sm:$0xff]
    %v1914 = vld [vmem:[#allocation2 + $0x880] sm:$0xff]
    %v1915 = vld [vmem:[#allocation2 + $0x888] sm:$0xff]
    %v1916 = vld [vmem:[#allocation2 + $0x890] sm:$0xff]
    %v1917 = vld [vmem:[#allocation2 + $0x898] sm:$0xff]
    %v1918 = vld [vmem:[#allocation2 + $0x8a0] sm:$0xff]
    %v1919 = vld [vmem:[#allocation2 + $0x8a8] sm:$0xff]
    %v1920 = vld [vmem:[#allocation2 + $0x8b0] sm:$0xff]
    %v1921 = vld [vmem:[#allocation2 + $0x8b8] sm:$0xff]
    %v1922 = vld [vmem:[#allocation2 + $0x8c0] sm:$0xff]
    %v1923 = vld [vmem:[#allocation2 + $0x8c8] sm:$0xff]
    %v1924 = vld [vmem:[#allocation2 + $0x8d0] sm:$0xff]
    %v1925 = vld [vmem:[#allocation2 + $0x8d8] sm:$0xff]
    %v1926 = vld [vmem:[#allocation2 + $0x8e0] sm:$0xff]
    %v1927 = vld [vmem:[#allocation2 + $0x8e8] sm:$0xff]
    %v1928 = vld [vmem:[#allocation2 + $0x8f0] sm:$0xff]
    %v1929 = vld [vmem:[#allocation2 + $0x8f8] sm:$0xff]
    %v1930 = vld [vmem:[%s3] sm:$0xff]
    %v1931 = vld [vmem:[%s3 + $0x8] sm:$0xff]
    %v1932 = vld [vmem:[%s3 + $0x10] sm:$0xff]
    %v1933 = vld [vmem:[%s3 + $0x18] sm:$0xff]
    %v1934 = vld [vmem:[%s3 + $0x20] sm:$0xff]
    %v1935 = vld [vmem:[%s3 + $0x28] sm:$0xff]
    %v1936 = vld [vmem:[%s3 + $0x30] sm:$0xff]
    %v1937 = vld [vmem:[%s3 + $0x38] sm:$0xff]
    %1939 = vset.pattern.permute.xlu0 0
    %1940 = vperm.xlu0 %1939, %v1930
    %v1941 = vpop.permute.xlu0 %1940
    %1944 = vset.pattern.permute.xlu0 0
    %1945 = vperm.xlu0 %1944, %v1931
    %v1946 = vpop.permute.xlu0 %1945
    %1949 = vset.pattern.permute.xlu0 0
    %1950 = vperm.xlu0 %1949, %v1932
    %v1951 = vpop.permute.xlu0 %1950
    %1954 = vset.pattern.permute.xlu0 0
    %1955 = vperm.xlu0 %1954, %v1933
    %v1956 = vpop.permute.xlu0 %1955
    %1959 = vset.pattern.permute.xlu0 0
    %1960 = vperm.xlu0 %1959, %v1934
    %v1961 = vpop.permute.xlu0 %1960
    %1964 = vset.pattern.permute.xlu0 0
    %1965 = vperm.xlu0 %1964, %v1935
    %v1966 = vpop.permute.xlu0 %1965
    %1969 = vset.pattern.permute.xlu0 0
    %1970 = vperm.xlu0 %1969, %v1936
    %v1971 = vpop.permute.xlu0 %1970
    %1974 = vset.pattern.permute.xlu0 0
    %1975 = vperm.xlu0 %1974, %v1937
    %v1976 = vpop.permute.xlu0 %1975
    %vm1978 = vcmask 523264
    %v1980 = vsel %vm1978, %v1606, 0
    %v1983 = vsel %vm1978, %v1611, 0
    %v1986 = vsel %vm1978, %v1616, 0
    %v1989 = vsel %vm1978, %v1621, 0
    %v1992 = vsel %vm1978, %v1626, 0
    %v1995 = vsel %vm1978, %v1631, 0
    %v1998 = vsel %vm1978, %v1636, 0
    %v2001 = vsel %vm1978, %v1641, 0
    %2003 = vmatprep.subr.mxu0 %v1643
    %2004 = vmatpush1.msra.mxu0 %v1642
    %2005 = vmatprep.subr.mxu0 %v1647
    %2006 = vmatpush1.msra.mxu0 %v1646
    %2007 = vmatprep.subr.mxu0 %v1651
    %2008 = vmatpush1.msra.mxu0 %v1650
    %2009 = vmatprep.subr.mxu0 %v1655
    %2010 = vmatpush1.msra.mxu0 %v1654
    %2011 = vmatprep.subr.mxu0 %v1659
    %2012 = vmatpush1.msra.mxu0 %v1658
    %2013 = vmatprep.subr.mxu0 %v1663
    %2014 = vmatpush1.msra.mxu0 %v1662
    %2015 = vmatprep.subr.mxu0 %v1667
    %2016 = vmatpush1.msra.mxu0 %v1666
    %2017 = vmatprep.subr.mxu0 %v1671
    %2018 = vmatpush1.msra.mxu0 %v1670
    %2019 = vmatprep.subr.mxu0 %v1675
    %2020 = vmatpush1.msra.mxu0 %v1674
    %2021 = vmatprep.subr.mxu0 %v1679
    %2022 = vmatpush1.msra.mxu0 %v1678
    %2023 = vmatprep.subr.mxu0 %v1683
    %2024 = vmatpush1.msra.mxu0 %v1682
    %2025 = vmatprep.subr.mxu0 %v1687
    %2026 = vmatpush1.msra.mxu0 %v1686
    %2027 = vmatprep.subr.mxu0 %v1691
    %2028 = vmatpush1.msra.mxu0 %v1690
    %2029 = vmatprep.subr.mxu0 %v1695
    %2030 = vmatpush1.msra.mxu0 %v1694
    %2031 = vmatprep.subr.mxu0 %v1699
    %2032 = vmatpush1.msra.mxu0 %v1698
    %2033 = vmatprep.subr.mxu0 %v1703
    %2034 = vmatpush1.msra.mxu0 %v1702
    %2035 = vmatprep.subr.mxu0 %v1707
    %2036 = vmatpush1.msra.mxu0 %v1706
    %2037 = vmatprep.subr.mxu0 %v1711
    %2038 = vmatpush1.msra.mxu0 %v1710
    %2039 = vmatprep.subr.mxu0 %v1715
    %2040 = vmatpush1.msra.mxu0 %v1714
    %2041 = vmatprep.subr.mxu0 %v1719
    %2042 = vmatpush1.msra.mxu0 %v1718
    %2043 = vmatprep.subr.mxu0 %v1723
    %2044 = vmatpush1.msra.mxu0 %v1722
    %2045 = vmatprep.subr.mxu0 %v1727
    %2046 = vmatpush1.msra.mxu0 %v1726
    %2047 = vmatprep.subr.mxu0 %v1731
    %2048 = vmatpush1.msra.mxu0 %v1730
    %2049 = vmatprep.subr.mxu0 %v1735
    %2050 = vmatpush1.msra.mxu0 %v1734
    %2051 = vmatprep.subr.mxu0 %v1739
    %2052 = vmatpush1.msra.mxu0 %v1738
    %2053 = vmatprep.subr.mxu0 %v1743
    %2054 = vmatpush1.msra.mxu0 %v1742
    %2055 = vmatprep.subr.mxu0 %v1747
    %2056 = vmatpush1.msra.mxu0 %v1746
    %2057 = vmatprep.subr.mxu0 %v1751
    %2058 = vmatpush1.msra.mxu0 %v1750
    %2059 = vmatprep.subr.mxu0 %v1755
    %2060 = vmatpush1.msra.mxu0 %v1754
    %2061 = vmatprep.subr.mxu0 %v1759
    %2062 = vmatpush1.msra.mxu0 %v1758
    %2063 = vmatprep.subr.mxu0 %v1763
    %2064 = vmatpush1.msra.mxu0 %v1762
    %2065 = vmatprep.subr.mxu0 %v1767
    %2066 = vmatpush1.msra.mxu0 %v1766
    %2067 = vmatprep.mubr.f32.mxu0 %v1603
    %2068 = vmatmul.mubr.f32.gmra.mrb[0].mxu0 %v1602
    %v2069 = vpop.f32.mrb[0].mxu0
    %v2070 = vadd.f32 %v1941, %v2069
    %v2071 = vpop.f32.mrb[0].mxu0
    %v2072 = vadd.f32 %v1941, %v2071
    %2073 = vmatprep.mubr.f32.mxu0 %v1608
    %2074 = vmatmul.mubr.f32.gmra.mrb[0].mxu0 %v1607
    %v2075 = vpop.f32.mrb[0].mxu0
    %v2076 = vadd.f32 %v1946, %v2075
    %v2077 = vpop.f32.mrb[0].mxu0
    %v2078 = vadd.f32 %v1946, %v2077
    %2079 = vmatprep.mubr.f32.mxu0 %v1613
    %2080 = vmatmul.mubr.f32.gmra.mrb[0].mxu0 %v1612
    %v2081 = vpop.f32.mrb[0].mxu0
    %v2082 = vadd.f32 %v1951, %v2081
    %v2083 = vpop.f32.mrb[0].mxu0
    %v2084 = vadd.f32 %v1951, %v2083
    %2085 = vmatprep.mubr.f32.mxu0 %v1618
    %2086 = vmatmul.mubr.f32.gmra.mrb[0].mxu0 %v1617
    %v2087 = vpop.f32.mrb[0].mxu0
    %v2088 = vadd.f32 %v1956, %v2087
    %v2089 = vpop.f32.mrb[0].mxu0
    %v2090 = vadd.f32 %v1956, %v2089
    %2091 = vmatprep.mubr.f32.mxu0 %v1623
    %2092 = vmatmul.mubr.f32.gmra.mrb[0].mxu0 %v1622
    %v2093 = vpop.f32.mrb[0].mxu0
    %v2094 = vadd.f32 %v1961, %v2093
    %v2095 = vpop.f32.mrb[0].mxu0
    %v2096 = vadd.f32 %v1961, %v2095
    %2097 = vmatprep.mubr.f32.mxu0 %v1628
    %2098 = vmatmul.mubr.f32.gmra.mrb[0].mxu0 %v1627
    %v2099 = vpop.f32.mrb[0].mxu0
    %v2100 = vadd.f32 %v1966, %v2099
    %v2101 = vpop.f32.mrb[0].mxu0
    %v2102 = vadd.f32 %v1966, %v2101
    %2103 = vmatprep.mubr.f32.mxu0 %v1633
    %2104 = vmatmul.mubr.f32.gmra.mrb[0].mxu0 %v1632
    %v2105 = vpop.f32.mrb[0].mxu0
    %v2106 = vadd.f32 %v1971, %v2105
    %v2107 = vpop.f32.mrb[0].mxu0
    %v2108 = vadd.f32 %v1971, %v2107
    %2109 = vmatprep.mubr.f32.mxu0 %v1638
    %2110 = vmatmul.mubr.f32.gmra.mrb[0].mxu0 %v1637
    %v2111 = vpop.f32.mrb[0].mxu0
    %v2112 = vadd.f32 %v1976, %v2111
    %v2113 = vpop.f32.mrb[0].mxu0
    %v2114 = vadd.f32 %v1976, %v2113
    %2115 = vdwg.mxu0
    %2116 = vmatprep.subr.mxu0 %v1771
    %2117 = vmatpush1.msra.mxu0 %v1770
    %2118 = vmatprep.subr.mxu0 %v1775
    %2119 = vmatpush1.msra.mxu0 %v1774
    %2120 = vmatprep.subr.mxu0 %v1779
    %2121 = vmatpush1.msra.mxu0 %v1778
    %2122 = vmatprep.subr.mxu0 %v1783
    %2123 = vmatpush1.msra.mxu0 %v1782
    %2124 = vmatprep.subr.mxu0 %v1787
    %2125 = vmatpush1.msra.mxu0 %v1786
    %2126 = vmatprep.subr.mxu0 %v1791
    %2127 = vmatpush1.msra.mxu0 %v1790
    %2128 = vmatprep.subr.mxu0 %v1795
    %2129 = vmatpush1.msra.mxu0 %v1794
    %2130 = vmatprep.subr.mxu0 %v1799
    %2131 = vmatpush1.msra.mxu0 %v1798
    %2132 = vmatprep.subr.mxu0 %v1803
    %2133 = vmatpush1.msra.mxu0 %v1802
    %2134 = vmatprep.subr.mxu0 %v1807
    %2135 = vmatpush1.msra.mxu0 %v1806
    %2136 = vmatprep.subr.mxu0 %v1811
    %2137 = vmatpush1.msra.mxu0 %v1810
    %2138 = vmatprep.subr.mxu0 %v1815
    %2139 = vmatpush1.msra.mxu0 %v1814
    %2140 = vmatprep.subr.mxu0 %v1819
    %2141 = vmatpush1.msra.mxu0 %v1818
    %2142 = vmatprep.subr.mxu0 %v1823
    %2143 = vmatpush1.msra.mxu0 %v1822
    %2144 = vmatprep.subr.mxu0 %v1827
    %2145 = vmatpush1.msra.mxu0 %v1826
    %2146 = vmatprep.subr.mxu0 %v1831
    %2147 = vmatpush1.msra.mxu0 %v1830
    %2148 = vmatprep.subr.mxu0 %v1835
    %2149 = vmatpush1.msra.mxu0 %v1834
    %2150 = vmatprep.subr.mxu0 %v1839
    %2151 = vmatpush1.msra.mxu0 %v1838
    %2152 = vmatprep.subr.mxu0 %v1843
    %2153 = vmatpush1.msra.mxu0 %v1842
    %2154 = vmatprep.subr.mxu0 %v1847
    %2155 = vmatpush1.msra.mxu0 %v1846
    %2156 = vmatprep.subr.mxu0 %v1851
    %2157 = vmatpush1.msra.mxu0 %v1850
    %2158 = vmatprep.subr.mxu0 %v1855
    %2159 = vmatpush1.msra.mxu0 %v1854
    %2160 = vmatprep.subr.mxu0 %v1859
    %2161 = vmatpush1.msra.mxu0 %v1858
    %2162 = vmatprep.subr.mxu0 %v1863
    %2163 = vmatpush1.msra.mxu0 %v1862
    %2164 = vmatprep.subr.mxu0 %v1867
    %2165 = vmatpush1.msra.mxu0 %v1866
    %2166 = vmatprep.subr.mxu0 %v1871
    %2167 = vmatpush1.msra.mxu0 %v1870
    %2168 = vmatprep.subr.mxu0 %v1875
    %2169 = vmatpush1.msra.mxu0 %v1874
    %2170 = vmatprep.subr.mxu0 %v1879
    %2171 = vmatpush1.msra.mxu0 %v1878
    %2172 = vmatprep.subr.mxu0 %v1883
    %2173 = vmatpush1.msra.mxu0 %v1882
    %2174 = vmatprep.subr.mxu0 %v1887
    %2175 = vmatpush1.msra.mxu0 %v1886
    %2176 = vmatprep.subr.mxu0 %v1891
    %2177 = vmatpush1.msra.mxu0 %v1890
    %2178 = vmatprep.subr.mxu0 %v1895
    %2179 = vmatpush1.msra.mxu0 %v1894
    %2180 = vmatprep.mubr.f32.mxu0 %v1605
    %2181 = vmatmul.mubr.f32.gmra.mrb[0].mxu0 %v1604
    %v2182 = vpop.f32.mrb[0].mxu0
    %v2183 = vadd.f32 %v2070, %v2182
    %v2184 = vpop.f32.mrb[0].mxu0
    %v2185 = vadd.f32 %v2072, %v2184
    %2186 = vmatprep.mubr.f32.mxu0 %v1610
    %2187 = vmatmul.mubr.f32.gmra.mrb[0].mxu0 %v1609
    %v2188 = vpop.f32.mrb[0].mxu0
    %v2189 = vadd.f32 %v2076, %v2188
    %v2190 = vpop.f32.mrb[0].mxu0
    %v2191 = vadd.f32 %v2078, %v2190
    %2192 = vmatprep.mubr.f32.mxu0 %v1615
    %2193 = vmatmul.mubr.f32.gmra.mrb[0].mxu0 %v1614
    %v2194 = vpop.f32.mrb[0].mxu0
    %v2195 = vadd.f32 %v2082, %v2194
    %v2196 = vpop.f32.mrb[0].mxu0
    %v2197 = vadd.f32 %v2084, %v2196
    %2198 = vmatprep.mubr.f32.mxu0 %v1620
    %2199 = vmatmul.mubr.f32.gmra.mrb[0].mxu0 %v1619
    %v2200 = vpop.f32.mrb[0].mxu0
    %v2201 = vadd.f32 %v2088, %v2200
    %v2202 = vpop.f32.mrb[0].mxu0
    %v2203 = vadd.f32 %v2090, %v2202
    %2204 = vmatprep.mubr.f32.mxu0 %v1625
    %2205 = vmatmul.mubr.f32.gmra.mrb[0].mxu0 %v1624
    %v2206 = vpop.f32.mrb[0].mxu0
    %v2207 = vadd.f32 %v2094, %v2206
    %v2208 = vpop.f32.mrb[0].mxu0
    %v2209 = vadd.f32 %v2096, %v2208
    %2210 = vmatprep.mubr.f32.mxu0 %v1630
    %2211 = vmatmul.mubr.f32.gmra.mrb[0].mxu0 %v1629
    %v2212 = vpop.f32.mrb[0].mxu0
    %v2213 = vadd.f32 %v2100, %v2212
    %v2214 = vpop.f32.mrb[0].mxu0
    %v2215 = vadd.f32 %v2102, %v2214
    %2216 = vmatprep.mubr.f32.mxu0 %v1635
    %2217 = vmatmul.mubr.f32.gmra.mrb[0].mxu0 %v1634
    %v2218 = vpop.f32.mrb[0].mxu0
    %v2219 = vadd.f32 %v2106, %v2218
    %v2220 = vpop.f32.mrb[0].mxu0
    %v2221 = vadd.f32 %v2108, %v2220
    %2222 = vmatprep.mubr.f32.mxu0 %v1640
    %2223 = vmatmul.mubr.f32.gmra.mrb[0].mxu0 %v1639
    %v2224 = vpop.f32.mrb[0].mxu0
    %v2225 = vadd.f32 %v2112, %v2224
    %v2226 = vpop.f32.mrb[0].mxu0
    %v2227 = vadd.f32 %v2114, %v2226
    %2228 = vdwg.mxu0
    %2229 = vmatprep.subr.mxu0 %v1899
    %2230 = vmatpush1.msra.mxu0 %v1898
    %2231 = vmatprep.subr.mxu0 %v1903
    %2232 = vmatpush1.msra.mxu0 %v1902
    %2233 = vmatprep.subr.mxu0 %v1907
    %2234 = vmatpush1.msra.mxu0 %v1906
    %2235 = vmatprep.subr.mxu0 %v1911
    %2236 = vmatpush1.msra.mxu0 %v1910
    %2237 = vmatprep.subr.mxu0 %v1915
    %2238 = vmatpush1.msra.mxu0 %v1914
    %2239 = vmatprep.subr.mxu0 %v1919
    %2240 = vmatpush1.msra.mxu0 %v1918
    %2241 = vmatprep.subr.mxu0 %v1923
    %2242 = vmatpush1.msra.mxu0 %v1922
    %2243 = vmatprep.subr.mxu0 %v1927
    %2244 = vmatpush1.msra.mxu0 %v1926
    %2245 = vmatprep.subr.mxu0 0.0
    %2246 = vmatpush1.msra.mxu0 0.0
    %2247 = vmatprep.subr.mxu0 0.0
    %2248 = vmatpush1.msra.mxu0 0.0
    %2249 = vmatprep.subr.mxu0 0.0
    %2250 = vmatpush1.msra.mxu0 0.0
    %2251 = vmatprep.subr.mxu0 0.0
    %2252 = vmatpush1.msra.mxu0 0.0
    %2253 = vmatprep.subr.mxu0 0.0
    %2254 = vmatpush1.msra.mxu0 0.0
    %2255 = vmatprep.subr.mxu0 0.0
    %2256 = vmatpush1.msra.mxu0 0.0
    %2257 = vmatprep.subr.mxu0 0.0
    %2258 = vmatpush1.msra.mxu0 0.0
    %2259 = vmatprep.subr.mxu0 0.0
    %2260 = vmatpush1.msra.mxu0 0.0
    %2261 = vmatprep.subr.mxu0 0.0
    %2262 = vmatpush1.msra.mxu0 0.0
    %2263 = vmatprep.subr.mxu0 0.0
    %2264 = vmatpush1.msra.mxu0 0.0
    %2265 = vmatprep.subr.mxu0 0.0
    %2266 = vmatpush1.msra.mxu0 0.0
    %2267 = vmatprep.subr.mxu0 0.0
    %2268 = vmatpush1.msra.mxu0 0.0
    %2269 = vmatprep.subr.mxu0 0.0
    %2270 = vmatpush1.msra.mxu0 0.0
    %2271 = vmatprep.subr.mxu0 0.0
    %2272 = vmatpush1.msra.mxu0 0.0
    %2273 = vmatprep.subr.mxu0 0.0
    %2274 = vmatpush1.msra.mxu0 0.0
    %2275 = vmatprep.subr.mxu0 0.0
    %2276 = vmatpush1.msra.mxu0 0.0
    %2277 = vmatprep.subr.mxu0 0.0
    %2278 = vmatpush1.msra.mxu0 0.0
    %2279 = vmatprep.subr.mxu0 0.0
    %2280 = vmatpush1.msra.mxu0 0.0
    %2281 = vmatprep.subr.mxu0 0.0
    %2282 = vmatpush1.msra.mxu0 0.0
    %2283 = vmatprep.subr.mxu0 0.0
    %2284 = vmatpush1.msra.mxu0 0.0
    %2285 = vmatprep.subr.mxu0 0.0
    %2286 = vmatpush1.msra.mxu0 0.0
    %2287 = vmatprep.subr.mxu0 0.0
    %2288 = vmatpush1.msra.mxu0 0.0
    %2289 = vmatprep.subr.mxu0 0.0
    %2290 = vmatpush1.msra.mxu0 0.0
    %2291 = vmatprep.subr.mxu0 0.0
    %2292 = vmatpush1.msra.mxu0 0.0
    %2293 = vmatprep.mubr.f32.mxu0 0.0
    %2294 = vmatmul.mubr.f32.gmra.mrb[0].mxu0 %v1980
    %v2295 = vpop.f32.mrb[0].mxu0
    %v2296 = vadd.f32 %v2183, %v2295
    %v2297 = vpop.f32.mrb[0].mxu0
    %v2298 = vadd.f32 %v2185, %v2297
    %2299 = vmatprep.mubr.f32.mxu0 0.0
    %2300 = vmatmul.mubr.f32.gmra.mrb[0].mxu0 %v1983
    %v2301 = vpop.f32.mrb[0].mxu0
    %v2302 = vadd.f32 %v2189, %v2301
    %v2303 = vpop.f32.mrb[0].mxu0
    %v2304 = vadd.f32 %v2191, %v2303
    %2305 = vmatprep.mubr.f32.mxu0 0.0
    %2306 = vmatmul.mubr.f32.gmra.mrb[0].mxu0 %v1986
    %v2307 = vpop.f32.mrb[0].mxu0
    %v2308 = vadd.f32 %v2195, %v2307
    %v2309 = vpop.f32.mrb[0].mxu0
    %v2310 = vadd.f32 %v2197, %v2309
    %2311 = vmatprep.mubr.f32.mxu0 0.0
    %2312 = vmatmul.mubr.f32.gmra.mrb[0].mxu0 %v1989
    %v2313 = vpop.f32.mrb[0].mxu0
    %v2314 = vadd.f32 %v2201, %v2313
    %v2315 = vpop.f32.mrb[0].mxu0
    %v2316 = vadd.f32 %v2203, %v2315
    %2317 = vmatprep.mubr.f32.mxu0 0.0
    %2318 = vmatmul.mubr.f32.gmra.mrb[0].mxu0 %v1992
    %v2319 = vpop.f32.mrb[0].mxu0
    %v2320 = vadd.f32 %v2207, %v2319
    %v2321 = vpop.f32.mrb[0].mxu0
    %v2322 = vadd.f32 %v2209, %v2321
    %2323 = vmatprep.mubr.f32.mxu0 0.0
    %2324 = vmatmul.mubr.f32.gmra.mrb[0].mxu0 %v1995
    %v2325 = vpop.f32.mrb[0].mxu0
    %v2326 = vadd.f32 %v2213, %v2325
    %v2327 = vpop.f32.mrb[0].mxu0
    %v2328 = vadd.f32 %v2215, %v2327
    %2329 = vmatprep.mubr.f32.mxu0 0.0
    %2330 = vmatmul.mubr.f32.gmra.mrb[0].mxu0 %v1998
    %v2331 = vpop.f32.mrb[0].mxu0
    %v2332 = vadd.f32 %v2219, %v2331
    %v2333 = vpop.f32.mrb[0].mxu0
    %v2334 = vadd.f32 %v2221, %v2333
    %2335 = vmatprep.mubr.f32.mxu0 0.0
    %2336 = vmatmul.mubr.f32.gmra.mrb[0].mxu0 %v2001
    %v2337 = vpop.f32.mrb[0].mxu0
    %v2338 = vadd.f32 %v2225, %v2337
    %v2339 = vpop.f32.mrb[0].mxu0
    %v2340 = vadd.f32 %v2227, %v2339
    %2341 = vdwg.mxu0
    %2342 = vmatprep.subr.mxu0 %v1645
    %2343 = vmatpush1.msra.mxu0 %v1644
    %2344 = vmatprep.subr.mxu0 %v1649
    %2345 = vmatpush1.msra.mxu0 %v1648
    %2346 = vmatprep.subr.mxu0 %v1653
    %2347 = vmatpush1.msra.mxu0 %v1652
    %2348 = vmatprep.subr.mxu0 %v1657
    %2349 = vmatpush1.msra.mxu0 %v1656
    %2350 = vmatprep.subr.mxu0 %v1661
    %2351 = vmatpush1.msra.mxu0 %v1660
    %2352 = vmatprep.subr.mxu0 %v1665
    %2353 = vmatpush1.msra.mxu0 %v1664
    %2354 = vmatprep.subr.mxu0 %v1669
    %2355 = vmatpush1.msra.mxu0 %v1668
    %2356 = vmatprep.subr.mxu0 %v1673
    %2357 = vmatpush1.msra.mxu0 %v1672
    %2358 = vmatprep.subr.mxu0 %v1677
    %2359 = vmatpush1.msra.mxu0 %v1676
    %2360 = vmatprep.subr.mxu0 %v1681
    %2361 = vmatpush1.msra.mxu0 %v1680
    %2362 = vmatprep.subr.mxu0 %v1685
    %2363 = vmatpush1.msra.mxu0 %v1684
    %2364 = vmatprep.subr.mxu0 %v1689
    %2365 = vmatpush1.msra.mxu0 %v1688
    %2366 = vmatprep.subr.mxu0 %v1693
    %2367 = vmatpush1.msra.mxu0 %v1692
    %2368 = vmatprep.subr.mxu0 %v1697
    %2369 = vmatpush1.msra.mxu0 %v1696
    %2370 = vmatprep.subr.mxu0 %v1701
    %2371 = vmatpush1.msra.mxu0 %v1700
    %2372 = vmatprep.subr.mxu0 %v1705
    %2373 = vmatpush1.msra.mxu0 %v1704
    %2374 = vmatprep.subr.mxu0 %v1709
    %2375 = vmatpush1.msra.mxu0 %v1708
    %2376 = vmatprep.subr.mxu0 %v1713
    %2377 = vmatpush1.msra.mxu0 %v1712
    %2378 = vmatprep.subr.mxu0 %v1717
    %2379 = vmatpush1.msra.mxu0 %v1716
    %2380 = vmatprep.subr.mxu0 %v1721
    %2381 = vmatpush1.msra.mxu0 %v1720
    %2382 = vmatprep.subr.mxu0 %v1725
    %2383 = vmatpush1.msra.mxu0 %v1724
    %2384 = vmatprep.subr.mxu0 %v1729
    %2385 = vmatpush1.msra.mxu0 %v1728
    %2386 = vmatprep.subr.mxu0 %v1733
    %2387 = vmatpush1.msra.mxu0 %v1732
    %2388 = vmatprep.subr.mxu0 %v1737
    %2389 = vmatpush1.msra.mxu0 %v1736
    %2390 = vmatprep.subr.mxu0 %v1741
    %2391 = vmatpush1.msra.mxu0 %v1740
    %2392 = vmatprep.subr.mxu0 %v1745
    %2393 = vmatpush1.msra.mxu0 %v1744
    %2394 = vmatprep.subr.mxu0 %v1749
    %2395 = vmatpush1.msra.mxu0 %v1748
    %2396 = vmatprep.subr.mxu0 %v1753
    %2397 = vmatpush1.msra.mxu0 %v1752
    %2398 = vmatprep.subr.mxu0 %v1757
    %2399 = vmatpush1.msra.mxu0 %v1756
    %2400 = vmatprep.subr.mxu0 %v1761
    %2401 = vmatpush1.msra.mxu0 %v1760
    %2402 = vmatprep.subr.mxu0 %v1765
    %2403 = vmatpush1.msra.mxu0 %v1764
    %2404 = vmatprep.subr.mxu0 %v1769
    %2405 = vmatpush1.msra.mxu0 %v1768
    %2406 = vmatprep.mubr.f32.mxu0 %v1603
    %2407 = vmatmul.mubr.f32.gmra.mrb[0].mxu0 %v1602
    %v2408 = vpop.f32.mrb[0].mxu0
    %v2409 = vadd.f32 %v1941, %v2408
    %v2410 = vpop.f32.mrb[0].mxu0
    %v2411 = vadd.f32 %v1941, %v2410
    %2412 = vmatprep.mubr.f32.mxu0 %v1608
    %2413 = vmatmul.mubr.f32.gmra.mrb[0].mxu0 %v1607
    %v2414 = vpop.f32.mrb[0].mxu0
    %v2415 = vadd.f32 %v1946, %v2414
    %v2416 = vpop.f32.mrb[0].mxu0
    %v2417 = vadd.f32 %v1946, %v2416
    %2418 = vmatprep.mubr.f32.mxu0 %v1613
    %2419 = vmatmul.mubr.f32.gmra.mrb[0].mxu0 %v1612
    %v2420 = vpop.f32.mrb[0].mxu0
    %v2421 = vadd.f32 %v1951, %v2420
    %v2422 = vpop.f32.mrb[0].mxu0
    %v2423 = vadd.f32 %v1951, %v2422
    %2424 = vmatprep.mubr.f32.mxu0 %v1618
    %2425 = vmatmul.mubr.f32.gmra.mrb[0].mxu0 %v1617
    %v2426 = vpop.f32.mrb[0].mxu0
    %v2427 = vadd.f32 %v1956, %v2426
    %v2428 = vpop.f32.mrb[0].mxu0
    %v2429 = vadd.f32 %v1956, %v2428
    %2430 = vmatprep.mubr.f32.mxu0 %v1623
    %2431 = vmatmul.mubr.f32.gmra.mrb[0].mxu0 %v1622
    %v2432 = vpop.f32.mrb[0].mxu0
    %v2433 = vadd.f32 %v1961, %v2432
    %v2434 = vpop.f32.mrb[0].mxu0
    %v2435 = vadd.f32 %v1961, %v2434
    %2436 = vmatprep.mubr.f32.mxu0 %v1628
    %2437 = vmatmul.mubr.f32.gmra.mrb[0].mxu0 %v1627
    %v2438 = vpop.f32.mrb[0].mxu0
    %v2439 = vadd.f32 %v1966, %v2438
    %v2440 = vpop.f32.mrb[0].mxu0
    %v2441 = vadd.f32 %v1966, %v2440
    %2442 = vmatprep.mubr.f32.mxu0 %v1633
    %2443 = vmatmul.mubr.f32.gmra.mrb[0].mxu0 %v1632
    %v2444 = vpop.f32.mrb[0].mxu0
    %v2445 = vadd.f32 %v1971, %v2444
    %v2446 = vpop.f32.mrb[0].mxu0
    %v2447 = vadd.f32 %v1971, %v2446
    %2448 = vmatprep.mubr.f32.mxu0 %v1638
    %2449 = vmatmul.mubr.f32.gmra.mrb[0].mxu0 %v1637
    %v2450 = vpop.f32.mrb[0].mxu0
    %v2451 = vadd.f32 %v1976, %v2450
    %v2452 = vpop.f32.mrb[0].mxu0
    %v2453 = vadd.f32 %v1976, %v2452
    %2454 = vdwg.mxu0
    %2455 = vmatprep.subr.mxu0 %v1773
    %2456 = vmatpush1.msra.mxu0 %v1772
    %2457 = vmatprep.subr.mxu0 %v1777
    %2458 = vmatpush1.msra.mxu0 %v1776
    %2459 = vmatprep.subr.mxu0 %v1781
    %2460 = vmatpush1.msra.mxu0 %v1780
    %2461 = vmatprep.subr.mxu0 %v1785
    %2462 = vmatpush1.msra.mxu0 %v1784
    %2463 = vmatprep.subr.mxu0 %v1789
    %2464 = vmatpush1.msra.mxu0 %v1788
    %2465 = vmatprep.subr.mxu0 %v1793
    %2466 = vmatpush1.msra.mxu0 %v1792
    %2467 = vmatprep.subr.mxu0 %v1797
    %2468 = vmatpush1.msra.mxu0 %v1796
    %2469 = vmatprep.subr.mxu0 %v1801
    %2470 = vmatpush1.msra.mxu0 %v1800
    %2471 = vmatprep.subr.mxu0 %v1805
    %2472 = vmatpush1.msra.mxu0 %v1804
    %2473 = vmatprep.subr.mxu0 %v1809
    %2474 = vmatpush1.msra.mxu0 %v1808
    %2475 = vmatprep.subr.mxu0 %v1813
    %2476 = vmatpush1.msra.mxu0 %v1812
    %2477 = vmatprep.subr.mxu0 %v1817
    %2478 = vmatpush1.msra.mxu0 %v1816
    %2479 = vmatprep.subr.mxu0 %v1821
    %2480 = vmatpush1.msra.mxu0 %v1820
    %2481 = vmatprep.subr.mxu0 %v1825
    %2482 = vmatpush1.msra.mxu0 %v1824
    %2483 = vmatprep.subr.mxu0 %v1829
    %2484 = vmatpush1.msra.mxu0 %v1828
    %2485 = vmatprep.subr.mxu0 %v1833
    %2486 = vmatpush1.msra.mxu0 %v1832
    %2487 = vmatprep.subr.mxu0 %v1837
    %2488 = vmatpush1.msra.mxu0 %v1836
    %2489 = vmatprep.subr.mxu0 %v1841
    %2490 = vmatpush1.msra.mxu0 %v1840
    %2491 = vmatprep.subr.mxu0 %v1845
    %2492 = vmatpush1.msra.mxu0 %v1844
    %2493 = vmatprep.subr.mxu0 %v1849
    %2494 = vmatpush1.msra.mxu0 %v1848
    %2495 = vmatprep.subr.mxu0 %v1853
    %2496 = vmatpush1.msra.mxu0 %v1852
    %2497 = vmatprep.subr.mxu0 %v1857
    %2498 = vmatpush1.msra.mxu0 %v1856
    %2499 = vmatprep.subr.mxu0 %v1861
    %2500 = vmatpush1.msra.mxu0 %v1860
    %2501 = vmatprep.subr.mxu0 %v1865
    %2502 = vmatpush1.msra.mxu0 %v1864
    %2503 = vmatprep.subr.mxu0 %v1869
    %2504 = vmatpush1.msra.mxu0 %v1868
    %2505 = vmatprep.subr.mxu0 %v1873
    %2506 = vmatpush1.msra.mxu0 %v1872
    %2507 = vmatprep.subr.mxu0 %v1877
    %2508 = vmatpush1.msra.mxu0 %v1876
    %2509 = vmatprep.subr.mxu0 %v1881
    %2510 = vmatpush1.msra.mxu0 %v1880
    %2511 = vmatprep.subr.mxu0 %v1885
    %2512 = vmatpush1.msra.mxu0 %v1884
    %2513 = vmatprep.subr.mxu0 %v1889
    %2514 = vmatpush1.msra.mxu0 %v1888
    %2515 = vmatprep.subr.mxu0 %v1893
    %2516 = vmatpush1.msra.mxu0 %v1892
    %2517 = vmatprep.subr.mxu0 %v1897
    %2518 = vmatpush1.msra.mxu0 %v1896
    %2519 = vmatprep.mubr.f32.mxu0 %v1605
    %2520 = vmatmul.mubr.f32.gmra.mrb[0].mxu0 %v1604
    %v2521 = vpop.f32.mrb[0].mxu0
    %v2522 = vadd.f32 %v2409, %v2521
    %v2523 = vpop.f32.mrb[0].mxu0
    %v2524 = vadd.f32 %v2411, %v2523
    %2525 = vmatprep.mubr.f32.mxu0 %v1610
    %2526 = vmatmul.mubr.f32.gmra.mrb[0].mxu0 %v1609
    %v2527 = vpop.f32.mrb[0].mxu0
    %v2528 = vadd.f32 %v2415, %v2527
    %v2529 = vpop.f32.mrb[0].mxu0
    %v2530 = vadd.f32 %v2417, %v2529
    %2531 = vmatprep.mubr.f32.mxu0 %v1615
    %2532 = vmatmul.mubr.f32.gmra.mrb[0].mxu0 %v1614
    %v2533 = vpop.f32.mrb[0].mxu0
    %v2534 = vadd.f32 %v2421, %v2533
    %v2535 = vpop.f32.mrb[0].mxu0
    %v2536 = vadd.f32 %v2423, %v2535
    %2537 = vmatprep.mubr.f32.mxu0 %v1620
    %2538 = vmatmul.mubr.f32.gmra.mrb[0].mxu0 %v1619
    %v2539 = vpop.f32.mrb[0].mxu0
    %v2540 = vadd.f32 %v2427, %v2539
    %v2541 = vpop.f32.mrb[0].mxu0
    %v2542 = vadd.f32 %v2429, %v2541
    %2543 = vmatprep.mubr.f32.mxu0 %v1625
    %2544 = vmatmul.mubr.f32.gmra.mrb[0].mxu0 %v1624
    %v2545 = vpop.f32.mrb[0].mxu0
    %v2546 = vadd.f32 %v2433, %v2545
    %v2547 = vpop.f32.mrb[0].mxu0
    %v2548 = vadd.f32 %v2435, %v2547
    %2549 = vmatprep.mubr.f32.mxu0 %v1630
    %2550 = vmatmul.mubr.f32.gmra.mrb[0].mxu0 %v1629
    %v2551 = vpop.f32.mrb[0].mxu0
    %v2552 = vadd.f32 %v2439, %v2551
    %v2553 = vpop.f32.mrb[0].mxu0
    %v2554 = vadd.f32 %v2441, %v2553
    %2555 = vmatprep.mubr.f32.mxu0 %v1635
    %2556 = vmatmul.mubr.f32.gmra.mrb[0].mxu0 %v1634
    %v2557 = vpop.f32.mrb[0].mxu0
    %v2558 = vadd.f32 %v2445, %v2557
    %v2559 = vpop.f32.mrb[0].mxu0
    %v2560 = vadd.f32 %v2447, %v2559
    %2561 = vmatprep.mubr.f32.mxu0 %v1640
    %2562 = vmatmul.mubr.f32.gmra.mrb[0].mxu0 %v1639
    %v2563 = vpop.f32.mrb[0].mxu0
    %v2564 = vadd.f32 %v2451, %v2563
    %v2565 = vpop.f32.mrb[0].mxu0
    %v2566 = vadd.f32 %v2453, %v2565
    %2567 = vdwg.mxu0
    %2568 = vmatprep.subr.mxu0 %v1901
    %2569 = vmatpush1.msra.mxu0 %v1900
    %2570 = vmatprep.subr.mxu0 %v1905
    %2571 = vmatpush1.msra.mxu0 %v1904
    %2572 = vmatprep.subr.mxu0 %v1909
    %2573 = vmatpush1.msra.mxu0 %v1908
    %2574 = vmatprep.subr.mxu0 %v1913
    %2575 = vmatpush1.msra.mxu0 %v1912
    %2576 = vmatprep.subr.mxu0 %v1917
    %2577 = vmatpush1.msra.mxu0 %v1916
    %2578 = vmatprep.subr.mxu0 %v1921
    %2579 = vmatpush1.msra.mxu0 %v1920
    %2580 = vmatprep.subr.mxu0 %v1925
    %2581 = vmatpush1.msra.mxu0 %v1924
    %2582 = vmatprep.subr.mxu0 %v1929
    %2583 = vmatpush1.msra.mxu0 %v1928
    %2584 = vmatprep.subr.mxu0 0.0
    %2585 = vmatpush1.msra.mxu0 0.0
    %2586 = vmatprep.subr.mxu0 0.0
    %2587 = vmatpush1.msra.mxu0 0.0
    %2588 = vmatprep.subr.mxu0 0.0
    %2589 = vmatpush1.msra.mxu0 0.0
    %2590 = vmatprep.subr.mxu0 0.0
    %2591 = vmatpush1.msra.mxu0 0.0
    %2592 = vmatprep.subr.mxu0 0.0
    %2593 = vmatpush1.msra.mxu0 0.0
    %2594 = vmatprep.subr.mxu0 0.0
    %2595 = vmatpush1.msra.mxu0 0.0
    %2596 = vmatprep.subr.mxu0 0.0
    %2597 = vmatpush1.msra.mxu0 0.0
    %2598 = vmatprep.subr.mxu0 0.0
    %2599 = vmatpush1.msra.mxu0 0.0
    %2600 = vmatprep.subr.mxu0 0.0
    %2601 = vmatpush1.msra.mxu0 0.0
    %2602 = vmatprep.subr.mxu0 0.0
    %2603 = vmatpush1.msra.mxu0 0.0
    %2604 = vmatprep.subr.mxu0 0.0
    %2605 = vmatpush1.msra.mxu0 0.0
    %2606 = vmatprep.subr.mxu0 0.0
    %2607 = vmatpush1.msra.mxu0 0.0
    %2608 = vmatprep.subr.mxu0 0.0
    %2609 = vmatpush1.msra.mxu0 0.0
    %2610 = vmatprep.subr.mxu0 0.0
    %2611 = vmatpush1.msra.mxu0 0.0
    %2612 = vmatprep.subr.mxu0 0.0
    %2613 = vmatpush1.msra.mxu0 0.0
    %2614 = vmatprep.subr.mxu0 0.0
    %2615 = vmatpush1.msra.mxu0 0.0
    %2616 = vmatprep.subr.mxu0 0.0
    %2617 = vmatpush1.msra.mxu0 0.0
    %2618 = vmatprep.subr.mxu0 0.0
    %2619 = vmatpush1.msra.mxu0 0.0
    %2620 = vmatprep.subr.mxu0 0.0
    %2621 = vmatpush1.msra.mxu0 0.0
    %2622 = vmatprep.subr.mxu0 0.0
    %2623 = vmatpush1.msra.mxu0 0.0
    %2624 = vmatprep.subr.mxu0 0.0
    %2625 = vmatpush1.msra.mxu0 0.0
    %2626 = vmatprep.subr.mxu0 0.0
    %2627 = vmatpush1.msra.mxu0 0.0
    %2628 = vmatprep.subr.mxu0 0.0
    %2629 = vmatpush1.msra.mxu0 0.0
    %2630 = vmatprep.subr.mxu0 0.0
    %2631 = vmatpush1.msra.mxu0 0.0
    %2632 = vmatprep.mubr.f32.mxu0 0.0
    %2633 = vmatmul.mubr.f32.gmra.mrb[0].mxu0 %v1980
    %v2634 = vpop.f32.mrb[0].mxu0
    %v2635 = vadd.f32 %v2522, %v2634
    %v2636 = vpop.f32.mrb[0].mxu0
    %v2637 = vadd.f32 %v2524, %v2636
    %2638 = vmatprep.mubr.f32.mxu0 0.0
    %2639 = vmatmul.mubr.f32.gmra.mrb[0].mxu0 %v1983
    %v2640 = vpop.f32.mrb[0].mxu0
    %v2641 = vadd.f32 %v2528, %v2640
    %v2642 = vpop.f32.mrb[0].mxu0
    %v2643 = vadd.f32 %v2530, %v2642
    %2644 = vmatprep.mubr.f32.mxu0 0.0
    %2645 = vmatmul.mubr.f32.gmra.mrb[0].mxu0 %v1986
    %v2646 = vpop.f32.mrb[0].mxu0
    %v2647 = vadd.f32 %v2534, %v2646
    %v2648 = vpop.f32.mrb[0].mxu0
    %v2649 = vadd.f32 %v2536, %v2648
    %2650 = vmatprep.mubr.f32.mxu0 0.0
    %2651 = vmatmul.mubr.f32.gmra.mrb[0].mxu0 %v1989
    %v2652 = vpop.f32.mrb[0].mxu0
    %v2653 = vadd.f32 %v2540, %v2652
    %v2654 = vpop.f32.mrb[0].mxu0
    %v2655 = vadd.f32 %v2542, %v2654
    %2656 = vmatprep.mubr.f32.mxu0 0.0
    %2657 = vmatmul.mubr.f32.gmra.mrb[0].mxu0 %v1992
    %v2658 = vpop.f32.mrb[0].mxu0
    %v2659 = vadd.f32 %v2546, %v2658
    %v2660 = vpop.f32.mrb[0].mxu0
    %v2661 = vadd.f32 %v2548, %v2660
    %2662 = vmatprep.mubr.f32.mxu0 0.0
    %2663 = vmatmul.mubr.f32.gmra.mrb[0].mxu0 %v1995
    %v2664 = vpop.f32.mrb[0].mxu0
    %v2665 = vadd.f32 %v2552, %v2664
    %v2666 = vpop.f32.mrb[0].mxu0
    %v2667 = vadd.f32 %v2554, %v2666
    %2668 = vmatprep.mubr.f32.mxu0 0.0
    %2669 = vmatmul.mubr.f32.gmra.mrb[0].mxu0 %v1998
    %v2670 = vpop.f32.mrb[0].mxu0
    %v2671 = vadd.f32 %v2558, %v2670
    %v2672 = vpop.f32.mrb[0].mxu0
    %v2673 = vadd.f32 %v2560, %v2672
    %2674 = vmatprep.mubr.f32.mxu0 0.0
    %2675 = vmatmul.mubr.f32.gmra.mrb[0].mxu0 %v2001
    %v2676 = vpop.f32.mrb[0].mxu0
    %v2677 = vadd.f32 %v2564, %v2676
    %v2678 = vpop.f32.mrb[0].mxu0
    %v2679 = vadd.f32 %v2566, %v2678
    %2680 = vdwg.mxu0
    %v2681 = vmax.f32 %v2296, 0.0
    %v2682 = vmax.f32 %v2298, 0.0
    %v2683 = vmax.f32 %v2635, 0.0
    %v2684 = vmax.f32 %v2637, 0.0
    %v2685 = vmax.f32 %v2302, 0.0
    %v2686 = vmax.f32 %v2304, 0.0
    %v2687 = vmax.f32 %v2641, 0.0
    %v2688 = vmax.f32 %v2643, 0.0
    %v2689 = vmax.f32 %v2308, 0.0
    %v2690 = vmax.f32 %v2310, 0.0
    %v2691 = vmax.f32 %v2647, 0.0
    %v2692 = vmax.f32 %v2649, 0.0
    %v2693 = vmax.f32 %v2314, 0.0
    %v2694 = vmax.f32 %v2316, 0.0
    %v2695 = vmax.f32 %v2653, 0.0
    %v2696 = vmax.f32 %v2655, 0.0
    %v2697 = vmax.f32 %v2320, 0.0
    %v2698 = vmax.f32 %v2322, 0.0
    %v2699 = vmax.f32 %v2659, 0.0
    %v2700 = vmax.f32 %v2661, 0.0
    %v2701 = vmax.f32 %v2326, 0.0
    %v2702 = vmax.f32 %v2328, 0.0
    %v2703 = vmax.f32 %v2665, 0.0
    %v2704 = vmax.f32 %v2667, 0.0
    %v2705 = vmax.f32 %v2332, 0.0
    %v2706 = vmax.f32 %v2334, 0.0
    %v2707 = vmax.f32 %v2671, 0.0
    %v2708 = vmax.f32 %v2673, 0.0
    %v2709 = vmax.f32 %v2338, 0.0
    %v2710 = vmax.f32 %v2340, 0.0
    %v2711 = vmax.f32 %v2677, 0.0
    %v2712 = vmax.f32 %v2679, 0.0
    %2713 = vrot.lane.b32.xlu0 %v2681, 17
    %v2714 = vpop.permute.xlu0 %2713
    %2715 = vrot.lane.b32.xlu0 %v2685, 17
    %v2716 = vpop.permute.xlu0 %2715
    %2717 = vrot.lane.b32.xlu0 %v2689, 17
    %v2718 = vpop.permute.xlu0 %2717
    %2719 = vrot.lane.b32.xlu0 %v2693, 17
    %v2720 = vpop.permute.xlu0 %2719
    %2721 = vrot.lane.b32.xlu0 %v2697, 17
    %v2722 = vpop.permute.xlu0 %2721
    %2723 = vrot.lane.b32.xlu0 %v2701, 17
    %v2724 = vpop.permute.xlu0 %2723
    %2725 = vrot.lane.b32.xlu0 %v2705, 17
    %v2726 = vpop.permute.xlu0 %2725
    %2727 = vrot.lane.b32.xlu0 %v2709, 17
    %v2728 = vpop.permute.xlu0 %2727
    %2729 = vrot.lane.b32.xlu0 %v2682, 17
    %v2730 = vpop.permute.xlu0 %2729
    %2731 = vrot.lane.b32.xlu0 %v2686, 17
    %v2732 = vpop.permute.xlu0 %2731
    %2733 = vrot.lane.b32.xlu0 %v2690, 17
    %v2734 = vpop.permute.xlu0 %2733
    %2735 = vrot.lane.b32.xlu0 %v2694, 17
    %v2736 = vpop.permute.xlu0 %2735
    %2737 = vrot.lane.b32.xlu0 %v2698, 17
    %v2738 = vpop.permute.xlu0 %2737
    %2739 = vrot.lane.b32.xlu0 %v2702, 17
    %v2740 = vpop.permute.xlu0 %2739
    %2741 = vrot.lane.b32.xlu0 %v2706, 17
    %v2742 = vpop.permute.xlu0 %2741
    %2743 = vrot.lane.b32.xlu0 %v2710, 17
    %v2744 = vpop.permute.xlu0 %2743
    %2745 = vrot.lane.b32.xlu0 %v2683, 17
    %v2746 = vpop.permute.xlu0 %2745
    %2747 = vrot.lane.b32.xlu0 %v2687, 17
    %v2748 = vpop.permute.xlu0 %2747
    %2749 = vrot.lane.b32.xlu0 %v2691, 17
    %v2750 = vpop.permute.xlu0 %2749
    %2751 = vrot.lane.b32.xlu0 %v2695, 17
    %v2752 = vpop.permute.xlu0 %2751
    %2753 = vrot.lane.b32.xlu0 %v2699, 17
    %v2754 = vpop.permute.xlu0 %2753
    %2755 = vrot.lane.b32.xlu0 %v2703, 17
    %v2756 = vpop.permute.xlu0 %2755
    %2757 = vrot.lane.b32.xlu0 %v2707, 17
    %v2758 = vpop.permute.xlu0 %2757
    %2759 = vrot.lane.b32.xlu0 %v2711, 17
    %v2760 = vpop.permute.xlu0 %2759
    %2761 = vrot.lane.b32.xlu0 %v2684, 17
    %v2762 = vpop.permute.xlu0 %2761
    %2763 = vrot.lane.b32.xlu0 %v2688, 17
    %v2764 = vpop.permute.xlu0 %2763
    %2765 = vrot.lane.b32.xlu0 %v2692, 17
    %v2766 = vpop.permute.xlu0 %2765
    %2767 = vrot.lane.b32.xlu0 %v2696, 17
    %v2768 = vpop.permute.xlu0 %2767
    %2769 = vrot.lane.b32.xlu0 %v2700, 17
    %v2770 = vpop.permute.xlu0 %2769
    %2771 = vrot.lane.b32.xlu0 %v2704, 17
    %v2772 = vpop.permute.xlu0 %2771
    %2773 = vrot.lane.b32.xlu0 %v2708, 17
    %v2774 = vpop.permute.xlu0 %2773
    %2775 = vrot.lane.b32.xlu0 %v2712, 17
    %v2776 = vpop.permute.xlu0 %2775
    %v2777 = vsel %vm163, %v2746, %v2762
    %v2778 = vsel %vm163, %v2748, %v2764
    %v2779 = vsel %vm163, %v2750, %v2766
    %v2780 = vsel %vm163, %v2752, %v2768
    %v2781 = vsel %vm163, %v2754, %v2770
    %v2782 = vsel %vm163, %v2756, %v2772
    %v2783 = vsel %vm163, %v2758, %v2774
    %v2784 = vsel %vm163, %v2760, %v2776
    %v2785 = vsel %vm163, %v2730, %v2746
    %v2786 = vsel %vm163, %v2732, %v2748
    %v2787 = vsel %vm163, %v2734, %v2750
    %v2788 = vsel %vm163, %v2736, %v2752
    %v2789 = vsel %vm163, %v2738, %v2754
    %v2790 = vsel %vm163, %v2740, %v2756
    %v2791 = vsel %vm163, %v2742, %v2758
    %v2792 = vsel %vm163, %v2744, %v2760
    %v2793 = vsel %vm163, %v2714, %v2730
    %v2794 = vsel %vm163, %v2716, %v2732
    %v2795 = vsel %vm163, %v2718, %v2734
    %v2796 = vsel %vm163, %v2720, %v2736
    %v2797 = vsel %vm163, %v2722, %v2738
    %v2798 = vsel %vm163, %v2724, %v2740
    %v2799 = vsel %vm163, %v2726, %v2742
    %v2800 = vsel %vm163, %v2728, %v2744
    %v2801 = vsel %vm163, %v2762, %v2714
    %v2802 = vsel %vm163, %v2764, %v2716
    %v2803 = vsel %vm163, %v2766, %v2718
    %v2804 = vsel %vm163, %v2768, %v2720
    %v2805 = vsel %vm163, %v2770, %v2722
    %v2806 = vsel %vm163, %v2772, %v2724
    %v2807 = vsel %vm163, %v2774, %v2726
    %v2808 = vsel %vm163, %v2776, %v2728
    %v2809 = vld [vmem:[%s0] sm:$0xf]
    %v2811 = vlaneseq
    %v2812 = vshrl.u32 %v2811, 7
    %v2813 = vsub.s32 0, %v2812
    %v2814 = vrot.slane %v2809, %v2813
    %v2815 = vlaneseq
    %v2816 = vshrl.u32 %v2815, 7
    %v2817 = vsub.s32 1, %v2816
    %v2818 = vrot.slane %v2809, %v2817
    %v2819 = vlaneseq
    %v2820 = vshrl.u32 %v2819, 7
    %v2821 = vsub.s32 2, %v2820
    %v2822 = vrot.slane %v2809, %v2821
    %v2823 = vlaneseq
    %v2824 = vshrl.u32 %v2823, 7
    %v2825 = vsub.s32 3, %v2824
    %v2826 = vrot.slane %v2809, %v2825
    %v2831 = vmul.f32 %v2801, %v2814
    %v2832 = vmul.f32 %v2793, %v2818
    %v2833 = vmul.f32 %v2785, %v2822
    %v2834 = vmul.f32 %v2777, %v2826
    %v2835 = vmul.f32 %v2802, %v2814
    %v2836 = vmul.f32 %v2794, %v2818
    %v2837 = vmul.f32 %v2786, %v2822
    %v2838 = vmul.f32 %v2778, %v2826
    %v2839 = vmul.f32 %v2803, %v2814
    %v2840 = vmul.f32 %v2795, %v2818
    %v2841 = vmul.f32 %v2787, %v2822
    %v2842 = vmul.f32 %v2779, %v2826
    %v2843 = vmul.f32 %v2804, %v2814
    %v2844 = vmul.f32 %v2796, %v2818
    %v2845 = vmul.f32 %v2788, %v2822
    %v2846 = vmul.f32 %v2780, %v2826
    %v2847 = vmul.f32 %v2805, %v2814
    %v2848 = vmul.f32 %v2797, %v2818
    %v2849 = vmul.f32 %v2789, %v2822
    %v2850 = vmul.f32 %v2781, %v2826
    %v2851 = vmul.f32 %v2806, %v2814
    %v2852 = vmul.f32 %v2798, %v2818
    %v2853 = vmul.f32 %v2790, %v2822
    %v2854 = vmul.f32 %v2782, %v2826
    %v2855 = vmul.f32 %v2807, %v2814
    %v2856 = vmul.f32 %v2799, %v2818
    %v2857 = vmul.f32 %v2791, %v2822
    %v2858 = vmul.f32 %v2783, %v2826
    %v2859 = vmul.f32 %v2808, %v2814
    %v2860 = vmul.f32 %v2800, %v2818
    %v2861 = vmul.f32 %v2792, %v2822
    %v2862 = vmul.f32 %v2784, %v2826
    %2863 = vst [vmem:[#allocation2] sm:$0xff] %v2831
    %2864 = vst [vmem:[#allocation2 + $0x8] sm:$0xff] %v2832
    %2865 = vst [vmem:[#allocation2 + $0x10] sm:$0xff] %v2833
    %2866 = vst [vmem:[#allocation2 + $0x18] sm:$0xff] %v2834
    %2867 = vst [vmem:[#allocation2 + $0x20] sm:$0xff] %v2835
    %2868 = vst [vmem:[#allocation2 + $0x28] sm:$0xff] %v2836
    %2869 = vst [vmem:[#allocation2 + $0x30] sm:$0xff] %v2837
    %2870 = vst [vmem:[#allocation2 + $0x38] sm:$0xff] %v2838
    %2871 = vst [vmem:[#allocation2 + $0x40] sm:$0xff] %v2839
    %2872 = vst [vmem:[#allocation2 + $0x48] sm:$0xff] %v2840
    %2873 = vst [vmem:[#allocation2 + $0x50] sm:$0xff] %v2841
    %2874 = vst [vmem:[#allocation2 + $0x58] sm:$0xff] %v2842
    %2875 = vst [vmem:[#allocation2 + $0x60] sm:$0xff] %v2843
    %2876 = vst [vmem:[#allocation2 + $0x68] sm:$0xff] %v2844
    %2877 = vst [vmem:[#allocation2 + $0x70] sm:$0xff] %v2845
    %2878 = vst [vmem:[#allocation2 + $0x78] sm:$0xff] %v2846
    %2879 = vst [vmem:[#allocation2 + $0x80] sm:$0xff] %v2847
    %2880 = vst [vmem:[#allocation2 + $0x88] sm:$0xff] %v2848
    %2881 = vst [vmem:[#allocation2 + $0x90] sm:$0xff] %v2849
    %2882 = vst [vmem:[#allocation2 + $0x98] sm:$0xff] %v2850
    %2883 = vst [vmem:[#allocation2 + $0xa0] sm:$0xff] %v2851
    %2884 = vst [vmem:[#allocation2 + $0xa8] sm:$0xff] %v2852
    %2885 = vst [vmem:[#allocation2 + $0xb0] sm:$0xff] %v2853
    %2886 = vst [vmem:[#allocation2 + $0xb8] sm:$0xff] %v2854
    %2887 = vst [vmem:[#allocation2 + $0xc0] sm:$0xff] %v2855
    %2888 = vst [vmem:[#allocation2 + $0xc8] sm:$0xff] %v2856
    %2889 = vst [vmem:[#allocation2 + $0xd0] sm:$0xff] %v2857
    %2890 = vst [vmem:[#allocation2 + $0xd8] sm:$0xff] %v2858
    %2891 = vst [vmem:[#allocation2 + $0xe0] sm:$0xff] %v2859
    %2892 = vst [vmem:[#allocation2 + $0xe8] sm:$0xff] %v2860
    %2893 = vst [vmem:[#allocation2 + $0xf0] sm:$0xff] %v2861
    %2894 = vst [vmem:[#allocation2 + $0xf8] sm:$0xff] %v2862
    %2895 = vrot.lane.b32.xlu0 %v2681, 16
    %v2896 = vpop.permute.xlu0 %2895
    %2897 = vrot.lane.b32.xlu0 %v2685, 16
    %v2898 = vpop.permute.xlu0 %2897
    %2899 = vrot.lane.b32.xlu0 %v2689, 16
    %v2900 = vpop.permute.xlu0 %2899
    %2901 = vrot.lane.b32.xlu0 %v2693, 16
    %v2902 = vpop.permute.xlu0 %2901
    %2903 = vrot.lane.b32.xlu0 %v2697, 16
    %v2904 = vpop.permute.xlu0 %2903
    %2905 = vrot.lane.b32.xlu0 %v2701, 16
    %v2906 = vpop.permute.xlu0 %2905
    %2907 = vrot.lane.b32.xlu0 %v2705, 16
    %v2908 = vpop.permute.xlu0 %2907
    %2909 = vrot.lane.b32.xlu0 %v2709, 16
    %v2910 = vpop.permute.xlu0 %2909
    %2911 = vrot.lane.b32.xlu0 %v2682, 16
    %v2912 = vpop.permute.xlu0 %2911
    %2913 = vrot.lane.b32.xlu0 %v2686, 16
    %v2914 = vpop.permute.xlu0 %2913
    %2915 = vrot.lane.b32.xlu0 %v2690, 16
    %v2916 = vpop.permute.xlu0 %2915
    %2917 = vrot.lane.b32.xlu0 %v2694, 16
    %v2918 = vpop.permute.xlu0 %2917
    %2919 = vrot.lane.b32.xlu0 %v2698, 16
    %v2920 = vpop.permute.xlu0 %2919
    %2921 = vrot.lane.b32.xlu0 %v2702, 16
    %v2922 = vpop.permute.xlu0 %2921
    %2923 = vrot.lane.b32.xlu0 %v2706, 16
    %v2924 = vpop.permute.xlu0 %2923
    %2925 = vrot.lane.b32.xlu0 %v2710, 16
    %v2926 = vpop.permute.xlu0 %2925
    %2927 = vrot.lane.b32.xlu0 %v2683, 16
    %v2928 = vpop.permute.xlu0 %2927
    %2929 = vrot.lane.b32.xlu0 %v2687, 16
    %v2930 = vpop.permute.xlu0 %2929
    %2931 = vrot.lane.b32.xlu0 %v2691, 16
    %v2932 = vpop.permute.xlu0 %2931
    %2933 = vrot.lane.b32.xlu0 %v2695, 16
    %v2934 = vpop.permute.xlu0 %2933
    %2935 = vrot.lane.b32.xlu0 %v2699, 16
    %v2936 = vpop.permute.xlu0 %2935
    %2937 = vrot.lane.b32.xlu0 %v2703, 16
    %v2938 = vpop.permute.xlu0 %2937
    %2939 = vrot.lane.b32.xlu0 %v2707, 16
    %v2940 = vpop.permute.xlu0 %2939
    %2941 = vrot.lane.b32.xlu0 %v2711, 16
    %v2942 = vpop.permute.xlu0 %2941
    %2943 = vrot.lane.b32.xlu0 %v2684, 16
    %v2944 = vpop.permute.xlu0 %2943
    %2945 = vrot.lane.b32.xlu0 %v2688, 16
    %v2946 = vpop.permute.xlu0 %2945
    %2947 = vrot.lane.b32.xlu0 %v2692, 16
    %v2948 = vpop.permute.xlu0 %2947
    %2949 = vrot.lane.b32.xlu0 %v2696, 16
    %v2950 = vpop.permute.xlu0 %2949
    %2951 = vrot.lane.b32.xlu0 %v2700, 16
    %v2952 = vpop.permute.xlu0 %2951
    %2953 = vrot.lane.b32.xlu0 %v2704, 16
    %v2954 = vpop.permute.xlu0 %2953
    %2955 = vrot.lane.b32.xlu0 %v2708, 16
    %v2956 = vpop.permute.xlu0 %2955
    %2957 = vrot.lane.b32.xlu0 %v2712, 16
    %v2958 = vpop.permute.xlu0 %2957
    %v2959 = vsel %vm346, %v2928, %v2944
    %v2960 = vsel %vm346, %v2930, %v2946
    %v2961 = vsel %vm346, %v2932, %v2948
    %v2962 = vsel %vm346, %v2934, %v2950
    %v2963 = vsel %vm346, %v2936, %v2952
    %v2964 = vsel %vm346, %v2938, %v2954
    %v2965 = vsel %vm346, %v2940, %v2956
    %v2966 = vsel %vm346, %v2942, %v2958
    %v2967 = vsel %vm346, %v2912, %v2928
    %v2968 = vsel %vm346, %v2914, %v2930
    %v2969 = vsel %vm346, %v2916, %v2932
    %v2970 = vsel %vm346, %v2918, %v2934
    %v2971 = vsel %vm346, %v2920, %v2936
    %v2972 = vsel %vm346, %v2922, %v2938
    %v2973 = vsel %vm346, %v2924, %v2940
    %v2974 = vsel %vm346, %v2926, %v2942
    %v2975 = vsel %vm346, %v2896, %v2912
    %v2976 = vsel %vm346, %v2898, %v2914
    %v2977 = vsel %vm346, %v2900, %v2916
    %v2978 = vsel %vm346, %v2902, %v2918
    %v2979 = vsel %vm346, %v2904, %v2920
    %v2980 = vsel %vm346, %v2906, %v2922
    %v2981 = vsel %vm346, %v2908, %v2924
    %v2982 = vsel %vm346, %v2910, %v2926
    %v2983 = vsel %vm346, %v2944, %v2896
    %v2984 = vsel %vm346, %v2946, %v2898
    %v2985 = vsel %vm346, %v2948, %v2900
    %v2986 = vsel %vm346, %v2950, %v2902
    %v2987 = vsel %vm346, %v2952, %v2904
    %v2988 = vsel %vm346, %v2954, %v2906
    %v2989 = vsel %vm346, %v2956, %v2908
    %v2990 = vsel %vm346, %v2958, %v2910
    %v2991 = vld [vmem:[%s379] sm:$0xf]
    %v2993 = vlaneseq
    %v2994 = vshrl.u32 %v2993, 7
    %v2995 = vsub.s32 0, %v2994
    %v2996 = vrot.slane %v2991, %v2995
    %v2997 = vlaneseq
    %v2998 = vshrl.u32 %v2997, 7
    %v2999 = vsub.s32 1, %v2998
    %v3000 = vrot.slane %v2991, %v2999
    %v3001 = vlaneseq
    %v3002 = vshrl.u32 %v3001, 7
    %v3003 = vsub.s32 2, %v3002
    %v3004 = vrot.slane %v2991, %v3003
    %v3005 = vlaneseq
    %v3006 = vshrl.u32 %v3005, 7
    %v3007 = vsub.s32 3, %v3006
    %v3008 = vrot.slane %v2991, %v3007
    %v3013 = vmul.f32 %v2983, %v2996
    %v3014 = vmul.f32 %v2975, %v3000
    %v3015 = vmul.f32 %v2967, %v3004
    %v3016 = vmul.f32 %v2959, %v3008
    %v3017 = vmul.f32 %v2984, %v2996
    %v3018 = vmul.f32 %v2976, %v3000
    %v3019 = vmul.f32 %v2968, %v3004
    %v3020 = vmul.f32 %v2960, %v3008
    %v3021 = vmul.f32 %v2985, %v2996
    %v3022 = vmul.f32 %v2977, %v3000
    %v3023 = vmul.f32 %v2969, %v3004
    %v3024 = vmul.f32 %v2961, %v3008
    %v3025 = vmul.f32 %v2986, %v2996
    %v3026 = vmul.f32 %v2978, %v3000
    %v3027 = vmul.f32 %v2970, %v3004
    %v3028 = vmul.f32 %v2962, %v3008
    %v3029 = vmul.f32 %v2987, %v2996
    %v3030 = vmul.f32 %v2979, %v3000
    %v3031 = vmul.f32 %v2971, %v3004
    %v3032 = vmul.f32 %v2963, %v3008
    %v3033 = vmul.f32 %v2988, %v2996
    %v3034 = vmul.f32 %v2980, %v3000
    %v3035 = vmul.f32 %v2972, %v3004
    %v3036 = vmul.f32 %v2964, %v3008
    %v3037 = vmul.f32 %v2989, %v2996
    %v3038 = vmul.f32 %v2981, %v3000
    %v3039 = vmul.f32 %v2973, %v3004
    %v3040 = vmul.f32 %v2965, %v3008
    %v3041 = vmul.f32 %v2990, %v2996
    %v3042 = vmul.f32 %v2982, %v3000
    %v3043 = vmul.f32 %v2974, %v3004
    %v3044 = vmul.f32 %v2966, %v3008
    %3045 = vst [vmem:[#allocation2 + $0x100] sm:$0xff] %v3013
    %3046 = vst [vmem:[#allocation2 + $0x108] sm:$0xff] %v3014
    %3047 = vst [vmem:[#allocation2 + $0x110] sm:$0xff] %v3015
    %3048 = vst [vmem:[#allocation2 + $0x118] sm:$0xff] %v3016
    %3049 = vst [vmem:[#allocation2 + $0x120] sm:$0xff] %v3017
    %3050 = vst [vmem:[#allocation2 + $0x128] sm:$0xff] %v3018
    %3051 = vst [vmem:[#allocation2 + $0x130] sm:$0xff] %v3019
    %3052 = vst [vmem:[#allocation2 + $0x138] sm:$0xff] %v3020
    %3053 = vst [vmem:[#allocation2 + $0x140] sm:$0xff] %v3021
    %3054 = vst [vmem:[#allocation2 + $0x148] sm:$0xff] %v3022
    %3055 = vst [vmem:[#allocation2 + $0x150] sm:$0xff] %v3023
    %3056 = vst [vmem:[#allocation2 + $0x158] sm:$0xff] %v3024
    %3057 = vst [vmem:[#allocation2 + $0x160] sm:$0xff] %v3025
    %3058 = vst [vmem:[#allocation2 + $0x168] sm:$0xff] %v3026
    %3059 = vst [vmem:[#allocation2 + $0x170] sm:$0xff] %v3027
    %3060 = vst [vmem:[#allocation2 + $0x178] sm:$0xff] %v3028
    %3061 = vst [vmem:[#allocation2 + $0x180] sm:$0xff] %v3029
    %3062 = vst [vmem:[#allocation2 + $0x188] sm:$0xff] %v3030
    %3063 = vst [vmem:[#allocation2 + $0x190] sm:$0xff] %v3031
    %3064 = vst [vmem:[#allocation2 + $0x198] sm:$0xff] %v3032
    %3065 = vst [vmem:[#allocation2 + $0x1a0] sm:$0xff] %v3033
    %3066 = vst [vmem:[#allocation2 + $0x1a8] sm:$0xff] %v3034
    %3067 = vst [vmem:[#allocation2 + $0x1b0] sm:$0xff] %v3035
    %3068 = vst [vmem:[#allocation2 + $0x1b8] sm:$0xff] %v3036
    %3069 = vst [vmem:[#allocation2 + $0x1c0] sm:$0xff] %v3037
    %3070 = vst [vmem:[#allocation2 + $0x1c8] sm:$0xff] %v3038
    %3071 = vst [vmem:[#allocation2 + $0x1d0] sm:$0xff] %v3039
    %3072 = vst [vmem:[#allocation2 + $0x1d8] sm:$0xff] %v3040
    %3073 = vst [vmem:[#allocation2 + $0x1e0] sm:$0xff] %v3041
    %3074 = vst [vmem:[#allocation2 + $0x1e8] sm:$0xff] %v3042
    %3075 = vst [vmem:[#allocation2 + $0x1f0] sm:$0xff] %v3043
    %3076 = vst [vmem:[#allocation2 + $0x1f8] sm:$0xff] %v3044
    %3077 = vrot.lane.b32.xlu0 %v2681, 15
    %v3078 = vpop.permute.xlu0 %3077
    %3079 = vrot.lane.b32.xlu0 %v2685, 15
    %v3080 = vpop.permute.xlu0 %3079
    %3081 = vrot.lane.b32.xlu0 %v2689, 15
    %v3082 = vpop.permute.xlu0 %3081
    %3083 = vrot.lane.b32.xlu0 %v2693, 15
    %v3084 = vpop.permute.xlu0 %3083
    %3085 = vrot.lane.b32.xlu0 %v2697, 15
    %v3086 = vpop.permute.xlu0 %3085
    %3087 = vrot.lane.b32.xlu0 %v2701, 15
    %v3088 = vpop.permute.xlu0 %3087
    %3089 = vrot.lane.b32.xlu0 %v2705, 15
    %v3090 = vpop.permute.xlu0 %3089
    %3091 = vrot.lane.b32.xlu0 %v2709, 15
    %v3092 = vpop.permute.xlu0 %3091
    %3093 = vrot.lane.b32.xlu0 %v2682, 15
    %v3094 = vpop.permute.xlu0 %3093
    %3095 = vrot.lane.b32.xlu0 %v2686, 15
    %v3096 = vpop.permute.xlu0 %3095
    %3097 = vrot.lane.b32.xlu0 %v2690, 15
    %v3098 = vpop.permute.xlu0 %3097
    %3099 = vrot.lane.b32.xlu0 %v2694, 15
    %v3100 = vpop.permute.xlu0 %3099
    %3101 = vrot.lane.b32.xlu0 %v2698, 15
    %v3102 = vpop.permute.xlu0 %3101
    %3103 = vrot.lane.b32.xlu0 %v2702, 15
    %v3104 = vpop.permute.xlu0 %3103
    %3105 = vrot.lane.b32.xlu0 %v2706, 15
    %v3106 = vpop.permute.xlu0 %3105
    %3107 = vrot.lane.b32.xlu0 %v2710, 15
    %v3108 = vpop.permute.xlu0 %3107
    %3109 = vrot.lane.b32.xlu0 %v2683, 15
    %v3110 = vpop.permute.xlu0 %3109
    %3111 = vrot.lane.b32.xlu0 %v2687, 15
    %v3112 = vpop.permute.xlu0 %3111
    %3113 = vrot.lane.b32.xlu0 %v2691, 15
    %v3114 = vpop.permute.xlu0 %3113
    %3115 = vrot.lane.b32.xlu0 %v2695, 15
    %v3116 = vpop.permute.xlu0 %3115
    %3117 = vrot.lane.b32.xlu0 %v2699, 15
    %v3118 = vpop.permute.xlu0 %3117
    %3119 = vrot.lane.b32.xlu0 %v2703, 15
    %v3120 = vpop.permute.xlu0 %3119
    %3121 = vrot.lane.b32.xlu0 %v2707, 15
    %v3122 = vpop.permute.xlu0 %3121
    %3123 = vrot.lane.b32.xlu0 %v2711, 15
    %v3124 = vpop.permute.xlu0 %3123
    %3125 = vrot.lane.b32.xlu0 %v2684, 15
    %v3126 = vpop.permute.xlu0 %3125
    %3127 = vrot.lane.b32.xlu0 %v2688, 15
    %v3128 = vpop.permute.xlu0 %3127
    %3129 = vrot.lane.b32.xlu0 %v2692, 15
    %v3130 = vpop.permute.xlu0 %3129
    %3131 = vrot.lane.b32.xlu0 %v2696, 15
    %v3132 = vpop.permute.xlu0 %3131
    %3133 = vrot.lane.b32.xlu0 %v2700, 15
    %v3134 = vpop.permute.xlu0 %3133
    %3135 = vrot.lane.b32.xlu0 %v2704, 15
    %v3136 = vpop.permute.xlu0 %3135
    %3137 = vrot.lane.b32.xlu0 %v2708, 15
    %v3138 = vpop.permute.xlu0 %3137
    %3139 = vrot.lane.b32.xlu0 %v2712, 15
    %v3140 = vpop.permute.xlu0 %3139
    %v3141 = vsel %vm530, %v3110, %v3126
    %v3142 = vsel %vm530, %v3112, %v3128
    %v3143 = vsel %vm530, %v3114, %v3130
    %v3144 = vsel %vm530, %v3116, %v3132
    %v3145 = vsel %vm530, %v3118, %v3134
    %v3146 = vsel %vm530, %v3120, %v3136
    %v3147 = vsel %vm530, %v3122, %v3138
    %v3148 = vsel %vm530, %v3124, %v3140
    %v3149 = vsel %vm530, %v3094, %v3110
    %v3150 = vsel %vm530, %v3096, %v3112
    %v3151 = vsel %vm530, %v3098, %v3114
    %v3152 = vsel %vm530, %v3100, %v3116
    %v3153 = vsel %vm530, %v3102, %v3118
    %v3154 = vsel %vm530, %v3104, %v3120
    %v3155 = vsel %vm530, %v3106, %v3122
    %v3156 = vsel %vm530, %v3108, %v3124
    %v3157 = vsel %vm530, %v3078, %v3094
    %v3158 = vsel %vm530, %v3080, %v3096
    %v3159 = vsel %vm530, %v3082, %v3098
    %v3160 = vsel %vm530, %v3084, %v3100
    %v3161 = vsel %vm530, %v3086, %v3102
    %v3162 = vsel %vm530, %v3088, %v3104
    %v3163 = vsel %vm530, %v3090, %v3106
    %v3164 = vsel %vm530, %v3092, %v3108
    %v3165 = vsel %vm530, %v3126, %v3078
    %v3166 = vsel %vm530, %v3128, %v3080
    %v3167 = vsel %vm530, %v3130, %v3082
    %v3168 = vsel %vm530, %v3132, %v3084
    %v3169 = vsel %vm530, %v3134, %v3086
    %v3170 = vsel %vm530, %v3136, %v3088
    %v3171 = vsel %vm530, %v3138, %v3090
    %v3172 = vsel %vm530, %v3140, %v3092
    %v3173 = vld [vmem:[%s563] sm:$0xf]
    %v3175 = vlaneseq
    %v3176 = vshrl.u32 %v3175, 7
    %v3177 = vsub.s32 0, %v3176
    %v3178 = vrot.slane %v3173, %v3177
    %v3179 = vlaneseq
    %v3180 = vshrl.u32 %v3179, 7
    %v3181 = vsub.s32 1, %v3180
    %v3182 = vrot.slane %v3173, %v3181
    %v3183 = vlaneseq
    %v3184 = vshrl.u32 %v3183, 7
    %v3185 = vsub.s32 2, %v3184
    %v3186 = vrot.slane %v3173, %v3185
    %v3187 = vlaneseq
    %v3188 = vshrl.u32 %v3187, 7
    %v3189 = vsub.s32 3, %v3188
    %v3190 = vrot.slane %v3173, %v3189
    %v3195 = vmul.f32 %v3165, %v3178
    %v3196 = vmul.f32 %v3157, %v3182
    %v3197 = vmul.f32 %v3149, %v3186
    %v3198 = vmul.f32 %v3141, %v3190
    %v3199 = vmul.f32 %v3166, %v3178
    %v3200 = vmul.f32 %v3158, %v3182
    %v3201 = vmul.f32 %v3150, %v3186
    %v3202 = vmul.f32 %v3142, %v3190
    %v3203 = vmul.f32 %v3167, %v3178
    %v3204 = vmul.f32 %v3159, %v3182
    %v3205 = vmul.f32 %v3151, %v3186
    %v3206 = vmul.f32 %v3143, %v3190
    %v3207 = vmul.f32 %v3168, %v3178
    %v3208 = vmul.f32 %v3160, %v3182
    %v3209 = vmul.f32 %v3152, %v3186
    %v3210 = vmul.f32 %v3144, %v3190
    %v3211 = vmul.f32 %v3169, %v3178
    %v3212 = vmul.f32 %v3161, %v3182
    %v3213 = vmul.f32 %v3153, %v3186
    %v3214 = vmul.f32 %v3145, %v3190
    %v3215 = vmul.f32 %v3170, %v3178
    %v3216 = vmul.f32 %v3162, %v3182
    %v3217 = vmul.f32 %v3154, %v3186
    %v3218 = vmul.f32 %v3146, %v3190
    %v3219 = vmul.f32 %v3171, %v3178
    %v3220 = vmul.f32 %v3163, %v3182
    %v3221 = vmul.f32 %v3155, %v3186
    %v3222 = vmul.f32 %v3147, %v3190
    %v3223 = vmul.f32 %v3172, %v3178
    %v3224 = vmul.f32 %v3164, %v3182
    %v3225 = vmul.f32 %v3156, %v3186
    %v3226 = vmul.f32 %v3148, %v3190
    %3227 = vst [vmem:[#allocation2 + $0x200] sm:$0xff] %v3195
    %3228 = vst [vmem:[#allocation2 + $0x208] sm:$0xff] %v3196
    %3229 = vst [vmem:[#allocation2 + $0x210] sm:$0xff] %v3197
    %3230 = vst [vmem:[#allocation2 + $0x218] sm:$0xff] %v3198
    %3231 = vst [vmem:[#allocation2 + $0x220] sm:$0xff] %v3199
    %3232 = vst [vmem:[#allocation2 + $0x228] sm:$0xff] %v3200
    %3233 = vst [vmem:[#allocation2 + $0x230] sm:$0xff] %v3201
    %3234 = vst [vmem:[#allocation2 + $0x238] sm:$0xff] %v3202
    %3235 = vst [vmem:[#allocation2 + $0x240] sm:$0xff] %v3203
    %3236 = vst [vmem:[#allocation2 + $0x248] sm:$0xff] %v3204
    %3237 = vst [vmem:[#allocation2 + $0x250] sm:$0xff] %v3205
    %3238 = vst [vmem:[#allocation2 + $0x258] sm:$0xff] %v3206
    %3239 = vst [vmem:[#allocation2 + $0x260] sm:$0xff] %v3207
    %3240 = vst [vmem:[#allocation2 + $0x268] sm:$0xff] %v3208
    %3241 = vst [vmem:[#allocation2 + $0x270] sm:$0xff] %v3209
    %3242 = vst [vmem:[#allocation2 + $0x278] sm:$0xff] %v3210
    %3243 = vst [vmem:[#allocation2 + $0x280] sm:$0xff] %v3211
    %3244 = vst [vmem:[#allocation2 + $0x288] sm:$0xff] %v3212
    %3245 = vst [vmem:[#allocation2 + $0x290] sm:$0xff] %v3213
    %3246 = vst [vmem:[#allocation2 + $0x298] sm:$0xff] %v3214
    %3247 = vst [vmem:[#allocation2 + $0x2a0] sm:$0xff] %v3215
    %3248 = vst [vmem:[#allocation2 + $0x2a8] sm:$0xff] %v3216
    %3249 = vst [vmem:[#allocation2 + $0x2b0] sm:$0xff] %v3217
    %3250 = vst [vmem:[#allocation2 + $0x2b8] sm:$0xff] %v3218
    %3251 = vst [vmem:[#allocation2 + $0x2c0] sm:$0xff] %v3219
    %3252 = vst [vmem:[#allocation2 + $0x2c8] sm:$0xff] %v3220
    %3253 = vst [vmem:[#allocation2 + $0x2d0] sm:$0xff] %v3221
    %3254 = vst [vmem:[#allocation2 + $0x2d8] sm:$0xff] %v3222
    %3255 = vst [vmem:[#allocation2 + $0x2e0] sm:$0xff] %v3223
    %3256 = vst [vmem:[#allocation2 + $0x2e8] sm:$0xff] %v3224
    %3257 = vst [vmem:[#allocation2 + $0x2f0] sm:$0xff] %v3225
    %3258 = vst [vmem:[#allocation2 + $0x2f8] sm:$0xff] %v3226
    %3259 = vrot.lane.b32.xlu0 %v2681, 1
    %v3260 = vpop.permute.xlu0 %3259
    %3261 = vrot.lane.b32.xlu0 %v2685, 1
    %v3262 = vpop.permute.xlu0 %3261
    %3263 = vrot.lane.b32.xlu0 %v2689, 1
    %v3264 = vpop.permute.xlu0 %3263
    %3265 = vrot.lane.b32.xlu0 %v2693, 1
    %v3266 = vpop.permute.xlu0 %3265
    %3267 = vrot.lane.b32.xlu0 %v2697, 1
    %v3268 = vpop.permute.xlu0 %3267
    %3269 = vrot.lane.b32.xlu0 %v2701, 1
    %v3270 = vpop.permute.xlu0 %3269
    %3271 = vrot.lane.b32.xlu0 %v2705, 1
    %v3272 = vpop.permute.xlu0 %3271
    %3273 = vrot.lane.b32.xlu0 %v2709, 1
    %v3274 = vpop.permute.xlu0 %3273
    %3275 = vrot.lane.b32.xlu0 %v2682, 1
    %v3276 = vpop.permute.xlu0 %3275
    %3277 = vrot.lane.b32.xlu0 %v2686, 1
    %v3278 = vpop.permute.xlu0 %3277
    %3279 = vrot.lane.b32.xlu0 %v2690, 1
    %v3280 = vpop.permute.xlu0 %3279
    %3281 = vrot.lane.b32.xlu0 %v2694, 1
    %v3282 = vpop.permute.xlu0 %3281
    %3283 = vrot.lane.b32.xlu0 %v2698, 1
    %v3284 = vpop.permute.xlu0 %3283
    %3285 = vrot.lane.b32.xlu0 %v2702, 1
    %v3286 = vpop.permute.xlu0 %3285
    %3287 = vrot.lane.b32.xlu0 %v2706, 1
    %v3288 = vpop.permute.xlu0 %3287
    %3289 = vrot.lane.b32.xlu0 %v2710, 1
    %v3290 = vpop.permute.xlu0 %3289
    %3291 = vrot.lane.b32.xlu0 %v2683, 1
    %v3292 = vpop.permute.xlu0 %3291
    %3293 = vrot.lane.b32.xlu0 %v2687, 1
    %v3294 = vpop.permute.xlu0 %3293
    %3295 = vrot.lane.b32.xlu0 %v2691, 1
    %v3296 = vpop.permute.xlu0 %3295
    %3297 = vrot.lane.b32.xlu0 %v2695, 1
    %v3298 = vpop.permute.xlu0 %3297
    %3299 = vrot.lane.b32.xlu0 %v2699, 1
    %v3300 = vpop.permute.xlu0 %3299
    %3301 = vrot.lane.b32.xlu0 %v2703, 1
    %v3302 = vpop.permute.xlu0 %3301
    %3303 = vrot.lane.b32.xlu0 %v2707, 1
    %v3304 = vpop.permute.xlu0 %3303
    %3305 = vrot.lane.b32.xlu0 %v2711, 1
    %v3306 = vpop.permute.xlu0 %3305
    %3307 = vrot.lane.b32.xlu0 %v2684, 1
    %v3308 = vpop.permute.xlu0 %3307
    %3309 = vrot.lane.b32.xlu0 %v2688, 1
    %v3310 = vpop.permute.xlu0 %3309
    %3311 = vrot.lane.b32.xlu0 %v2692, 1
    %v3312 = vpop.permute.xlu0 %3311
    %3313 = vrot.lane.b32.xlu0 %v2696, 1
    %v3314 = vpop.permute.xlu0 %3313
    %3315 = vrot.lane.b32.xlu0 %v2700, 1
    %v3316 = vpop.permute.xlu0 %3315
    %3317 = vrot.lane.b32.xlu0 %v2704, 1
    %v3318 = vpop.permute.xlu0 %3317
    %3319 = vrot.lane.b32.xlu0 %v2708, 1
    %v3320 = vpop.permute.xlu0 %3319
    %3321 = vrot.lane.b32.xlu0 %v2712, 1
    %v3322 = vpop.permute.xlu0 %3321
    %v3323 = vsel %vm714, %v3292, %v3308
    %v3324 = vsel %vm714, %v3294, %v3310
    %v3325 = vsel %vm714, %v3296, %v3312
    %v3326 = vsel %vm714, %v3298, %v3314
    %v3327 = vsel %vm714, %v3300, %v3316
    %v3328 = vsel %vm714, %v3302, %v3318
    %v3329 = vsel %vm714, %v3304, %v3320
    %v3330 = vsel %vm714, %v3306, %v3322
    %v3331 = vsel %vm714, %v3276, %v3292
    %v3332 = vsel %vm714, %v3278, %v3294
    %v3333 = vsel %vm714, %v3280, %v3296
    %v3334 = vsel %vm714, %v3282, %v3298
    %v3335 = vsel %vm714, %v3284, %v3300
    %v3336 = vsel %vm714, %v3286, %v3302
    %v3337 = vsel %vm714, %v3288, %v3304
    %v3338 = vsel %vm714, %v3290, %v3306
    %v3339 = vsel %vm714, %v3260, %v3276
    %v3340 = vsel %vm714, %v3262, %v3278
    %v3341 = vsel %vm714, %v3264, %v3280
    %v3342 = vsel %vm714, %v3266, %v3282
    %v3343 = vsel %vm714, %v3268, %v3284
    %v3344 = vsel %vm714, %v3270, %v3286
    %v3345 = vsel %vm714, %v3272, %v3288
    %v3346 = vsel %vm714, %v3274, %v3290
    %v3347 = vsel %vm714, %v3308, %v3260
    %v3348 = vsel %vm714, %v3310, %v3262
    %v3349 = vsel %vm714, %v3312, %v3264
    %v3350 = vsel %vm714, %v3314, %v3266
    %v3351 = vsel %vm714, %v3316, %v3268
    %v3352 = vsel %vm714, %v3318, %v3270
    %v3353 = vsel %vm714, %v3320, %v3272
    %v3354 = vsel %vm714, %v3322, %v3274
    %v3355 = vld [vmem:[%s747] sm:$0xf]
    %v3357 = vlaneseq
    %v3358 = vshrl.u32 %v3357, 7
    %v3359 = vsub.s32 0, %v3358
    %v3360 = vrot.slane %v3355, %v3359
    %v3361 = vlaneseq
    %v3362 = vshrl.u32 %v3361, 7
    %v3363 = vsub.s32 1, %v3362
    %v3364 = vrot.slane %v3355, %v3363
    %v3365 = vlaneseq
    %v3366 = vshrl.u32 %v3365, 7
    %v3367 = vsub.s32 2, %v3366
    %v3368 = vrot.slane %v3355, %v3367
    %v3369 = vlaneseq
    %v3370 = vshrl.u32 %v3369, 7
    %v3371 = vsub.s32 3, %v3370
    %v3372 = vrot.slane %v3355, %v3371
    %v3377 = vmul.f32 %v3347, %v3360
    %v3378 = vmul.f32 %v3339, %v3364
    %v3379 = vmul.f32 %v3331, %v3368
    %v3380 = vmul.f32 %v3323, %v3372
    %v3381 = vmul.f32 %v3348, %v3360
    %v3382 = vmul.f32 %v3340, %v3364
    %v3383 = vmul.f32 %v3332, %v3368
    %v3384 = vmul.f32 %v3324, %v3372
    %v3385 = vmul.f32 %v3349, %v3360
    %v3386 = vmul.f32 %v3341, %v3364
    %v3387 = vmul.f32 %v3333, %v3368
    %v3388 = vmul.f32 %v3325, %v3372
    %v3389 = vmul.f32 %v3350, %v3360
    %v3390 = vmul.f32 %v3342, %v3364
    %v3391 = vmul.f32 %v3334, %v3368
    %v3392 = vmul.f32 %v3326, %v3372
    %v3393 = vmul.f32 %v3351, %v3360
    %v3394 = vmul.f32 %v3343, %v3364
    %v3395 = vmul.f32 %v3335, %v3368
    %v3396 = vmul.f32 %v3327, %v3372
    %v3397 = vmul.f32 %v3352, %v3360
    %v3398 = vmul.f32 %v3344, %v3364
    %v3399 = vmul.f32 %v3336, %v3368
    %v3400 = vmul.f32 %v3328, %v3372
    %v3401 = vmul.f32 %v3353, %v3360
    %v3402 = vmul.f32 %v3345, %v3364
    %v3403 = vmul.f32 %v3337, %v3368
    %v3404 = vmul.f32 %v3329, %v3372
    %v3405 = vmul.f32 %v3354, %v3360
    %v3406 = vmul.f32 %v3346, %v3364
    %v3407 = vmul.f32 %v3338, %v3368
    %v3408 = vmul.f32 %v3330, %v3372
    %3409 = vst [vmem:[#allocation2 + $0x300] sm:$0xff] %v3377
    %3410 = vst [vmem:[#allocation2 + $0x308] sm:$0xff] %v3378
    %3411 = vst [vmem:[#allocation2 + $0x310] sm:$0xff] %v3379
    %3412 = vst [vmem:[#allocation2 + $0x318] sm:$0xff] %v3380
    %3413 = vst [vmem:[#allocation2 + $0x320] sm:$0xff] %v3381
    %3414 = vst [vmem:[#allocation2 + $0x328] sm:$0xff] %v3382
    %3415 = vst [vmem:[#allocation2 + $0x330] sm:$0xff] %v3383
    %3416 = vst [vmem:[#allocation2 + $0x338] sm:$0xff] %v3384
    %3417 = vst [vmem:[#allocation2 + $0x340] sm:$0xff] %v3385
    %3418 = vst [vmem:[#allocation2 + $0x348] sm:$0xff] %v3386
    %3419 = vst [vmem:[#allocation2 + $0x350] sm:$0xff] %v3387
    %3420 = vst [vmem:[#allocation2 + $0x358] sm:$0xff] %v3388
    %3421 = vst [vmem:[#allocation2 + $0x360] sm:$0xff] %v3389
    %3422 = vst [vmem:[#allocation2 + $0x368] sm:$0xff] %v3390
    %3423 = vst [vmem:[#allocation2 + $0x370] sm:$0xff] %v3391
    %3424 = vst [vmem:[#allocation2 + $0x378] sm:$0xff] %v3392
    %3425 = vst [vmem:[#allocation2 + $0x380] sm:$0xff] %v3393
    %3426 = vst [vmem:[#allocation2 + $0x388] sm:$0xff] %v3394
    %3427 = vst [vmem:[#allocation2 + $0x390] sm:$0xff] %v3395
    %3428 = vst [vmem:[#allocation2 + $0x398] sm:$0xff] %v3396
    %3429 = vst [vmem:[#allocation2 + $0x3a0] sm:$0xff] %v3397
    %3430 = vst [vmem:[#allocation2 + $0x3a8] sm:$0xff] %v3398
    %3431 = vst [vmem:[#allocation2 + $0x3b0] sm:$0xff] %v3399
    %3432 = vst [vmem:[#allocation2 + $0x3b8] sm:$0xff] %v3400
    %3433 = vst [vmem:[#allocation2 + $0x3c0] sm:$0xff] %v3401
    %3434 = vst [vmem:[#allocation2 + $0x3c8] sm:$0xff] %v3402
    %3435 = vst [vmem:[#allocation2 + $0x3d0] sm:$0xff] %v3403
    %3436 = vst [vmem:[#allocation2 + $0x3d8] sm:$0xff] %v3404
    %3437 = vst [vmem:[#allocation2 + $0x3e0] sm:$0xff] %v3405
    %3438 = vst [vmem:[#allocation2 + $0x3e8] sm:$0xff] %v3406
    %3439 = vst [vmem:[#allocation2 + $0x3f0] sm:$0xff] %v3407
    %3440 = vst [vmem:[#allocation2 + $0x3f8] sm:$0xff] %v3408
    %3441 = vst [vmem:[#allocation2 + $0x400] sm:$0xff] %v2681
    %3442 = vst [vmem:[#allocation2 + $0x408] sm:$0xff] %v2682
    %3443 = vst [vmem:[#allocation2 + $0x410] sm:$0xff] %v2683
    %3444 = vst [vmem:[#allocation2 + $0x418] sm:$0xff] %v2684
    %3445 = vst [vmem:[#allocation2 + $0x420] sm:$0xff] %v2685
    %3446 = vst [vmem:[#allocation2 + $0x428] sm:$0xff] %v2686
    %3447 = vst [vmem:[#allocation2 + $0x430] sm:$0xff] %v2687
    %3448 = vst [vmem:[#allocation2 + $0x438] sm:$0xff] %v2688
    %3449 = vst [vmem:[#allocation2 + $0x440] sm:$0xff] %v2689
    %3450 = vst [vmem:[#allocation2 + $0x448] sm:$0xff] %v2690
    %3451 = vst [vmem:[#allocation2 + $0x450] sm:$0xff] %v2691
    %3452 = vst [vmem:[#allocation2 + $0x458] sm:$0xff] %v2692
    %3453 = vst [vmem:[#allocation2 + $0x460] sm:$0xff] %v2693
    %3454 = vst [vmem:[#allocation2 + $0x468] sm:$0xff] %v2694
    %3455 = vst [vmem:[#allocation2 + $0x470] sm:$0xff] %v2695
    %3456 = vst [vmem:[#allocation2 + $0x478] sm:$0xff] %v2696
    %3457 = vst [vmem:[#allocation2 + $0x480] sm:$0xff] %v2697
    %3458 = vst [vmem:[#allocation2 + $0x488] sm:$0xff] %v2698
    %3459 = vst [vmem:[#allocation2 + $0x490] sm:$0xff] %v2699
    %3460 = vst [vmem:[#allocation2 + $0x498] sm:$0xff] %v2700
    %3461 = vst [vmem:[#allocation2 + $0x4a0] sm:$0xff] %v2701
    %3462 = vst [vmem:[#allocation2 + $0x4a8] sm:$0xff] %v2702
    %3463 = vst [vmem:[#allocation2 + $0x4b0] sm:$0xff] %v2703
    %3464 = vst [vmem:[#allocation2 + $0x4b8] sm:$0xff] %v2704
    %3465 = vst [vmem:[#allocation2 + $0x4c0] sm:$0xff] %v2705
    %3466 = vst [vmem:[#allocation2 + $0x4c8] sm:$0xff] %v2706
    %3467 = vst [vmem:[#allocation2 + $0x4d0] sm:$0xff] %v2707
    %3468 = vst [vmem:[#allocation2 + $0x4d8] sm:$0xff] %v2708
    %3469 = vst [vmem:[#allocation2 + $0x4e0] sm:$0xff] %v2709
    %3470 = vst [vmem:[#allocation2 + $0x4e8] sm:$0xff] %v2710
    %3471 = vst [vmem:[#allocation2 + $0x4f0] sm:$0xff] %v2711
    %3472 = vst [vmem:[#allocation2 + $0x4f8] sm:$0xff] %v2712
    %3473 = vrot.lane.b32.xlu0 %v2681, 127
    %v3474 = vpop.permute.xlu0 %3473
    %3475 = vrot.lane.b32.xlu0 %v2685, 127
    %v3476 = vpop.permute.xlu0 %3475
    %3477 = vrot.lane.b32.xlu0 %v2689, 127
    %v3478 = vpop.permute.xlu0 %3477
    %3479 = vrot.lane.b32.xlu0 %v2693, 127
    %v3480 = vpop.permute.xlu0 %3479
    %3481 = vrot.lane.b32.xlu0 %v2697, 127
    %v3482 = vpop.permute.xlu0 %3481
    %3483 = vrot.lane.b32.xlu0 %v2701, 127
    %v3484 = vpop.permute.xlu0 %3483
    %3485 = vrot.lane.b32.xlu0 %v2705, 127
    %v3486 = vpop.permute.xlu0 %3485
    %3487 = vrot.lane.b32.xlu0 %v2709, 127
    %v3488 = vpop.permute.xlu0 %3487
    %3489 = vrot.lane.b32.xlu0 %v2682, 127
    %v3490 = vpop.permute.xlu0 %3489
    %3491 = vrot.lane.b32.xlu0 %v2686, 127
    %v3492 = vpop.permute.xlu0 %3491
    %3493 = vrot.lane.b32.xlu0 %v2690, 127
    %v3494 = vpop.permute.xlu0 %3493
    %3495 = vrot.lane.b32.xlu0 %v2694, 127
    %v3496 = vpop.permute.xlu0 %3495
    %3497 = vrot.lane.b32.xlu0 %v2698, 127
    %v3498 = vpop.permute.xlu0 %3497
    %3499 = vrot.lane.b32.xlu0 %v2702, 127
    %v3500 = vpop.permute.xlu0 %3499
    %3501 = vrot.lane.b32.xlu0 %v2706, 127
    %v3502 = vpop.permute.xlu0 %3501
    %3503 = vrot.lane.b32.xlu0 %v2710, 127
    %v3504 = vpop.permute.xlu0 %3503
    %3505 = vrot.lane.b32.xlu0 %v2683, 127
    %v3506 = vpop.permute.xlu0 %3505
    %3507 = vrot.lane.b32.xlu0 %v2687, 127
    %v3508 = vpop.permute.xlu0 %3507
    %3509 = vrot.lane.b32.xlu0 %v2691, 127
    %v3510 = vpop.permute.xlu0 %3509
    %3511 = vrot.lane.b32.xlu0 %v2695, 127
    %v3512 = vpop.permute.xlu0 %3511
    %3513 = vrot.lane.b32.xlu0 %v2699, 127
    %v3514 = vpop.permute.xlu0 %3513
    %3515 = vrot.lane.b32.xlu0 %v2703, 127
    %v3516 = vpop.permute.xlu0 %3515
    %3517 = vrot.lane.b32.xlu0 %v2707, 127
    %v3518 = vpop.permute.xlu0 %3517
    %3519 = vrot.lane.b32.xlu0 %v2711, 127
    %v3520 = vpop.permute.xlu0 %3519
    %3521 = vrot.lane.b32.xlu0 %v2684, 127
    %v3522 = vpop.permute.xlu0 %3521
    %3523 = vrot.lane.b32.xlu0 %v2688, 127
    %v3524 = vpop.permute.xlu0 %3523
    %3525 = vrot.lane.b32.xlu0 %v2692, 127
    %v3526 = vpop.permute.xlu0 %3525
    %3527 = vrot.lane.b32.xlu0 %v2696, 127
    %v3528 = vpop.permute.xlu0 %3527
    %3529 = vrot.lane.b32.xlu0 %v2700, 127
    %v3530 = vpop.permute.xlu0 %3529
    %3531 = vrot.lane.b32.xlu0 %v2704, 127
    %v3532 = vpop.permute.xlu0 %3531
    %3533 = vrot.lane.b32.xlu0 %v2708, 127
    %v3534 = vpop.permute.xlu0 %3533
    %3535 = vrot.lane.b32.xlu0 %v2712, 127
    %v3536 = vpop.permute.xlu0 %3535
    %v3537 = vsel %vm930, %v3506, %v3522
    %v3538 = vsel %vm930, %v3508, %v3524
    %v3539 = vsel %vm930, %v3510, %v3526
    %v3540 = vsel %vm930, %v3512, %v3528
    %v3541 = vsel %vm930, %v3514, %v3530
    %v3542 = vsel %vm930, %v3516, %v3532
    %v3543 = vsel %vm930, %v3518, %v3534
    %v3544 = vsel %vm930, %v3520, %v3536
    %v3545 = vsel %vm930, %v3490, %v3506
    %v3546 = vsel %vm930, %v3492, %v3508
    %v3547 = vsel %vm930, %v3494, %v3510
    %v3548 = vsel %vm930, %v3496, %v3512
    %v3549 = vsel %vm930, %v3498, %v3514
    %v3550 = vsel %vm930, %v3500, %v3516
    %v3551 = vsel %vm930, %v3502, %v3518
    %v3552 = vsel %vm930, %v3504, %v3520
    %v3553 = vsel %vm930, %v3474, %v3490
    %v3554 = vsel %vm930, %v3476, %v3492
    %v3555 = vsel %vm930, %v3478, %v3494
    %v3556 = vsel %vm930, %v3480, %v3496
    %v3557 = vsel %vm930, %v3482, %v3498
    %v3558 = vsel %vm930, %v3484, %v3500
    %v3559 = vsel %vm930, %v3486, %v3502
    %v3560 = vsel %vm930, %v3488, %v3504
    %v3561 = vsel %vm930, %v3522, %v3474
    %v3562 = vsel %vm930, %v3524, %v3476
    %v3563 = vsel %vm930, %v3526, %v3478
    %v3564 = vsel %vm930, %v3528, %v3480
    %v3565 = vsel %vm930, %v3530, %v3482
    %v3566 = vsel %vm930, %v3532, %v3484
    %v3567 = vsel %vm930, %v3534, %v3486
    %v3568 = vsel %vm930, %v3536, %v3488
    %v3569 = vld [vmem:[%s963] sm:$0xf]
    %v3571 = vlaneseq
    %v3572 = vshrl.u32 %v3571, 7
    %v3573 = vsub.s32 0, %v3572
    %v3574 = vrot.slane %v3569, %v3573
    %v3575 = vlaneseq
    %v3576 = vshrl.u32 %v3575, 7
    %v3577 = vsub.s32 1, %v3576
    %v3578 = vrot.slane %v3569, %v3577
    %v3579 = vlaneseq
    %v3580 = vshrl.u32 %v3579, 7
    %v3581 = vsub.s32 2, %v3580
    %v3582 = vrot.slane %v3569, %v3581
    %v3583 = vlaneseq
    %v3584 = vshrl.u32 %v3583, 7
    %v3585 = vsub.s32 3, %v3584
    %v3586 = vrot.slane %v3569, %v3585
    %v3591 = vmul.f32 %v3553, %v3574
    %v3592 = vmul.f32 %v3545, %v3578
    %v3593 = vmul.f32 %v3537, %v3582
    %v3594 = vmul.f32 %v3561, %v3586
    %v3595 = vmul.f32 %v3554, %v3574
    %v3596 = vmul.f32 %v3546, %v3578
    %v3597 = vmul.f32 %v3538, %v3582
    %v3598 = vmul.f32 %v3562, %v3586
    %v3599 = vmul.f32 %v3555, %v3574
    %v3600 = vmul.f32 %v3547, %v3578
    %v3601 = vmul.f32 %v3539, %v3582
    %v3602 = vmul.f32 %v3563, %v3586
    %v3603 = vmul.f32 %v3556, %v3574
    %v3604 = vmul.f32 %v3548, %v3578
    %v3605 = vmul.f32 %v3540, %v3582
    %v3606 = vmul.f32 %v3564, %v3586
    %v3607 = vmul.f32 %v3557, %v3574
    %v3608 = vmul.f32 %v3549, %v3578
    %v3609 = vmul.f32 %v3541, %v3582
    %v3610 = vmul.f32 %v3565, %v3586
    %v3611 = vmul.f32 %v3558, %v3574
    %v3612 = vmul.f32 %v3550, %v3578
    %v3613 = vmul.f32 %v3542, %v3582
    %v3614 = vmul.f32 %v3566, %v3586
    %v3615 = vmul.f32 %v3559, %v3574
    %v3616 = vmul.f32 %v3551, %v3578
    %v3617 = vmul.f32 %v3543, %v3582
    %v3618 = vmul.f32 %v3567, %v3586
    %v3619 = vmul.f32 %v3560, %v3574
    %v3620 = vmul.f32 %v3552, %v3578
    %v3621 = vmul.f32 %v3544, %v3582
    %v3622 = vmul.f32 %v3568, %v3586
    %3623 = vst [vmem:[#allocation2 + $0x500] sm:$0xff] %v3591
    %3624 = vst [vmem:[#allocation2 + $0x508] sm:$0xff] %v3592
    %3625 = vst [vmem:[#allocation2 + $0x510] sm:$0xff] %v3593
    %3626 = vst [vmem:[#allocation2 + $0x518] sm:$0xff] %v3594
    %3627 = vst [vmem:[#allocation2 + $0x520] sm:$0xff] %v3595
    %3628 = vst [vmem:[#allocation2 + $0x528] sm:$0xff] %v3596
    %3629 = vst [vmem:[#allocation2 + $0x530] sm:$0xff] %v3597
    %3630 = vst [vmem:[#allocation2 + $0x538] sm:$0xff] %v3598
    %3631 = vst [vmem:[#allocation2 + $0x540] sm:$0xff] %v3599
    %3632 = vst [vmem:[#allocation2 + $0x548] sm:$0xff] %v3600
    %3633 = vst [vmem:[#allocation2 + $0x550] sm:$0xff] %v3601
    %3634 = vst [vmem:[#allocation2 + $0x558] sm:$0xff] %v3602
    %3635 = vst [vmem:[#allocation2 + $0x560] sm:$0xff] %v3603
    %3636 = vst [vmem:[#allocation2 + $0x568] sm:$0xff] %v3604
    %3637 = vst [vmem:[#allocation2 + $0x570] sm:$0xff] %v3605
    %3638 = vst [vmem:[#allocation2 + $0x578] sm:$0xff] %v3606
    %3639 = vst [vmem:[#allocation2 + $0x580] sm:$0xff] %v3607
    %3640 = vst [vmem:[#allocation2 + $0x588] sm:$0xff] %v3608
    %3641 = vst [vmem:[#allocation2 + $0x590] sm:$0xff] %v3609
    %3642 = vst [vmem:[#allocation2 + $0x598] sm:$0xff] %v3610
    %3643 = vst [vmem:[#allocation2 + $0x5a0] sm:$0xff] %v3611
    %3644 = vst [vmem:[#allocation2 + $0x5a8] sm:$0xff] %v3612
    %3645 = vst [vmem:[#allocation2 + $0x5b0] sm:$0xff] %v3613
    %3646 = vst [vmem:[#allocation2 + $0x5b8] sm:$0xff] %v3614
    %3647 = vst [vmem:[#allocation2 + $0x5c0] sm:$0xff] %v3615
    %3648 = vst [vmem:[#allocation2 + $0x5c8] sm:$0xff] %v3616
    %3649 = vst [vmem:[#allocation2 + $0x5d0] sm:$0xff] %v3617
    %3650 = vst [vmem:[#allocation2 + $0x5d8] sm:$0xff] %v3618
    %3651 = vst [vmem:[#allocation2 + $0x5e0] sm:$0xff] %v3619
    %3652 = vst [vmem:[#allocation2 + $0x5e8] sm:$0xff] %v3620
    %3653 = vst [vmem:[#allocation2 + $0x5f0] sm:$0xff] %v3621
    %3654 = vst [vmem:[#allocation2 + $0x5f8] sm:$0xff] %v3622
    %3655 = vrot.lane.b32.xlu0 %v2681, 113
    %v3656 = vpop.permute.xlu0 %3655
    %3657 = vrot.lane.b32.xlu0 %v2685, 113
    %v3658 = vpop.permute.xlu0 %3657
    %3659 = vrot.lane.b32.xlu0 %v2689, 113
    %v3660 = vpop.permute.xlu0 %3659
    %3661 = vrot.lane.b32.xlu0 %v2693, 113
    %v3662 = vpop.permute.xlu0 %3661
    %3663 = vrot.lane.b32.xlu0 %v2697, 113
    %v3664 = vpop.permute.xlu0 %3663
    %3665 = vrot.lane.b32.xlu0 %v2701, 113
    %v3666 = vpop.permute.xlu0 %3665
    %3667 = vrot.lane.b32.xlu0 %v2705, 113
    %v3668 = vpop.permute.xlu0 %3667
    %3669 = vrot.lane.b32.xlu0 %v2709, 113
    %v3670 = vpop.permute.xlu0 %3669
    %3671 = vrot.lane.b32.xlu0 %v2682, 113
    %v3672 = vpop.permute.xlu0 %3671
    %3673 = vrot.lane.b32.xlu0 %v2686, 113
    %v3674 = vpop.permute.xlu0 %3673
    %3675 = vrot.lane.b32.xlu0 %v2690, 113
    %v3676 = vpop.permute.xlu0 %3675
    %3677 = vrot.lane.b32.xlu0 %v2694, 113
    %v3678 = vpop.permute.xlu0 %3677
    %3679 = vrot.lane.b32.xlu0 %v2698, 113
    %v3680 = vpop.permute.xlu0 %3679
    %3681 = vrot.lane.b32.xlu0 %v2702, 113
    %v3682 = vpop.permute.xlu0 %3681
    %3683 = vrot.lane.b32.xlu0 %v2706, 113
    %v3684 = vpop.permute.xlu0 %3683
    %3685 = vrot.lane.b32.xlu0 %v2710, 113
    %v3686 = vpop.permute.xlu0 %3685
    %3687 = vrot.lane.b32.xlu0 %v2683, 113
    %v3688 = vpop.permute.xlu0 %3687
    %3689 = vrot.lane.b32.xlu0 %v2687, 113
    %v3690 = vpop.permute.xlu0 %3689
    %3691 = vrot.lane.b32.xlu0 %v2691, 113
    %v3692 = vpop.permute.xlu0 %3691
    %3693 = vrot.lane.b32.xlu0 %v2695, 113
    %v3694 = vpop.permute.xlu0 %3693
    %3695 = vrot.lane.b32.xlu0 %v2699, 113
    %v3696 = vpop.permute.xlu0 %3695
    %3697 = vrot.lane.b32.xlu0 %v2703, 113
    %v3698 = vpop.permute.xlu0 %3697
    %3699 = vrot.lane.b32.xlu0 %v2707, 113
    %v3700 = vpop.permute.xlu0 %3699
    %3701 = vrot.lane.b32.xlu0 %v2711, 113
    %v3702 = vpop.permute.xlu0 %3701
    %3703 = vrot.lane.b32.xlu0 %v2684, 113
    %v3704 = vpop.permute.xlu0 %3703
    %3705 = vrot.lane.b32.xlu0 %v2688, 113
    %v3706 = vpop.permute.xlu0 %3705
    %3707 = vrot.lane.b32.xlu0 %v2692, 113
    %v3708 = vpop.permute.xlu0 %3707
    %3709 = vrot.lane.b32.xlu0 %v2696, 113
    %v3710 = vpop.permute.xlu0 %3709
    %3711 = vrot.lane.b32.xlu0 %v2700, 113
    %v3712 = vpop.permute.xlu0 %3711
    %3713 = vrot.lane.b32.xlu0 %v2704, 113
    %v3714 = vpop.permute.xlu0 %3713
    %3715 = vrot.lane.b32.xlu0 %v2708, 113
    %v3716 = vpop.permute.xlu0 %3715
    %3717 = vrot.lane.b32.xlu0 %v2712, 113
    %v3718 = vpop.permute.xlu0 %3717
    %v3719 = vsel %vm1114, %v3688, %v3704
    %v3720 = vsel %vm1114, %v3690, %v3706
    %v3721 = vsel %vm1114, %v3692, %v3708
    %v3722 = vsel %vm1114, %v3694, %v3710
    %v3723 = vsel %vm1114, %v3696, %v3712
    %v3724 = vsel %vm1114, %v3698, %v3714
    %v3725 = vsel %vm1114, %v3700, %v3716
    %v3726 = vsel %vm1114, %v3702, %v3718
    %v3727 = vsel %vm1114, %v3672, %v3688
    %v3728 = vsel %vm1114, %v3674, %v3690
    %v3729 = vsel %vm1114, %v3676, %v3692
    %v3730 = vsel %vm1114, %v3678, %v3694
    %v3731 = vsel %vm1114, %v3680, %v3696
    %v3732 = vsel %vm1114, %v3682, %v3698
    %v3733 = vsel %vm1114, %v3684, %v3700
    %v3734 = vsel %vm1114, %v3686, %v3702
    %v3735 = vsel %vm1114, %v3656, %v3672
    %v3736 = vsel %vm1114, %v3658, %v3674
    %v3737 = vsel %vm1114, %v3660, %v3676
    %v3738 = vsel %vm1114, %v3662, %v3678
    %v3739 = vsel %vm1114, %v3664, %v3680
    %v3740 = vsel %vm1114, %v3666, %v3682
    %v3741 = vsel %vm1114, %v3668, %v3684
    %v3742 = vsel %vm1114, %v3670, %v3686
    %v3743 = vsel %vm1114, %v3704, %v3656
    %v3744 = vsel %vm1114, %v3706, %v3658
    %v3745 = vsel %vm1114, %v3708, %v3660
    %v3746 = vsel %vm1114, %v3710, %v3662
    %v3747 = vsel %vm1114, %v3712, %v3664
    %v3748 = vsel %vm1114, %v3714, %v3666
    %v3749 = vsel %vm1114, %v3716, %v3668
    %v3750 = vsel %vm1114, %v3718, %v3670
    %v3751 = vld [vmem:[%s1147] sm:$0xf]
    %v3753 = vlaneseq
    %v3754 = vshrl.u32 %v3753, 7
    %v3755 = vsub.s32 0, %v3754
    %v3756 = vrot.slane %v3751, %v3755
    %v3757 = vlaneseq
    %v3758 = vshrl.u32 %v3757, 7
    %v3759 = vsub.s32 1, %v3758
    %v3760 = vrot.slane %v3751, %v3759
    %v3761 = vlaneseq
    %v3762 = vshrl.u32 %v3761, 7
    %v3763 = vsub.s32 2, %v3762
    %v3764 = vrot.slane %v3751, %v3763
    %v3765 = vlaneseq
    %v3766 = vshrl.u32 %v3765, 7
    %v3767 = vsub.s32 3, %v3766
    %v3768 = vrot.slane %v3751, %v3767
    %v3773 = vmul.f32 %v3735, %v3756
    %v3774 = vmul.f32 %v3727, %v3760
    %v3775 = vmul.f32 %v3719, %v3764
    %v3776 = vmul.f32 %v3743, %v3768
    %v3777 = vmul.f32 %v3736, %v3756
    %v3778 = vmul.f32 %v3728, %v3760
    %v3779 = vmul.f32 %v3720, %v3764
    %v3780 = vmul.f32 %v3744, %v3768
    %v3781 = vmul.f32 %v3737, %v3756
    %v3782 = vmul.f32 %v3729, %v3760
    %v3783 = vmul.f32 %v3721, %v3764
    %v3784 = vmul.f32 %v3745, %v3768
    %v3785 = vmul.f32 %v3738, %v3756
    %v3786 = vmul.f32 %v3730, %v3760
    %v3787 = vmul.f32 %v3722, %v3764
    %v3788 = vmul.f32 %v3746, %v3768
    %v3789 = vmul.f32 %v3739, %v3756
    %v3790 = vmul.f32 %v3731, %v3760
    %v3791 = vmul.f32 %v3723, %v3764
    %v3792 = vmul.f32 %v3747, %v3768
    %v3793 = vmul.f32 %v3740, %v3756
    %v3794 = vmul.f32 %v3732, %v3760
    %v3795 = vmul.f32 %v3724, %v3764
    %v3796 = vmul.f32 %v3748, %v3768
    %v3797 = vmul.f32 %v3741, %v3756
    %v3798 = vmul.f32 %v3733, %v3760
    %v3799 = vmul.f32 %v3725, %v3764
    %v3800 = vmul.f32 %v3749, %v3768
    %v3801 = vmul.f32 %v3742, %v3756
    %v3802 = vmul.f32 %v3734, %v3760
    %v3803 = vmul.f32 %v3726, %v3764
    %v3804 = vmul.f32 %v3750, %v3768
    %3805 = vst [vmem:[#allocation2 + $0x600] sm:$0xff] %v3773
    %3806 = vst [vmem:[#allocation2 + $0x608] sm:$0xff] %v3774
    %3807 = vst [vmem:[#allocation2 + $0x610] sm:$0xff] %v3775
    %3808 = vst [vmem:[#allocation2 + $0x618] sm:$0xff] %v3776
    %3809 = vst [vmem:[#allocation2 + $0x620] sm:$0xff] %v3777
    %3810 = vst [vmem:[#allocation2 + $0x628] sm:$0xff] %v3778
    %3811 = vst [vmem:[#allocation2 + $0x630] sm:$0xff] %v3779
    %3812 = vst [vmem:[#allocation2 + $0x638] sm:$0xff] %v3780
    %3813 = vst [vmem:[#allocation2 + $0x640] sm:$0xff] %v3781
    %3814 = vst [vmem:[#allocation2 + $0x648] sm:$0xff] %v3782
    %3815 = vst [vmem:[#allocation2 + $0x650] sm:$0xff] %v3783
    %3816 = vst [vmem:[#allocation2 + $0x658] sm:$0xff] %v3784
    %3817 = vst [vmem:[#allocation2 + $0x660] sm:$0xff] %v3785
    %3818 = vst [vmem:[#allocation2 + $0x668] sm:$0xff] %v3786
    %3819 = vst [vmem:[#allocation2 + $0x670] sm:$0xff] %v3787
    %3820 = vst [vmem:[#allocation2 + $0x678] sm:$0xff] %v3788
    %3821 = vst [vmem:[#allocation2 + $0x680] sm:$0xff] %v3789
    %3822 = vst [vmem:[#allocation2 + $0x688] sm:$0xff] %v3790
    %3823 = vst [vmem:[#allocation2 + $0x690] sm:$0xff] %v3791
    %3824 = vst [vmem:[#allocation2 + $0x698] sm:$0xff] %v3792
    %3825 = vst [vmem:[#allocation2 + $0x6a0] sm:$0xff] %v3793
    %3826 = vst [vmem:[#allocation2 + $0x6a8] sm:$0xff] %v3794
    %3827 = vst [vmem:[#allocation2 + $0x6b0] sm:$0xff] %v3795
    %3828 = vst [vmem:[#allocation2 + $0x6b8] sm:$0xff] %v3796
    %3829 = vst [vmem:[#allocation2 + $0x6c0] sm:$0xff] %v3797
    %3830 = vst [vmem:[#allocation2 + $0x6c8] sm:$0xff] %v3798
    %3831 = vst [vmem:[#allocation2 + $0x6d0] sm:$0xff] %v3799
    %3832 = vst [vmem:[#allocation2 + $0x6d8] sm:$0xff] %v3800
    %3833 = vst [vmem:[#allocation2 + $0x6e0] sm:$0xff] %v3801
    %3834 = vst [vmem:[#allocation2 + $0x6e8] sm:$0xff] %v3802
    %3835 = vst [vmem:[#allocation2 + $0x6f0] sm:$0xff] %v3803
    %3836 = vst [vmem:[#allocation2 + $0x6f8] sm:$0xff] %v3804
    %3837 = vrot.lane.b32.xlu0 %v2681, 112
    %v3838 = vpop.permute.xlu0 %3837
    %3839 = vrot.lane.b32.xlu0 %v2685, 112
    %v3840 = vpop.permute.xlu0 %3839
    %3841 = vrot.lane.b32.xlu0 %v2689, 112
    %v3842 = vpop.permute.xlu0 %3841
    %3843 = vrot.lane.b32.xlu0 %v2693, 112
    %v3844 = vpop.permute.xlu0 %3843
    %3845 = vrot.lane.b32.xlu0 %v2697, 112
    %v3846 = vpop.permute.xlu0 %3845
    %3847 = vrot.lane.b32.xlu0 %v2701, 112
    %v3848 = vpop.permute.xlu0 %3847
    %3849 = vrot.lane.b32.xlu0 %v2705, 112
    %v3850 = vpop.permute.xlu0 %3849
    %3851 = vrot.lane.b32.xlu0 %v2709, 112
    %v3852 = vpop.permute.xlu0 %3851
    %3853 = vrot.lane.b32.xlu0 %v2682, 112
    %v3854 = vpop.permute.xlu0 %3853
    %3855 = vrot.lane.b32.xlu0 %v2686, 112
    %v3856 = vpop.permute.xlu0 %3855
    %3857 = vrot.lane.b32.xlu0 %v2690, 112
    %v3858 = vpop.permute.xlu0 %3857
    %3859 = vrot.lane.b32.xlu0 %v2694, 112
    %v3860 = vpop.permute.xlu0 %3859
    %3861 = vrot.lane.b32.xlu0 %v2698, 112
    %v3862 = vpop.permute.xlu0 %3861
    %3863 = vrot.lane.b32.xlu0 %v2702, 112
    %v3864 = vpop.permute.xlu0 %3863
    %3865 = vrot.lane.b32.xlu0 %v2706, 112
    %v3866 = vpop.permute.xlu0 %3865
    %3867 = vrot.lane.b32.xlu0 %v2710, 112
    %v3868 = vpop.permute.xlu0 %3867
    %3869 = vrot.lane.b32.xlu0 %v2683, 112
    %v3870 = vpop.permute.xlu0 %3869
    %3871 = vrot.lane.b32.xlu0 %v2687, 112
    %v3872 = vpop.permute.xlu0 %3871
    %3873 = vrot.lane.b32.xlu0 %v2691, 112
    %v3874 = vpop.permute.xlu0 %3873
    %3875 = vrot.lane.b32.xlu0 %v2695, 112
    %v3876 = vpop.permute.xlu0 %3875
    %3877 = vrot.lane.b32.xlu0 %v2699, 112
    %v3878 = vpop.permute.xlu0 %3877
    %3879 = vrot.lane.b32.xlu0 %v2703, 112
    %v3880 = vpop.permute.xlu0 %3879
    %3881 = vrot.lane.b32.xlu0 %v2707, 112
    %v3882 = vpop.permute.xlu0 %3881
    %3883 = vrot.lane.b32.xlu0 %v2711, 112
    %v3884 = vpop.permute.xlu0 %3883
    %3885 = vrot.lane.b32.xlu0 %v2684, 112
    %v3886 = vpop.permute.xlu0 %3885
    %3887 = vrot.lane.b32.xlu0 %v2688, 112
    %v3888 = vpop.permute.xlu0 %3887
    %3889 = vrot.lane.b32.xlu0 %v2692, 112
    %v3890 = vpop.permute.xlu0 %3889
    %3891 = vrot.lane.b32.xlu0 %v2696, 112
    %v3892 = vpop.permute.xlu0 %3891
    %3893 = vrot.lane.b32.xlu0 %v2700, 112
    %v3894 = vpop.permute.xlu0 %3893
    %3895 = vrot.lane.b32.xlu0 %v2704, 112
    %v3896 = vpop.permute.xlu0 %3895
    %3897 = vrot.lane.b32.xlu0 %v2708, 112
    %v3898 = vpop.permute.xlu0 %3897
    %3899 = vrot.lane.b32.xlu0 %v2712, 112
    %v3900 = vpop.permute.xlu0 %3899
    %v3901 = vsel %vm1298, %v3870, %v3886
    %v3902 = vsel %vm1298, %v3872, %v3888
    %v3903 = vsel %vm1298, %v3874, %v3890
    %v3904 = vsel %vm1298, %v3876, %v3892
    %v3905 = vsel %vm1298, %v3878, %v3894
    %v3906 = vsel %vm1298, %v3880, %v3896
    %v3907 = vsel %vm1298, %v3882, %v3898
    %v3908 = vsel %vm1298, %v3884, %v3900
    %v3909 = vsel %vm1298, %v3854, %v3870
    %v3910 = vsel %vm1298, %v3856, %v3872
    %v3911 = vsel %vm1298, %v3858, %v3874
    %v3912 = vsel %vm1298, %v3860, %v3876
    %v3913 = vsel %vm1298, %v3862, %v3878
    %v3914 = vsel %vm1298, %v3864, %v3880
    %v3915 = vsel %vm1298, %v3866, %v3882
    %v3916 = vsel %vm1298, %v3868, %v3884
    %v3917 = vsel %vm1298, %v3838, %v3854
    %v3918 = vsel %vm1298, %v3840, %v3856
    %v3919 = vsel %vm1298, %v3842, %v3858
    %v3920 = vsel %vm1298, %v3844, %v3860
    %v3921 = vsel %vm1298, %v3846, %v3862
    %v3922 = vsel %vm1298, %v3848, %v3864
    %v3923 = vsel %vm1298, %v3850, %v3866
    %v3924 = vsel %vm1298, %v3852, %v3868
    %v3925 = vsel %vm1298, %v3886, %v3838
    %v3926 = vsel %vm1298, %v3888, %v3840
    %v3927 = vsel %vm1298, %v3890, %v3842
    %v3928 = vsel %vm1298, %v3892, %v3844
    %v3929 = vsel %vm1298, %v3894, %v3846
    %v3930 = vsel %vm1298, %v3896, %v3848
    %v3931 = vsel %vm1298, %v3898, %v3850
    %v3932 = vsel %vm1298, %v3900, %v3852
    %v3933 = vld [vmem:[%s1331] sm:$0xf]
    %v3935 = vlaneseq
    %v3936 = vshrl.u32 %v3935, 7
    %v3937 = vsub.s32 0, %v3936
    %v3938 = vrot.slane %v3933, %v3937
    %v3939 = vlaneseq
    %v3940 = vshrl.u32 %v3939, 7
    %v3941 = vsub.s32 1, %v3940
    %v3942 = vrot.slane %v3933, %v3941
    %v3943 = vlaneseq
    %v3944 = vshrl.u32 %v3943, 7
    %v3945 = vsub.s32 2, %v3944
    %v3946 = vrot.slane %v3933, %v3945
    %v3947 = vlaneseq
    %v3948 = vshrl.u32 %v3947, 7
    %v3949 = vsub.s32 3, %v3948
    %v3950 = vrot.slane %v3933, %v3949
    %v3955 = vmul.f32 %v3917, %v3938
    %v3956 = vmul.f32 %v3909, %v3942
    %v3957 = vmul.f32 %v3901, %v3946
    %v3958 = vmul.f32 %v3925, %v3950
    %v3959 = vmul.f32 %v3918, %v3938
    %v3960 = vmul.f32 %v3910, %v3942
    %v3961 = vmul.f32 %v3902, %v3946
    %v3962 = vmul.f32 %v3926, %v3950
    %v3963 = vmul.f32 %v3919, %v3938
    %v3964 = vmul.f32 %v3911, %v3942
    %v3965 = vmul.f32 %v3903, %v3946
    %v3966 = vmul.f32 %v3927, %v3950
    %v3967 = vmul.f32 %v3920, %v3938
    %v3968 = vmul.f32 %v3912, %v3942
    %v3969 = vmul.f32 %v3904, %v3946
    %v3970 = vmul.f32 %v3928, %v3950
    %v3971 = vmul.f32 %v3921, %v3938
    %v3972 = vmul.f32 %v3913, %v3942
    %v3973 = vmul.f32 %v3905, %v3946
    %v3974 = vmul.f32 %v3929, %v3950
    %v3975 = vmul.f32 %v3922, %v3938
    %v3976 = vmul.f32 %v3914, %v3942
    %v3977 = vmul.f32 %v3906, %v3946
    %v3978 = vmul.f32 %v3930, %v3950
    %v3979 = vmul.f32 %v3923, %v3938
    %v3980 = vmul.f32 %v3915, %v3942
    %v3981 = vmul.f32 %v3907, %v3946
    %v3982 = vmul.f32 %v3931, %v3950
    %v3983 = vmul.f32 %v3924, %v3938
    %v3984 = vmul.f32 %v3916, %v3942
    %v3985 = vmul.f32 %v3908, %v3946
    %v3986 = vmul.f32 %v3932, %v3950
    %3987 = vst [vmem:[#allocation2 + $0x700] sm:$0xff] %v3955
    %3988 = vst [vmem:[#allocation2 + $0x708] sm:$0xff] %v3956
    %3989 = vst [vmem:[#allocation2 + $0x710] sm:$0xff] %v3957
    %3990 = vst [vmem:[#allocation2 + $0x718] sm:$0xff] %v3958
    %3991 = vst [vmem:[#allocation2 + $0x720] sm:$0xff] %v3959
    %3992 = vst [vmem:[#allocation2 + $0x728] sm:$0xff] %v3960
    %3993 = vst [vmem:[#allocation2 + $0x730] sm:$0xff] %v3961
    %3994 = vst [vmem:[#allocation2 + $0x738] sm:$0xff] %v3962
    %3995 = vst [vmem:[#allocation2 + $0x740] sm:$0xff] %v3963
    %3996 = vst [vmem:[#allocation2 + $0x748] sm:$0xff] %v3964
    %3997 = vst [vmem:[#allocation2 + $0x750] sm:$0xff] %v3965
    %3998 = vst [vmem:[#allocation2 + $0x758] sm:$0xff] %v3966
    %3999 = vst [vmem:[#allocation2 + $0x760] sm:$0xff] %v3967
    %4000 = vst [vmem:[#allocation2 + $0x768] sm:$0xff] %v3968
    %4001 = vst [vmem:[#allocation2 + $0x770] sm:$0xff] %v3969
    %4002 = vst [vmem:[#allocation2 + $0x778] sm:$0xff] %v3970
    %4003 = vst [vmem:[#allocation2 + $0x780] sm:$0xff] %v3971
    %4004 = vst [vmem:[#allocation2 + $0x788] sm:$0xff] %v3972
    %4005 = vst [vmem:[#allocation2 + $0x790] sm:$0xff] %v3973
    %4006 = vst [vmem:[#allocation2 + $0x798] sm:$0xff] %v3974
    %4007 = vst [vmem:[#allocation2 + $0x7a0] sm:$0xff] %v3975
    %4008 = vst [vmem:[#allocation2 + $0x7a8] sm:$0xff] %v3976
    %4009 = vst [vmem:[#allocation2 + $0x7b0] sm:$0xff] %v3977
    %4010 = vst [vmem:[#allocation2 + $0x7b8] sm:$0xff] %v3978
    %4011 = vst [vmem:[#allocation2 + $0x7c0] sm:$0xff] %v3979
    %4012 = vst [vmem:[#allocation2 + $0x7c8] sm:$0xff] %v3980
    %4013 = vst [vmem:[#allocation2 + $0x7d0] sm:$0xff] %v3981
    %4014 = vst [vmem:[#allocation2 + $0x7d8] sm:$0xff] %v3982
    %4015 = vst [vmem:[#allocation2 + $0x7e0] sm:$0xff] %v3983
    %4016 = vst [vmem:[#allocation2 + $0x7e8] sm:$0xff] %v3984
    %4017 = vst [vmem:[#allocation2 + $0x7f0] sm:$0xff] %v3985
    %4018 = vst [vmem:[#allocation2 + $0x7f8] sm:$0xff] %v3986
    %4019 = vrot.lane.b32.xlu0 %v2681, 111
    %v4020 = vpop.permute.xlu0 %4019
    %4021 = vrot.lane.b32.xlu0 %v2685, 111
    %v4022 = vpop.permute.xlu0 %4021
    %4023 = vrot.lane.b32.xlu0 %v2689, 111
    %v4024 = vpop.permute.xlu0 %4023
    %4025 = vrot.lane.b32.xlu0 %v2693, 111
    %v4026 = vpop.permute.xlu0 %4025
    %4027 = vrot.lane.b32.xlu0 %v2697, 111
    %v4028 = vpop.permute.xlu0 %4027
    %4029 = vrot.lane.b32.xlu0 %v2701, 111
    %v4030 = vpop.permute.xlu0 %4029
    %4031 = vrot.lane.b32.xlu0 %v2705, 111
    %v4032 = vpop.permute.xlu0 %4031
    %4033 = vrot.lane.b32.xlu0 %v2709, 111
    %v4034 = vpop.permute.xlu0 %4033
    %4035 = vrot.lane.b32.xlu0 %v2682, 111
    %v4036 = vpop.permute.xlu0 %4035
    %4037 = vrot.lane.b32.xlu0 %v2686, 111
    %v4038 = vpop.permute.xlu0 %4037
    %4039 = vrot.lane.b32.xlu0 %v2690, 111
    %v4040 = vpop.permute.xlu0 %4039
    %4041 = vrot.lane.b32.xlu0 %v2694, 111
    %v4042 = vpop.permute.xlu0 %4041
    %4043 = vrot.lane.b32.xlu0 %v2698, 111
    %v4044 = vpop.permute.xlu0 %4043
    %4045 = vrot.lane.b32.xlu0 %v2702, 111
    %v4046 = vpop.permute.xlu0 %4045
    %4047 = vrot.lane.b32.xlu0 %v2706, 111
    %v4048 = vpop.permute.xlu0 %4047
    %4049 = vrot.lane.b32.xlu0 %v2710, 111
    %v4050 = vpop.permute.xlu0 %4049
    %4051 = vrot.lane.b32.xlu0 %v2683, 111
    %v4052 = vpop.permute.xlu0 %4051
    %4053 = vrot.lane.b32.xlu0 %v2687, 111
    %v4054 = vpop.permute.xlu0 %4053
    %4055 = vrot.lane.b32.xlu0 %v2691, 111
    %v4056 = vpop.permute.xlu0 %4055
    %4057 = vrot.lane.b32.xlu0 %v2695, 111
    %v4058 = vpop.permute.xlu0 %4057
    %4059 = vrot.lane.b32.xlu0 %v2699, 111
    %v4060 = vpop.permute.xlu0 %4059
    %4061 = vrot.lane.b32.xlu0 %v2703, 111
    %v4062 = vpop.permute.xlu0 %4061
    %4063 = vrot.lane.b32.xlu0 %v2707, 111
    %v4064 = vpop.permute.xlu0 %4063
    %4065 = vrot.lane.b32.xlu0 %v2711, 111
    %v4066 = vpop.permute.xlu0 %4065
    %4067 = vrot.lane.b32.xlu0 %v2684, 111
    %v4068 = vpop.permute.xlu0 %4067
    %4069 = vrot.lane.b32.xlu0 %v2688, 111
    %v4070 = vpop.permute.xlu0 %4069
    %4071 = vrot.lane.b32.xlu0 %v2692, 111
    %v4072 = vpop.permute.xlu0 %4071
    %4073 = vrot.lane.b32.xlu0 %v2696, 111
    %v4074 = vpop.permute.xlu0 %4073
    %4075 = vrot.lane.b32.xlu0 %v2700, 111
    %v4076 = vpop.permute.xlu0 %4075
    %4077 = vrot.lane.b32.xlu0 %v2704, 111
    %v4078 = vpop.permute.xlu0 %4077
    %4079 = vrot.lane.b32.xlu0 %v2708, 111
    %v4080 = vpop.permute.xlu0 %4079
    %4081 = vrot.lane.b32.xlu0 %v2712, 111
    %v4082 = vpop.permute.xlu0 %4081
    %v4083 = vsel %vm1482, %v4052, %v4068
    %v4084 = vsel %vm1482, %v4054, %v4070
    %v4085 = vsel %vm1482, %v4056, %v4072
    %v4086 = vsel %vm1482, %v4058, %v4074
    %v4087 = vsel %vm1482, %v4060, %v4076
    %v4088 = vsel %vm1482, %v4062, %v4078
    %v4089 = vsel %vm1482, %v4064, %v4080
    %v4090 = vsel %vm1482, %v4066, %v4082
    %v4091 = vsel %vm1482, %v4036, %v4052
    %v4092 = vsel %vm1482, %v4038, %v4054
    %v4093 = vsel %vm1482, %v4040, %v4056
    %v4094 = vsel %vm1482, %v4042, %v4058
    %v4095 = vsel %vm1482, %v4044, %v4060
    %v4096 = vsel %vm1482, %v4046, %v4062
    %v4097 = vsel %vm1482, %v4048, %v4064
    %v4098 = vsel %vm1482, %v4050, %v4066
    %v4099 = vsel %vm1482, %v4020, %v4036
    %v4100 = vsel %vm1482, %v4022, %v4038
    %v4101 = vsel %vm1482, %v4024, %v4040
    %v4102 = vsel %vm1482, %v4026, %v4042
    %v4103 = vsel %vm1482, %v4028, %v4044
    %v4104 = vsel %vm1482, %v4030, %v4046
    %v4105 = vsel %vm1482, %v4032, %v4048
    %v4106 = vsel %vm1482, %v4034, %v4050
    %v4107 = vsel %vm1482, %v4068, %v4020
    %v4108 = vsel %vm1482, %v4070, %v4022
    %v4109 = vsel %vm1482, %v4072, %v4024
    %v4110 = vsel %vm1482, %v4074, %v4026
    %v4111 = vsel %vm1482, %v4076, %v4028
    %v4112 = vsel %vm1482, %v4078, %v4030
    %v4113 = vsel %vm1482, %v4080, %v4032
    %v4114 = vsel %vm1482, %v4082, %v4034
    %v4115 = vld [vmem:[%s1515] sm:$0xf]
    %v4117 = vlaneseq
    %v4118 = vshrl.u32 %v4117, 7
    %v4119 = vsub.s32 0, %v4118
    %v4120 = vrot.slane %v4115, %v4119
    %v4121 = vlaneseq
    %v4122 = vshrl.u32 %v4121, 7
    %v4123 = vsub.s32 1, %v4122
    %v4124 = vrot.slane %v4115, %v4123
    %v4125 = vlaneseq
    %v4126 = vshrl.u32 %v4125, 7
    %v4127 = vsub.s32 2, %v4126
    %v4128 = vrot.slane %v4115, %v4127
    %v4129 = vlaneseq
    %v4130 = vshrl.u32 %v4129, 7
    %v4131 = vsub.s32 3, %v4130
    %v4132 = vrot.slane %v4115, %v4131
    %v4137 = vmul.f32 %v4099, %v4120
    %v4138 = vmul.f32 %v4091, %v4124
    %v4139 = vmul.f32 %v4083, %v4128
    %v4140 = vmul.f32 %v4107, %v4132
    %v4141 = vmul.f32 %v4100, %v4120
    %v4142 = vmul.f32 %v4092, %v4124
    %v4143 = vmul.f32 %v4084, %v4128
    %v4144 = vmul.f32 %v4108, %v4132
    %v4145 = vmul.f32 %v4101, %v4120
    %v4146 = vmul.f32 %v4093, %v4124
    %v4147 = vmul.f32 %v4085, %v4128
    %v4148 = vmul.f32 %v4109, %v4132
    %v4149 = vmul.f32 %v4102, %v4120
    %v4150 = vmul.f32 %v4094, %v4124
    %v4151 = vmul.f32 %v4086, %v4128
    %v4152 = vmul.f32 %v4110, %v4132
    %v4153 = vmul.f32 %v4103, %v4120
    %v4154 = vmul.f32 %v4095, %v4124
    %v4155 = vmul.f32 %v4087, %v4128
    %v4156 = vmul.f32 %v4111, %v4132
    %v4157 = vmul.f32 %v4104, %v4120
    %v4158 = vmul.f32 %v4096, %v4124
    %v4159 = vmul.f32 %v4088, %v4128
    %v4160 = vmul.f32 %v4112, %v4132
    %v4161 = vmul.f32 %v4105, %v4120
    %v4162 = vmul.f32 %v4097, %v4124
    %v4163 = vmul.f32 %v4089, %v4128
    %v4164 = vmul.f32 %v4113, %v4132
    %v4165 = vmul.f32 %v4106, %v4120
    %v4166 = vmul.f32 %v4098, %v4124
    %v4167 = vmul.f32 %v4090, %v4128
    %v4168 = vmul.f32 %v4114, %v4132
    %4169 = vst [vmem:[#allocation2 + $0x800] sm:$0xff] %v4137
    %4170 = vst [vmem:[#allocation2 + $0x808] sm:$0xff] %v4138
    %4171 = vst [vmem:[#allocation2 + $0x810] sm:$0xff] %v4139
    %4172 = vst [vmem:[#allocation2 + $0x818] sm:$0xff] %v4140
    %4173 = vst [vmem:[#allocation2 + $0x820] sm:$0xff] %v4141
    %4174 = vst [vmem:[#allocation2 + $0x828] sm:$0xff] %v4142
    %4175 = vst [vmem:[#allocation2 + $0x830] sm:$0xff] %v4143
    %4176 = vst [vmem:[#allocation2 + $0x838] sm:$0xff] %v4144
    %4177 = vst [vmem:[#allocation2 + $0x840] sm:$0xff] %v4145
    %4178 = vst [vmem:[#allocation2 + $0x848] sm:$0xff] %v4146
    %4179 = vst [vmem:[#allocation2 + $0x850] sm:$0xff] %v4147
    %4180 = vst [vmem:[#allocation2 + $0x858] sm:$0xff] %v4148
    %4181 = vst [vmem:[#allocation2 + $0x860] sm:$0xff] %v4149
    %4182 = vst [vmem:[#allocation2 + $0x868] sm:$0xff] %v4150
    %4183 = vst [vmem:[#allocation2 + $0x870] sm:$0xff] %v4151
    %4184 = vst [vmem:[#allocation2 + $0x878] sm:$0xff] %v4152
    %4185 = vst [vmem:[#allocation2 + $0x880] sm:$0xff] %v4153
    %4186 = vst [vmem:[#allocation2 + $0x888] sm:$0xff] %v4154
    %4187 = vst [vmem:[#allocation2 + $0x890] sm:$0xff] %v4155
    %4188 = vst [vmem:[#allocation2 + $0x898] sm:$0xff] %v4156
    %4189 = vst [vmem:[#allocation2 + $0x8a0] sm:$0xff] %v4157
    %4190 = vst [vmem:[#allocation2 + $0x8a8] sm:$0xff] %v4158
    %4191 = vst [vmem:[#allocation2 + $0x8b0] sm:$0xff] %v4159
    %4192 = vst [vmem:[#allocation2 + $0x8b8] sm:$0xff] %v4160
    %4193 = vst [vmem:[#allocation2 + $0x8c0] sm:$0xff] %v4161
    %4194 = vst [vmem:[#allocation2 + $0x8c8] sm:$0xff] %v4162
    %4195 = vst [vmem:[#allocation2 + $0x8d0] sm:$0xff] %v4163
    %4196 = vst [vmem:[#allocation2 + $0x8d8] sm:$0xff] %v4164
    %4197 = vst [vmem:[#allocation2 + $0x8e0] sm:$0xff] %v4165
    %4198 = vst [vmem:[#allocation2 + $0x8e8] sm:$0xff] %v4166
    %4199 = vst [vmem:[#allocation2 + $0x8f0] sm:$0xff] %v4167
    %4200 = vst [vmem:[#allocation2 + $0x8f8] sm:$0xff] %v4168
    %v4201 = vld [vmem:[#allocation8] sm:$0xff]
    %v4202 = vld [vmem:[#allocation8 + $0x8] sm:$0xff]
    %v4203 = vld [vmem:[#allocation8 + $0x10] sm:$0xff]
    %v4204 = vld [vmem:[#allocation8 + $0x18] sm:$0xff]
    %v4205 = vld [vmem:[#allocation8 + $0x20] sm:$0xff]
    %v4206 = vld [vmem:[#allocation8 + $0x28] sm:$0xff]
    %v4207 = vld [vmem:[#allocation8 + $0x30] sm:$0xff]
    %v4208 = vld [vmem:[#allocation8 + $0x38] sm:$0xff]
    %v4209 = vld [vmem:[#allocation8 + $0x40] sm:$0xff]
    %v4210 = vld [vmem:[#allocation8 + $0x48] sm:$0xff]
    %v4211 = vld [vmem:[#allocation8 + $0x50] sm:$0xff]
    %v4212 = vld [vmem:[#allocation8 + $0x58] sm:$0xff]
    %v4213 = vld [vmem:[#allocation8 + $0x60] sm:$0xff]
    %v4214 = vld [vmem:[#allocation8 + $0x68] sm:$0xff]
    %v4215 = vld [vmem:[#allocation8 + $0x70] sm:$0xff]
    %v4216 = vld [vmem:[#allocation8 + $0x78] sm:$0xff]
    %v4217 = vld [vmem:[#allocation8 + $0x80] sm:$0xff]
    %v4218 = vld [vmem:[#allocation8 + $0x88] sm:$0xff]
    %v4219 = vld [vmem:[#allocation8 + $0x90] sm:$0xff]
    %v4220 = vld [vmem:[#allocation8 + $0x98] sm:$0xff]
    %v4221 = vld [vmem:[#allocation8 + $0xa0] sm:$0xff]
    %v4222 = vld [vmem:[#allocation8 + $0xa8] sm:$0xff]
    %v4223 = vld [vmem:[#allocation8 + $0xb0] sm:$0xff]
    %v4224 = vld [vmem:[#allocation8 + $0xb8] sm:$0xff]
    %v4225 = vld [vmem:[#allocation8 + $0xc0] sm:$0xff]
    %v4226 = vld [vmem:[#allocation8 + $0xc8] sm:$0xff]
    %v4227 = vld [vmem:[#allocation8 + $0xd0] sm:$0xff]
    %v4228 = vld [vmem:[#allocation8 + $0xd8] sm:$0xff]
    %v4229 = vld [vmem:[#allocation8 + $0xe0] sm:$0xff]
    %v4230 = vld [vmem:[#allocation8 + $0xe8] sm:$0xff]
    %v4231 = vld [vmem:[#allocation8 + $0xf0] sm:$0xff]
    %v4232 = vld [vmem:[#allocation8 + $0xf8] sm:$0xff]
    %v4233 = vld [vmem:[#allocation8 + $0x100] sm:$0xff]
    %v4234 = vld [vmem:[#allocation8 + $0x108] sm:$0xff]
    %v4235 = vld [vmem:[#allocation8 + $0x110] sm:$0xff]
    %v4236 = vld [vmem:[#allocation8 + $0x118] sm:$0xff]
    %v4237 = vld [vmem:[#allocation8 + $0x120] sm:$0xff]
    %v4238 = vld [vmem:[#allocation8 + $0x128] sm:$0xff]
    %v4239 = vld [vmem:[#allocation8 + $0x130] sm:$0xff]
    %v4240 = vld [vmem:[#allocation8 + $0x138] sm:$0xff]
    %v4241 = vld [vmem:[#allocation2] sm:$0xff]
    %v4242 = vld [vmem:[#allocation2 + $0x8] sm:$0xff]
    %v4243 = vld [vmem:[#allocation2 + $0x10] sm:$0xff]
    %v4244 = vld [vmem:[#allocation2 + $0x18] sm:$0xff]
    %v4245 = vld [vmem:[#allocation2 + $0x20] sm:$0xff]
    %v4246 = vld [vmem:[#allocation2 + $0x28] sm:$0xff]
    %v4247 = vld [vmem:[#allocation2 + $0x30] sm:$0xff]
    %v4248 = vld [vmem:[#allocation2 + $0x38] sm:$0xff]
    %v4249 = vld [vmem:[#allocation2 + $0x40] sm:$0xff]
    %v4250 = vld [vmem:[#allocation2 + $0x48] sm:$0xff]
    %v4251 = vld [vmem:[#allocation2 + $0x50] sm:$0xff]
    %v4252 = vld [vmem:[#allocation2 + $0x58] sm:$0xff]
    %v4253 = vld [vmem:[#allocation2 + $0x60] sm:$0xff]
    %v4254 = vld [vmem:[#allocation2 + $0x68] sm:$0xff]
    %v4255 = vld [vmem:[#allocation2 + $0x70] sm:$0xff]
    %v4256 = vld [vmem:[#allocation2 + $0x78] sm:$0xff]
    %v4257 = vld [vmem:[#allocation2 + $0x80] sm:$0xff]
    %v4258 = vld [vmem:[#allocation2 + $0x88] sm:$0xff]
    %v4259 = vld [vmem:[#allocation2 + $0x90] sm:$0xff]
    %v4260 = vld [vmem:[#allocation2 + $0x98] sm:$0xff]
    %v4261 = vld [vmem:[#allocation2 + $0xa0] sm:$0xff]
    %v4262 = vld [vmem:[#allocation2 + $0xa8] sm:$0xff]
    %v4263 = vld [vmem:[#allocation2 + $0xb0] sm:$0xff]
    %v4264 = vld [vmem:[#allocation2 + $0xb8] sm:$0xff]
    %v4265 = vld [vmem:[#allocation2 + $0xc0] sm:$0xff]
    %v4266 = vld [vmem:[#allocation2 + $0xc8] sm:$0xff]
    %v4267 = vld [vmem:[#allocation2 + $0xd0] sm:$0xff]
    %v4268 = vld [vmem:[#allocation2 + $0xd8] sm:$0xff]
    %v4269 = vld [vmem:[#allocation2 + $0xe0] sm:$0xff]
    %v4270 = vld [vmem:[#allocation2 + $0xe8] sm:$0xff]
    %v4271 = vld [vmem:[#allocation2 + $0xf0] sm:$0xff]
    %v4272 = vld [vmem:[#allocation2 + $0xf8] sm:$0xff]
    %v4273 = vld [vmem:[#allocation2 + $0x100] sm:$0xff]
    %v4274 = vld [vmem:[#allocation2 + $0x108] sm:$0xff]
    %v4275 = vld [vmem:[#allocation2 + $0x110] sm:$0xff]
    %v4276 = vld [vmem:[#allocation2 + $0x118] sm:$0xff]
    %v4277 = vld [vmem:[#allocation2 + $0x120] sm:$0xff]
    %v4278 = vld [vmem:[#allocation2 + $0x128] sm:$0xff]
    %v4279 = vld [vmem:[#allocation2 + $0x130] sm:$0xff]
    %v4280 = vld [vmem:[#allocation2 + $0x138] sm:$0xff]
    %v4281 = vld [vmem:[#allocation2 + $0x140] sm:$0xff]
    %v4282 = vld [vmem:[#allocation2 + $0x148] sm:$0xff]
    %v4283 = vld [vmem:[#allocation2 + $0x150] sm:$0xff]
    %v4284 = vld [vmem:[#allocation2 + $0x158] sm:$0xff]
    %v4285 = vld [vmem:[#allocation2 + $0x160] sm:$0xff]
    %v4286 = vld [vmem:[#allocation2 + $0x168] sm:$0xff]
    %v4287 = vld [vmem:[#allocation2 + $0x170] sm:$0xff]
    %v4288 = vld [vmem:[#allocation2 + $0x178] sm:$0xff]
    %v4289 = vld [vmem:[#allocation2 + $0x180] sm:$0xff]
    %v4290 = vld [vmem:[#allocation2 + $0x188] sm:$0xff]
    %v4291 = vld [vmem:[#allocation2 + $0x190] sm:$0xff]
    %v4292 = vld [vmem:[#allocation2 + $0x198] sm:$0xff]
    %v4293 = vld [vmem:[#allocation2 + $0x1a0] sm:$0xff]
    %v4294 = vld [vmem:[#allocation2 + $0x1a8] sm:$0xff]
    %v4295 = vld [vmem:[#allocation2 + $0x1b0] sm:$0xff]
    %v4296 = vld [vmem:[#allocation2 + $0x1b8] sm:$0xff]
    %v4297 = vld [vmem:[#allocation2 + $0x1c0] sm:$0xff]
    %v4298 = vld [vmem:[#allocation2 + $0x1c8] sm:$0xff]
    %v4299 = vld [vmem:[#allocation2 + $0x1d0] sm:$0xff]
    %v4300 = vld [vmem:[#allocation2 + $0x1d8] sm:$0xff]
    %v4301 = vld [vmem:[#allocation2 + $0x1e0] sm:$0xff]
    %v4302 = vld [vmem:[#allocation2 + $0x1e8] sm:$0xff]
    %v4303 = vld [vmem:[#allocation2 + $0x1f0] sm:$0xff]
    %v4304 = vld [vmem:[#allocation2 + $0x1f8] sm:$0xff]
    %v4305 = vld [vmem:[#allocation2 + $0x200] sm:$0xff]
    %v4306 = vld [vmem:[#allocation2 + $0x208] sm:$0xff]
    %v4307 = vld [vmem:[#allocation2 + $0x210] sm:$0xff]
    %v4308 = vld [vmem:[#allocation2 + $0x218] sm:$0xff]
    %v4309 = vld [vmem:[#allocation2 + $0x220] sm:$0xff]
    %v4310 = vld [vmem:[#allocation2 + $0x228] sm:$0xff]
    %v4311 = vld [vmem:[#allocation2 + $0x230] sm:$0xff]
    %v4312 = vld [vmem:[#allocation2 + $0x238] sm:$0xff]
    %v4313 = vld [vmem:[#allocation2 + $0x240] sm:$0xff]
    %v4314 = vld [vmem:[#allocation2 + $0x248] sm:$0xff]
    %v4315 = vld [vmem:[#allocation2 + $0x250] sm:$0xff]
    %v4316 = vld [vmem:[#allocation2 + $0x258] sm:$0xff]
    %v4317 = vld [vmem:[#allocation2 + $0x260] sm:$0xff]
    %v4318 = vld [vmem:[#allocation2 + $0x268] sm:$0xff]
    %v4319 = vld [vmem:[#allocation2 + $0x270] sm:$0xff]
    %v4320 = vld [vmem:[#allocation2 + $0x278] sm:$0xff]
    %v4321 = vld [vmem:[#allocation2 + $0x280] sm:$0xff]
    %v4322 = vld [vmem:[#allocation2 + $0x288] sm:$0xff]
    %v4323 = vld [vmem:[#allocation2 + $0x290] sm:$0xff]
    %v4324 = vld [vmem:[#allocation2 + $0x298] sm:$0xff]
    %v4325 = vld [vmem:[#allocation2 + $0x2a0] sm:$0xff]
    %v4326 = vld [vmem:[#allocation2 + $0x2a8] sm:$0xff]
    %v4327 = vld [vmem:[#allocation2 + $0x2b0] sm:$0xff]
    %v4328 = vld [vmem:[#allocation2 + $0x2b8] sm:$0xff]
    %v4329 = vld [vmem:[#allocation2 + $0x2c0] sm:$0xff]
    %v4330 = vld [vmem:[#allocation2 + $0x2c8] sm:$0xff]
    %v4331 = vld [vmem:[#allocation2 + $0x2d0] sm:$0xff]
    %v4332 = vld [vmem:[#allocation2 + $0x2d8] sm:$0xff]
    %v4333 = vld [vmem:[#allocation2 + $0x2e0] sm:$0xff]
    %v4334 = vld [vmem:[#allocation2 + $0x2e8] sm:$0xff]
    %v4335 = vld [vmem:[#allocation2 + $0x2f0] sm:$0xff]
    %v4336 = vld [vmem:[#allocation2 + $0x2f8] sm:$0xff]
    %v4337 = vld [vmem:[#allocation2 + $0x300] sm:$0xff]
    %v4338 = vld [vmem:[#allocation2 + $0x308] sm:$0xff]
    %v4339 = vld [vmem:[#allocation2 + $0x310] sm:$0xff]
    %v4340 = vld [vmem:[#allocation2 + $0x318] sm:$0xff]
    %v4341 = vld [vmem:[#allocation2 + $0x320] sm:$0xff]
    %v4342 = vld [vmem:[#allocation2 + $0x328] sm:$0xff]
    %v4343 = vld [vmem:[#allocation2 + $0x330] sm:$0xff]
    %v4344 = vld [vmem:[#allocation2 + $0x338] sm:$0xff]
    %v4345 = vld [vmem:[#allocation2 + $0x340] sm:$0xff]
    %v4346 = vld [vmem:[#allocation2 + $0x348] sm:$0xff]
    %v4347 = vld [vmem:[#allocation2 + $0x350] sm:$0xff]
    %v4348 = vld [vmem:[#allocation2 + $0x358] sm:$0xff]
    %v4349 = vld [vmem:[#allocation2 + $0x360] sm:$0xff]
    %v4350 = vld [vmem:[#allocation2 + $0x368] sm:$0xff]
    %v4351 = vld [vmem:[#allocation2 + $0x370] sm:$0xff]
    %v4352 = vld [vmem:[#allocation2 + $0x378] sm:$0xff]
    %v4353 = vld [vmem:[#allocation2 + $0x380] sm:$0xff]
    %v4354 = vld [vmem:[#allocation2 + $0x388] sm:$0xff]
    %v4355 = vld [vmem:[#allocation2 + $0x390] sm:$0xff]
    %v4356 = vld [vmem:[#allocation2 + $0x398] sm:$0xff]
    %v4357 = vld [vmem:[#allocation2 + $0x3a0] sm:$0xff]
    %v4358 = vld [vmem:[#allocation2 + $0x3a8] sm:$0xff]
    %v4359 = vld [vmem:[#allocation2 + $0x3b0] sm:$0xff]
    %v4360 = vld [vmem:[#allocation2 + $0x3b8] sm:$0xff]
    %v4361 = vld [vmem:[#allocation2 + $0x3c0] sm:$0xff]
    %v4362 = vld [vmem:[#allocation2 + $0x3c8] sm:$0xff]
    %v4363 = vld [vmem:[#allocation2 + $0x3d0] sm:$0xff]
    %v4364 = vld [vmem:[#allocation2 + $0x3d8] sm:$0xff]
    %v4365 = vld [vmem:[#allocation2 + $0x3e0] sm:$0xff]
    %v4366 = vld [vmem:[#allocation2 + $0x3e8] sm:$0xff]
    %v4367 = vld [vmem:[#allocation2 + $0x3f0] sm:$0xff]
    %v4368 = vld [vmem:[#allocation2 + $0x3f8] sm:$0xff]
    %v4369 = vld [vmem:[#allocation2 + $0x400] sm:$0xff]
    %v4370 = vld [vmem:[#allocation2 + $0x408] sm:$0xff]
    %v4371 = vld [vmem:[#allocation2 + $0x410] sm:$0xff]
    %v4372 = vld [vmem:[#allocation2 + $0x418] sm:$0xff]
    %v4373 = vld [vmem:[#allocation2 + $0x420] sm:$0xff]
    %v4374 = vld [vmem:[#allocation2 + $0x428] sm:$0xff]
    %v4375 = vld [vmem:[#allocation2 + $0x430] sm:$0xff]
    %v4376 = vld [vmem:[#allocation2 + $0x438] sm:$0xff]
    %v4377 = vld [vmem:[#allocation2 + $0x440] sm:$0xff]
    %v4378 = vld [vmem:[#allocation2 + $0x448] sm:$0xff]
    %v4379 = vld [vmem:[#allocation2 + $0x450] sm:$0xff]
    %v4380 = vld [vmem:[#allocation2 + $0x458] sm:$0xff]
    %v4381 = vld [vmem:[#allocation2 + $0x460] sm:$0xff]
    %v4382 = vld [vmem:[#allocation2 + $0x468] sm:$0xff]
    %v4383 = vld [vmem:[#allocation2 + $0x470] sm:$0xff]
    %v4384 = vld [vmem:[#allocation2 + $0x478] sm:$0xff]
    %v4385 = vld [vmem:[#allocation2 + $0x480] sm:$0xff]
    %v4386 = vld [vmem:[#allocation2 + $0x488] sm:$0xff]
    %v4387 = vld [vmem:[#allocation2 + $0x490] sm:$0xff]
    %v4388 = vld [vmem:[#allocation2 + $0x498] sm:$0xff]
    %v4389 = vld [vmem:[#allocation2 + $0x4a0] sm:$0xff]
    %v4390 = vld [vmem:[#allocation2 + $0x4a8] sm:$0xff]
    %v4391 = vld [vmem:[#allocation2 + $0x4b0] sm:$0xff]
    %v4392 = vld [vmem:[#allocation2 + $0x4b8] sm:$0xff]
    %v4393 = vld [vmem:[#allocation2 + $0x4c0] sm:$0xff]
    %v4394 = vld [vmem:[#allocation2 + $0x4c8] sm:$0xff]
    %v4395 = vld [vmem:[#allocation2 + $0x4d0] sm:$0xff]
    %v4396 = vld [vmem:[#allocation2 + $0x4d8] sm:$0xff]
    %v4397 = vld [vmem:[#allocation2 + $0x4e0] sm:$0xff]
    %v4398 = vld [vmem:[#allocation2 + $0x4e8] sm:$0xff]
    %v4399 = vld [vmem:[#allocation2 + $0x4f0] sm:$0xff]
    %v4400 = vld [vmem:[#allocation2 + $0x4f8] sm:$0xff]
    %v4401 = vld [vmem:[#allocation2 + $0x500] sm:$0xff]
    %v4402 = vld [vmem:[#allocation2 + $0x508] sm:$0xff]
    %v4403 = vld [vmem:[#allocation2 + $0x510] sm:$0xff]
    %v4404 = vld [vmem:[#allocation2 + $0x518] sm:$0xff]
    %v4405 = vld [vmem:[#allocation2 + $0x520] sm:$0xff]
    %v4406 = vld [vmem:[#allocation2 + $0x528] sm:$0xff]
    %v4407 = vld [vmem:[#allocation2 + $0x530] sm:$0xff]
    %v4408 = vld [vmem:[#allocation2 + $0x538] sm:$0xff]
    %v4409 = vld [vmem:[#allocation2 + $0x540] sm:$0xff]
    %v4410 = vld [vmem:[#allocation2 + $0x548] sm:$0xff]
    %v4411 = vld [vmem:[#allocation2 + $0x550] sm:$0xff]
    %v4412 = vld [vmem:[#allocation2 + $0x558] sm:$0xff]
    %v4413 = vld [vmem:[#allocation2 + $0x560] sm:$0xff]
    %v4414 = vld [vmem:[#allocation2 + $0x568] sm:$0xff]
    %v4415 = vld [vmem:[#allocation2 + $0x570] sm:$0xff]
    %v4416 = vld [vmem:[#allocation2 + $0x578] sm:$0xff]
    %v4417 = vld [vmem:[#allocation2 + $0x580] sm:$0xff]
    %v4418 = vld [vmem:[#allocation2 + $0x588] sm:$0xff]
    %v4419 = vld [vmem:[#allocation2 + $0x590] sm:$0xff]
    %v4420 = vld [vmem:[#allocation2 + $0x598] sm:$0xff]
    %v4421 = vld [vmem:[#allocation2 + $0x5a0] sm:$0xff]
    %v4422 = vld [vmem:[#allocation2 + $0x5a8] sm:$0xff]
    %v4423 = vld [vmem:[#allocation2 + $0x5b0] sm:$0xff]
    %v4424 = vld [vmem:[#allocation2 + $0x5b8] sm:$0xff]
    %v4425 = vld [vmem:[#allocation2 + $0x5c0] sm:$0xff]
    %v4426 = vld [vmem:[#allocation2 + $0x5c8] sm:$0xff]
    %v4427 = vld [vmem:[#allocation2 + $0x5d0] sm:$0xff]
    %v4428 = vld [vmem:[#allocation2 + $0x5d8] sm:$0xff]
    %v4429 = vld [vmem:[#allocation2 + $0x5e0] sm:$0xff]
    %v4430 = vld [vmem:[#allocation2 + $0x5e8] sm:$0xff]
    %v4431 = vld [vmem:[#allocation2 + $0x5f0] sm:$0xff]
    %v4432 = vld [vmem:[#allocation2 + $0x5f8] sm:$0xff]
    %v4433 = vld [vmem:[#allocation2 + $0x600] sm:$0xff]
    %v4434 = vld [vmem:[#allocation2 + $0x608] sm:$0xff]
    %v4435 = vld [vmem:[#allocation2 + $0x610] sm:$0xff]
    %v4436 = vld [vmem:[#allocation2 + $0x618] sm:$0xff]
    %v4437 = vld [vmem:[#allocation2 + $0x620] sm:$0xff]
    %v4438 = vld [vmem:[#allocation2 + $0x628] sm:$0xff]
    %v4439 = vld [vmem:[#allocation2 + $0x630] sm:$0xff]
    %v4440 = vld [vmem:[#allocation2 + $0x638] sm:$0xff]
    %v4441 = vld [vmem:[#allocation2 + $0x640] sm:$0xff]
    %v4442 = vld [vmem:[#allocation2 + $0x648] sm:$0xff]
    %v4443 = vld [vmem:[#allocation2 + $0x650] sm:$0xff]
    %v4444 = vld [vmem:[#allocation2 + $0x658] sm:$0xff]
    %v4445 = vld [vmem:[#allocation2 + $0x660] sm:$0xff]
    %v4446 = vld [vmem:[#allocation2 + $0x668] sm:$0xff]
    %v4447 = vld [vmem:[#allocation2 + $0x670] sm:$0xff]
    %v4448 = vld [vmem:[#allocation2 + $0x678] sm:$0xff]
    %v4449 = vld [vmem:[#allocation2 + $0x680] sm:$0xff]
    %v4450 = vld [vmem:[#allocation2 + $0x688] sm:$0xff]
    %v4451 = vld [vmem:[#allocation2 + $0x690] sm:$0xff]
    %v4452 = vld [vmem:[#allocation2 + $0x698] sm:$0xff]
    %v4453 = vld [vmem:[#allocation2 + $0x6a0] sm:$0xff]
    %v4454 = vld [vmem:[#allocation2 + $0x6a8] sm:$0xff]
    %v4455 = vld [vmem:[#allocation2 + $0x6b0] sm:$0xff]
    %v4456 = vld [vmem:[#allocation2 + $0x6b8] sm:$0xff]
    %v4457 = vld [vmem:[#allocation2 + $0x6c0] sm:$0xff]
    %v4458 = vld [vmem:[#allocation2 + $0x6c8] sm:$0xff]
    %v4459 = vld [vmem:[#allocation2 + $0x6d0] sm:$0xff]
    %v4460 = vld [vmem:[#allocation2 + $0x6d8] sm:$0xff]
    %v4461 = vld [vmem:[#allocation2 + $0x6e0] sm:$0xff]
    %v4462 = vld [vmem:[#allocation2 + $0x6e8] sm:$0xff]
    %v4463 = vld [vmem:[#allocation2 + $0x6f0] sm:$0xff]
    %v4464 = vld [vmem:[#allocation2 + $0x6f8] sm:$0xff]
    %v4465 = vld [vmem:[#allocation2 + $0x700] sm:$0xff]
    %v4466 = vld [vmem:[#allocation2 + $0x708] sm:$0xff]
    %v4467 = vld [vmem:[#allocation2 + $0x710] sm:$0xff]
    %v4468 = vld [vmem:[#allocation2 + $0x718] sm:$0xff]
    %v4469 = vld [vmem:[#allocation2 + $0x720] sm:$0xff]
    %v4470 = vld [vmem:[#allocation2 + $0x728] sm:$0xff]
    %v4471 = vld [vmem:[#allocation2 + $0x730] sm:$0xff]
    %v4472 = vld [vmem:[#allocation2 + $0x738] sm:$0xff]
    %v4473 = vld [vmem:[#allocation2 + $0x740] sm:$0xff]
    %v4474 = vld [vmem:[#allocation2 + $0x748] sm:$0xff]
    %v4475 = vld [vmem:[#allocation2 + $0x750] sm:$0xff]
    %v4476 = vld [vmem:[#allocation2 + $0x758] sm:$0xff]
    %v4477 = vld [vmem:[#allocation2 + $0x760] sm:$0xff]
    %v4478 = vld [vmem:[#allocation2 + $0x768] sm:$0xff]
    %v4479 = vld [vmem:[#allocation2 + $0x770] sm:$0xff]
    %v4480 = vld [vmem:[#allocation2 + $0x778] sm:$0xff]
    %v4481 = vld [vmem:[#allocation2 + $0x780] sm:$0xff]
    %v4482 = vld [vmem:[#allocation2 + $0x788] sm:$0xff]
    %v4483 = vld [vmem:[#allocation2 + $0x790] sm:$0xff]
    %v4484 = vld [vmem:[#allocation2 + $0x798] sm:$0xff]
    %v4485 = vld [vmem:[#allocation2 + $0x7a0] sm:$0xff]
    %v4486 = vld [vmem:[#allocation2 + $0x7a8] sm:$0xff]
    %v4487 = vld [vmem:[#allocation2 + $0x7b0] sm:$0xff]
    %v4488 = vld [vmem:[#allocation2 + $0x7b8] sm:$0xff]
    %v4489 = vld [vmem:[#allocation2 + $0x7c0] sm:$0xff]
    %v4490 = vld [vmem:[#allocation2 + $0x7c8] sm:$0xff]
    %v4491 = vld [vmem:[#allocation2 + $0x7d0] sm:$0xff]
    %v4492 = vld [vmem:[#allocation2 + $0x7d8] sm:$0xff]
    %v4493 = vld [vmem:[#allocation2 + $0x7e0] sm:$0xff]
    %v4494 = vld [vmem:[#allocation2 + $0x7e8] sm:$0xff]
    %v4495 = vld [vmem:[#allocation2 + $0x7f0] sm:$0xff]
    %v4496 = vld [vmem:[#allocation2 + $0x7f8] sm:$0xff]
    %v4497 = vld [vmem:[#allocation2 + $0x800] sm:$0xff]
    %v4498 = vld [vmem:[#allocation2 + $0x808] sm:$0xff]
    %v4499 = vld [vmem:[#allocation2 + $0x810] sm:$0xff]
    %v4500 = vld [vmem:[#allocation2 + $0x818] sm:$0xff]
    %v4501 = vld [vmem:[#allocation2 + $0x820] sm:$0xff]
    %v4502 = vld [vmem:[#allocation2 + $0x828] sm:$0xff]
    %v4503 = vld [vmem:[#allocation2 + $0x830] sm:$0xff]
    %v4504 = vld [vmem:[#allocation2 + $0x838] sm:$0xff]
    %v4505 = vld [vmem:[#allocation2 + $0x840] sm:$0xff]
    %v4506 = vld [vmem:[#allocation2 + $0x848] sm:$0xff]
    %v4507 = vld [vmem:[#allocation2 + $0x850] sm:$0xff]
    %v4508 = vld [vmem:[#allocation2 + $0x858] sm:$0xff]
    %v4509 = vld [vmem:[#allocation2 + $0x860] sm:$0xff]
    %v4510 = vld [vmem:[#allocation2 + $0x868] sm:$0xff]
    %v4511 = vld [vmem:[#allocation2 + $0x870] sm:$0xff]
    %v4512 = vld [vmem:[#allocation2 + $0x878] sm:$0xff]
    %v4513 = vld [vmem:[#allocation2 + $0x880] sm:$0xff]
    %v4514 = vld [vmem:[#allocation2 + $0x888] sm:$0xff]
    %v4515 = vld [vmem:[#allocation2 + $0x890] sm:$0xff]
    %v4516 = vld [vmem:[#allocation2 + $0x898] sm:$0xff]
    %v4517 = vld [vmem:[#allocation2 + $0x8a0] sm:$0xff]
    %v4518 = vld [vmem:[#allocation2 + $0x8a8] sm:$0xff]
    %v4519 = vld [vmem:[#allocation2 + $0x8b0] sm:$0xff]
    %v4520 = vld [vmem:[#allocation2 + $0x8b8] sm:$0xff]
    %v4521 = vld [vmem:[#allocation2 + $0x8c0] sm:$0xff]
    %v4522 = vld [vmem:[#allocation2 + $0x8c8] sm:$0xff]
    %v4523 = vld [vmem:[#allocation2 + $0x8d0] sm:$0xff]
    %v4524 = vld [vmem:[#allocation2 + $0x8d8] sm:$0xff]
    %v4525 = vld [vmem:[#allocation2 + $0x8e0] sm:$0xff]
    %v4526 = vld [vmem:[#allocation2 + $0x8e8] sm:$0xff]
    %v4527 = vld [vmem:[#allocation2 + $0x8f0] sm:$0xff]
    %v4528 = vld [vmem:[#allocation2 + $0x8f8] sm:$0xff]
    %v4529 = vld [vmem:[%s5] sm:$0xff]
    %v4530 = vld [vmem:[%s5 + $0x8] sm:$0xff]
    %v4531 = vld [vmem:[%s5 + $0x10] sm:$0xff]
    %v4532 = vld [vmem:[%s5 + $0x18] sm:$0xff]
    %v4533 = vld [vmem:[%s5 + $0x20] sm:$0xff]
    %v4534 = vld [vmem:[%s5 + $0x28] sm:$0xff]
    %v4535 = vld [vmem:[%s5 + $0x30] sm:$0xff]
    %v4536 = vld [vmem:[%s5 + $0x38] sm:$0xff]
    %4538 = vset.pattern.permute.xlu0 0
    %4539 = vperm.xlu0 %4538, %v4529
    %v4540 = vpop.permute.xlu0 %4539
    %4543 = vset.pattern.permute.xlu0 0
    %4544 = vperm.xlu0 %4543, %v4530
    %v4545 = vpop.permute.xlu0 %4544
    %4548 = vset.pattern.permute.xlu0 0
    %4549 = vperm.xlu0 %4548, %v4531
    %v4550 = vpop.permute.xlu0 %4549
    %4553 = vset.pattern.permute.xlu0 0
    %4554 = vperm.xlu0 %4553, %v4532
    %v4555 = vpop.permute.xlu0 %4554
    %4558 = vset.pattern.permute.xlu0 0
    %4559 = vperm.xlu0 %4558, %v4533
    %v4560 = vpop.permute.xlu0 %4559
    %4563 = vset.pattern.permute.xlu0 0
    %4564 = vperm.xlu0 %4563, %v4534
    %v4565 = vpop.permute.xlu0 %4564
    %4568 = vset.pattern.permute.xlu0 0
    %4569 = vperm.xlu0 %4568, %v4535
    %v4570 = vpop.permute.xlu0 %4569
    %4573 = vset.pattern.permute.xlu0 0
    %4574 = vperm.xlu0 %4573, %v4536
    %v4575 = vpop.permute.xlu0 %4574
    %v4578 = vsel %vm1978, %v4205, 0
    %v4581 = vsel %vm1978, %v4210, 0
    %v4584 = vsel %vm1978, %v4215, 0
    %v4587 = vsel %vm1978, %v4220, 0
    %v4590 = vsel %vm1978, %v4225, 0
    %v4593 = vsel %vm1978, %v4230, 0
    %v4596 = vsel %vm1978, %v4235, 0
    %v4599 = vsel %vm1978, %v4240, 0
    %4601 = vmatprep.subr.mxu0 %v4242
    %4602 = vmatpush1.msra.mxu0 %v4241
    %4603 = vmatprep.subr.mxu0 %v4246
    %4604 = vmatpush1.msra.mxu0 %v4245
    %4605 = vmatprep.subr.mxu0 %v4250
    %4606 = vmatpush1.msra.mxu0 %v4249
    %4607 = vmatprep.subr.mxu0 %v4254
    %4608 = vmatpush1.msra.mxu0 %v4253
    %4609 = vmatprep.subr.mxu0 %v4258
    %4610 = vmatpush1.msra.mxu0 %v4257
    %4611 = vmatprep.subr.mxu0 %v4262
    %4612 = vmatpush1.msra.mxu0 %v4261
    %4613 = vmatprep.subr.mxu0 %v4266
    %4614 = vmatpush1.msra.mxu0 %v4265
    %4615 = vmatprep.subr.mxu0 %v4270
    %4616 = vmatpush1.msra.mxu0 %v4269
    %4617 = vmatprep.subr.mxu0 %v4274
    %4618 = vmatpush1.msra.mxu0 %v4273
    %4619 = vmatprep.subr.mxu0 %v4278
    %4620 = vmatpush1.msra.mxu0 %v4277
    %4621 = vmatprep.subr.mxu0 %v4282
    %4622 = vmatpush1.msra.mxu0 %v4281
    %4623 = vmatprep.subr.mxu0 %v4286
    %4624 = vmatpush1.msra.mxu0 %v4285
    %4625 = vmatprep.subr.mxu0 %v4290
    %4626 = vmatpush1.msra.mxu0 %v4289
    %4627 = vmatprep.subr.mxu0 %v4294
    %4628 = vmatpush1.msra.mxu0 %v4293
    %4629 = vmatprep.subr.mxu0 %v4298
    %4630 = vmatpush1.msra.mxu0 %v4297
    %4631 = vmatprep.subr.mxu0 %v4302
    %4632 = vmatpush1.msra.mxu0 %v4301
    %4633 = vmatprep.subr.mxu0 %v4306
    %4634 = vmatpush1.msra.mxu0 %v4305
    %4635 = vmatprep.subr.mxu0 %v4310
    %4636 = vmatpush1.msra.mxu0 %v4309
    %4637 = vmatprep.subr.mxu0 %v4314
    %4638 = vmatpush1.msra.mxu0 %v4313
    %4639 = vmatprep.subr.mxu0 %v4318
    %4640 = vmatpush1.msra.mxu0 %v4317
    %4641 = vmatprep.subr.mxu0 %v4322
    %4642 = vmatpush1.msra.mxu0 %v4321
    %4643 = vmatprep.subr.mxu0 %v4326
    %4644 = vmatpush1.msra.mxu0 %v4325
    %4645 = vmatprep.subr.mxu0 %v4330
    %4646 = vmatpush1.msra.mxu0 %v4329
    %4647 = vmatprep.subr.mxu0 %v4334
    %4648 = vmatpush1.msra.mxu0 %v4333
    %4649 = vmatprep.subr.mxu0 %v4338
    %4650 = vmatpush1.msra.mxu0 %v4337
    %4651 = vmatprep.subr.mxu0 %v4342
    %4652 = vmatpush1.msra.mxu0 %v4341
    %4653 = vmatprep.subr.mxu0 %v4346
    %4654 = vmatpush1.msra.mxu0 %v4345
    %4655 = vmatprep.subr.mxu0 %v4350
    %4656 = vmatpush1.msra.mxu0 %v4349
    %4657 = vmatprep.subr.mxu0 %v4354
    %4658 = vmatpush1.msra.mxu0 %v4353
    %4659 = vmatprep.subr.mxu0 %v4358
    %4660 = vmatpush1.msra.mxu0 %v4357
    %4661 = vmatprep.subr.mxu0 %v4362
    %4662 = vmatpush1.msra.mxu0 %v4361
    %4663 = vmatprep.subr.mxu0 %v4366
    %4664 = vmatpush1.msra.mxu0 %v4365
    %4665 = vmatprep.mubr.f32.mxu0 %v4202
    %4666 = vmatmul.mubr.f32.gmra.mrb[0].mxu0 %v4201
    %v4667 = vpop.f32.mrb[0].mxu0
    %v4668 = vadd.f32 %v4540, %v4667
    %v4669 = vpop.f32.mrb[0].mxu0
    %v4670 = vadd.f32 %v4540, %v4669
    %4671 = vmatprep.mubr.f32.mxu0 %v4207
    %4672 = vmatmul.mubr.f32.gmra.mrb[0].mxu0 %v4206
    %v4673 = vpop.f32.mrb[0].mxu0
    %v4674 = vadd.f32 %v4545, %v4673
    %v4675 = vpop.f32.mrb[0].mxu0
    %v4676 = vadd.f32 %v4545, %v4675
    %4677 = vmatprep.mubr.f32.mxu0 %v4212
    %4678 = vmatmul.mubr.f32.gmra.mrb[0].mxu0 %v4211
    %v4679 = vpop.f32.mrb[0].mxu0
    %v4680 = vadd.f32 %v4550, %v4679
    %v4681 = vpop.f32.mrb[0].mxu0
    %v4682 = vadd.f32 %v4550, %v4681
    %4683 = vmatprep.mubr.f32.mxu0 %v4217
    %4684 = vmatmul.mubr.f32.gmra.mrb[0].mxu0 %v4216
    %v4685 = vpop.f32.mrb[0].mxu0
    %v4686 = vadd.f32 %v4555, %v4685
    %v4687 = vpop.f32.mrb[0].mxu0
    %v4688 = vadd.f32 %v4555, %v4687
    %4689 = vmatprep.mubr.f32.mxu0 %v4222
    %4690 = vmatmul.mubr.f32.gmra.mrb[0].mxu0 %v4221
    %v4691 = vpop.f32.mrb[0].mxu0
    %v4692 = vadd.f32 %v4560, %v4691
    %v4693 = vpop.f32.mrb[0].mxu0
    %v4694 = vadd.f32 %v4560, %v4693
    %4695 = vmatprep.mubr.f32.mxu0 %v4227
    %4696 = vmatmul.mubr.f32.gmra.mrb[0].mxu0 %v4226
    %v4697 = vpop.f32.mrb[0].mxu0
    %v4698 = vadd.f32 %v4565, %v4697
    %v4699 = vpop.f32.mrb[0].mxu0
    %v4700 = vadd.f32 %v4565, %v4699
    %4701 = vmatprep.mubr.f32.mxu0 %v4232
    %4702 = vmatmul.mubr.f32.gmra.mrb[0].mxu0 %v4231
    %v4703 = vpop.f32.mrb[0].mxu0
    %v4704 = vadd.f32 %v4570, %v4703
    %v4705 = vpop.f32.mrb[0].mxu0
    %v4706 = vadd.f32 %v4570, %v4705
    %4707 = vmatprep.mubr.f32.mxu0 %v4237
    %4708 = vmatmul.mubr.f32.gmra.mrb[0].mxu0 %v4236
    %v4709 = vpop.f32.mrb[0].mxu0
    %v4710 = vadd.f32 %v4575, %v4709
    %v4711 = vpop.f32.mrb[0].mxu0
    %v4712 = vadd.f32 %v4575, %v4711
    %4713 = vdwg.mxu0
    %4714 = vmatprep.subr.mxu0 %v4370
    %4715 = vmatpush1.msra.mxu0 %v4369
    %4716 = vmatprep.subr.mxu0 %v4374
    %4717 = vmatpush1.msra.mxu0 %v4373
    %4718 = vmatprep.subr.mxu0 %v4378
    %4719 = vmatpush1.msra.mxu0 %v4377
    %4720 = vmatprep.subr.mxu0 %v4382
    %4721 = vmatpush1.msra.mxu0 %v4381
    %4722 = vmatprep.subr.mxu0 %v4386
    %4723 = vmatpush1.msra.mxu0 %v4385
    %4724 = vmatprep.subr.mxu0 %v4390
    %4725 = vmatpush1.msra.mxu0 %v4389
    %4726 = vmatprep.subr.mxu0 %v4394
    %4727 = vmatpush1.msra.mxu0 %v4393
    %4728 = vmatprep.subr.mxu0 %v4398
    %4729 = vmatpush1.msra.mxu0 %v4397
    %4730 = vmatprep.subr.mxu0 %v4402
    %4731 = vmatpush1.msra.mxu0 %v4401
    %4732 = vmatprep.subr.mxu0 %v4406
    %4733 = vmatpush1.msra.mxu0 %v4405
    %4734 = vmatprep.subr.mxu0 %v4410
    %4735 = vmatpush1.msra.mxu0 %v4409
    %4736 = vmatprep.subr.mxu0 %v4414
    %4737 = vmatpush1.msra.mxu0 %v4413
    %4738 = vmatprep.subr.mxu0 %v4418
    %4739 = vmatpush1.msra.mxu0 %v4417
    %4740 = vmatprep.subr.mxu0 %v4422
    %4741 = vmatpush1.msra.mxu0 %v4421
    %4742 = vmatprep.subr.mxu0 %v4426
    %4743 = vmatpush1.msra.mxu0 %v4425
    %4744 = vmatprep.subr.mxu0 %v4430
    %4745 = vmatpush1.msra.mxu0 %v4429
    %4746 = vmatprep.subr.mxu0 %v4434
    %4747 = vmatpush1.msra.mxu0 %v4433
    %4748 = vmatprep.subr.mxu0 %v4438
    %4749 = vmatpush1.msra.mxu0 %v4437
    %4750 = vmatprep.subr.mxu0 %v4442
    %4751 = vmatpush1.msra.mxu0 %v4441
    %4752 = vmatprep.subr.mxu0 %v4446
    %4753 = vmatpush1.msra.mxu0 %v4445
    %4754 = vmatprep.subr.mxu0 %v4450
    %4755 = vmatpush1.msra.mxu0 %v4449
    %4756 = vmatprep.subr.mxu0 %v4454
    %4757 = vmatpush1.msra.mxu0 %v4453
    %4758 = vmatprep.subr.mxu0 %v4458
    %4759 = vmatpush1.msra.mxu0 %v4457
    %4760 = vmatprep.subr.mxu0 %v4462
    %4761 = vmatpush1.msra.mxu0 %v4461
    %4762 = vmatprep.subr.mxu0 %v4466
    %4763 = vmatpush1.msra.mxu0 %v4465
    %4764 = vmatprep.subr.mxu0 %v4470
    %4765 = vmatpush1.msra.mxu0 %v4469
    %4766 = vmatprep.subr.mxu0 %v4474
    %4767 = vmatpush1.msra.mxu0 %v4473
    %4768 = vmatprep.subr.mxu0 %v4478
    %4769 = vmatpush1.msra.mxu0 %v4477
    %4770 = vmatprep.subr.mxu0 %v4482
    %4771 = vmatpush1.msra.mxu0 %v4481
    %4772 = vmatprep.subr.mxu0 %v4486
    %4773 = vmatpush1.msra.mxu0 %v4485
    %4774 = vmatprep.subr.mxu0 %v4490
    %4775 = vmatpush1.msra.mxu0 %v4489
    %4776 = vmatprep.subr.mxu0 %v4494
    %4777 = vmatpush1.msra.mxu0 %v4493
    %4778 = vmatprep.mubr.f32.mxu0 %v4204
    %4779 = vmatmul.mubr.f32.gmra.mrb[0].mxu0 %v4203
    %v4780 = vpop.f32.mrb[0].mxu0
    %v4781 = vadd.f32 %v4668, %v4780
    %v4782 = vpop.f32.mrb[0].mxu0
    %v4783 = vadd.f32 %v4670, %v4782
    %4784 = vmatprep.mubr.f32.mxu0 %v4209
    %4785 = vmatmul.mubr.f32.gmra.mrb[0].mxu0 %v4208
    %v4786 = vpop.f32.mrb[0].mxu0
    %v4787 = vadd.f32 %v4674, %v4786
    %v4788 = vpop.f32.mrb[0].mxu0
    %v4789 = vadd.f32 %v4676, %v4788
    %4790 = vmatprep.mubr.f32.mxu0 %v4214
    %4791 = vmatmul.mubr.f32.gmra.mrb[0].mxu0 %v4213
    %v4792 = vpop.f32.mrb[0].mxu0
    %v4793 = vadd.f32 %v4680, %v4792
    %v4794 = vpop.f32.mrb[0].mxu0
    %v4795 = vadd.f32 %v4682, %v4794
    %4796 = vmatprep.mubr.f32.mxu0 %v4219
    %4797 = vmatmul.mubr.f32.gmra.mrb[0].mxu0 %v4218
    %v4798 = vpop.f32.mrb[0].mxu0
    %v4799 = vadd.f32 %v4686, %v4798
    %v4800 = vpop.f32.mrb[0].mxu0
    %v4801 = vadd.f32 %v4688, %v4800
    %4802 = vmatprep.mubr.f32.mxu0 %v4224
    %4803 = vmatmul.mubr.f32.gmra.mrb[0].mxu0 %v4223
    %v4804 = vpop.f32.mrb[0].mxu0
    %v4805 = vadd.f32 %v4692, %v4804
    %v4806 = vpop.f32.mrb[0].mxu0
    %v4807 = vadd.f32 %v4694, %v4806
    %4808 = vmatprep.mubr.f32.mxu0 %v4229
    %4809 = vmatmul.mubr.f32.gmra.mrb[0].mxu0 %v4228
    %v4810 = vpop.f32.mrb[0].mxu0
    %v4811 = vadd.f32 %v4698, %v4810
    %v4812 = vpop.f32.mrb[0].mxu0
    %v4813 = vadd.f32 %v4700, %v4812
    %4814 = vmatprep.mubr.f32.mxu0 %v4234
    %4815 = vmatmul.mubr.f32.gmra.mrb[0].mxu0 %v4233
    %v4816 = vpop.f32.mrb[0].mxu0
    %v4817 = vadd.f32 %v4704, %v4816
    %v4818 = vpop.f32.mrb[0].mxu0
    %v4819 = vadd.f32 %v4706, %v4818
    %4820 = vmatprep.mubr.f32.mxu0 %v4239
    %4821 = vmatmul.mubr.f32.gmra.mrb[0].mxu0 %v4238
    %v4822 = vpop.f32.mrb[0].mxu0
    %v4823 = vadd.f32 %v4710, %v4822
    %v4824 = vpop.f32.mrb[0].mxu0
    %v4825 = vadd.f32 %v4712, %v4824
    %4826 = vdwg.mxu0
    %4827 = vmatprep.subr.mxu0 %v4498
    %4828 = vmatpush1.msra.mxu0 %v4497
    %4829 = vmatprep.subr.mxu0 %v4502
    %4830 = vmatpush1.msra.mxu0 %v4501
    %4831 = vmatprep.subr.mxu0 %v4506
    %4832 = vmatpush1.msra.mxu0 %v4505
    %4833 = vmatprep.subr.mxu0 %v4510
    %4834 = vmatpush1.msra.mxu0 %v4509
    %4835 = vmatprep.subr.mxu0 %v4514
    %4836 = vmatpush1.msra.mxu0 %v4513
    %4837 = vmatprep.subr.mxu0 %v4518
    %4838 = vmatpush1.msra.mxu0 %v4517
    %4839 = vmatprep.subr.mxu0 %v4522
    %4840 = vmatpush1.msra.mxu0 %v4521
    %4841 = vmatprep.subr.mxu0 %v4526
    %4842 = vmatpush1.msra.mxu0 %v4525
    %4843 = vmatprep.subr.mxu0 0.0
    %4844 = vmatpush1.msra.mxu0 0.0
    %4845 = vmatprep.subr.mxu0 0.0
    %4846 = vmatpush1.msra.mxu0 0.0
    %4847 = vmatprep.subr.mxu0 0.0
    %4848 = vmatpush1.msra.mxu0 0.0
    %4849 = vmatprep.subr.mxu0 0.0
    %4850 = vmatpush1.msra.mxu0 0.0
    %4851 = vmatprep.subr.mxu0 0.0
    %4852 = vmatpush1.msra.mxu0 0.0
    %4853 = vmatprep.subr.mxu0 0.0
    %4854 = vmatpush1.msra.mxu0 0.0
    %4855 = vmatprep.subr.mxu0 0.0
    %4856 = vmatpush1.msra.mxu0 0.0
    %4857 = vmatprep.subr.mxu0 0.0
    %4858 = vmatpush1.msra.mxu0 0.0
    %4859 = vmatprep.subr.mxu0 0.0
    %4860 = vmatpush1.msra.mxu0 0.0
    %4861 = vmatprep.subr.mxu0 0.0
    %4862 = vmatpush1.msra.mxu0 0.0
    %4863 = vmatprep.subr.mxu0 0.0
    %4864 = vmatpush1.msra.mxu0 0.0
    %4865 = vmatprep.subr.mxu0 0.0
    %4866 = vmatpush1.msra.mxu0 0.0
    %4867 = vmatprep.subr.mxu0 0.0
    %4868 = vmatpush1.msra.mxu0 0.0
    %4869 = vmatprep.subr.mxu0 0.0
    %4870 = vmatpush1.msra.mxu0 0.0
    %4871 = vmatprep.subr.mxu0 0.0
    %4872 = vmatpush1.msra.mxu0 0.0
    %4873 = vmatprep.subr.mxu0 0.0
    %4874 = vmatpush1.msra.mxu0 0.0
    %4875 = vmatprep.subr.mxu0 0.0
    %4876 = vmatpush1.msra.mxu0 0.0
    %4877 = vmatprep.subr.mxu0 0.0
    %4878 = vmatpush1.msra.mxu0 0.0
    %4879 = vmatprep.subr.mxu0 0.0
    %4880 = vmatpush1.msra.mxu0 0.0
    %4881 = vmatprep.subr.mxu0 0.0
    %4882 = vmatpush1.msra.mxu0 0.0
    %4883 = vmatprep.subr.mxu0 0.0
    %4884 = vmatpush1.msra.mxu0 0.0
    %4885 = vmatprep.subr.mxu0 0.0
    %4886 = vmatpush1.msra.mxu0 0.0
    %4887 = vmatprep.subr.mxu0 0.0
    %4888 = vmatpush1.msra.mxu0 0.0
    %4889 = vmatprep.subr.mxu0 0.0
    %4890 = vmatpush1.msra.mxu0 0.0
    %4891 = vmatprep.mubr.f32.mxu0 0.0
    %4892 = vmatmul.mubr.f32.gmra.mrb[0].mxu0 %v4578
    %v4893 = vpop.f32.mrb[0].mxu0
    %v4894 = vadd.f32 %v4781, %v4893
    %v4895 = vpop.f32.mrb[0].mxu0
    %v4896 = vadd.f32 %v4783, %v4895
    %4897 = vmatprep.mubr.f32.mxu0 0.0
    %4898 = vmatmul.mubr.f32.gmra.mrb[0].mxu0 %v4581
    %v4899 = vpop.f32.mrb[0].mxu0
    %v4900 = vadd.f32 %v4787, %v4899
    %v4901 = vpop.f32.mrb[0].mxu0
    %v4902 = vadd.f32 %v4789, %v4901
    %4903 = vmatprep.mubr.f32.mxu0 0.0
    %4904 = vmatmul.mubr.f32.gmra.mrb[0].mxu0 %v4584
    %v4905 = vpop.f32.mrb[0].mxu0
    %v4906 = vadd.f32 %v4793, %v4905
    %v4907 = vpop.f32.mrb[0].mxu0
    %v4908 = vadd.f32 %v4795, %v4907
    %4909 = vmatprep.mubr.f32.mxu0 0.0
    %4910 = vmatmul.mubr.f32.gmra.mrb[0].mxu0 %v4587
    %v4911 = vpop.f32.mrb[0].mxu0
    %v4912 = vadd.f32 %v4799, %v4911
    %v4913 = vpop.f32.mrb[0].mxu0
    %v4914 = vadd.f32 %v4801, %v4913
    %4915 = vmatprep.mubr.f32.mxu0 0.0
    %4916 = vmatmul.mubr.f32.gmra.mrb[0].mxu0 %v4590
    %v4917 = vpop.f32.mrb[0].mxu0
    %v4918 = vadd.f32 %v4805, %v4917
    %v4919 = vpop.f32.mrb[0].mxu0
    %v4920 = vadd.f32 %v4807, %v4919
    %4921 = vmatprep.mubr.f32.mxu0 0.0
    %4922 = vmatmul.mubr.f32.gmra.mrb[0].mxu0 %v4593
    %v4923 = vpop.f32.mrb[0].mxu0
    %v4924 = vadd.f32 %v4811, %v4923
    %v4925 = vpop.f32.mrb[0].mxu0
    %v4926 = vadd.f32 %v4813, %v4925
    %4927 = vmatprep.mubr.f32.mxu0 0.0
    %4928 = vmatmul.mubr.f32.gmra.mrb[0].mxu0 %v4596
    %v4929 = vpop.f32.mrb[0].mxu0
    %v4930 = vadd.f32 %v4817, %v4929
    %v4931 = vpop.f32.mrb[0].mxu0
    %v4932 = vadd.f32 %v4819, %v4931
    %4933 = vmatprep.mubr.f32.mxu0 0.0
    %4934 = vmatmul.mubr.f32.gmra.mrb[0].mxu0 %v4599
    %v4935 = vpop.f32.mrb[0].mxu0
    %v4936 = vadd.f32 %v4823, %v4935
    %v4937 = vpop.f32.mrb[0].mxu0
    %v4938 = vadd.f32 %v4825, %v4937
    %4939 = vdwg.mxu0
    %4940 = vmatprep.subr.mxu0 %v4244
    %4941 = vmatpush1.msra.mxu0 %v4243
    %4942 = vmatprep.subr.mxu0 %v4248
    %4943 = vmatpush1.msra.mxu0 %v4247
    %4944 = vmatprep.subr.mxu0 %v4252
    %4945 = vmatpush1.msra.mxu0 %v4251
    %4946 = vmatprep.subr.mxu0 %v4256
    %4947 = vmatpush1.msra.mxu0 %v4255
    %4948 = vmatprep.subr.mxu0 %v4260
    %4949 = vmatpush1.msra.mxu0 %v4259
    %4950 = vmatprep.subr.mxu0 %v4264
    %4951 = vmatpush1.msra.mxu0 %v4263
    %4952 = vmatprep.subr.mxu0 %v4268
    %4953 = vmatpush1.msra.mxu0 %v4267
    %4954 = vmatprep.subr.mxu0 %v4272
    %4955 = vmatpush1.msra.mxu0 %v4271
    %4956 = vmatprep.subr.mxu0 %v4276
    %4957 = vmatpush1.msra.mxu0 %v4275
    %4958 = vmatprep.subr.mxu0 %v4280
    %4959 = vmatpush1.msra.mxu0 %v4279
    %4960 = vmatprep.subr.mxu0 %v4284
    %4961 = vmatpush1.msra.mxu0 %v4283
    %4962 = vmatprep.subr.mxu0 %v4288
    %4963 = vmatpush1.msra.mxu0 %v4287
    %4964 = vmatprep.subr.mxu0 %v4292
    %4965 = vmatpush1.msra.mxu0 %v4291
    %4966 = vmatprep.subr.mxu0 %v4296
    %4967 = vmatpush1.msra.mxu0 %v4295
    %4968 = vmatprep.subr.mxu0 %v4300
    %4969 = vmatpush1.msra.mxu0 %v4299
    %4970 = vmatprep.subr.mxu0 %v4304
    %4971 = vmatpush1.msra.mxu0 %v4303
    %4972 = vmatprep.subr.mxu0 %v4308
    %4973 = vmatpush1.msra.mxu0 %v4307
    %4974 = vmatprep.subr.mxu0 %v4312
    %4975 = vmatpush1.msra.mxu0 %v4311
    %4976 = vmatprep.subr.mxu0 %v4316
    %4977 = vmatpush1.msra.mxu0 %v4315
    %4978 = vmatprep.subr.mxu0 %v4320
    %4979 = vmatpush1.msra.mxu0 %v4319
    %4980 = vmatprep.subr.mxu0 %v4324
    %4981 = vmatpush1.msra.mxu0 %v4323
    %4982 = vmatprep.subr.mxu0 %v4328
    %4983 = vmatpush1.msra.mxu0 %v4327
    %4984 = vmatprep.subr.mxu0 %v4332
    %4985 = vmatpush1.msra.mxu0 %v4331
    %4986 = vmatprep.subr.mxu0 %v4336
    %4987 = vmatpush1.msra.mxu0 %v4335
    %4988 = vmatprep.subr.mxu0 %v4340
    %4989 = vmatpush1.msra.mxu0 %v4339
    %4990 = vmatprep.subr.mxu0 %v4344
    %4991 = vmatpush1.msra.mxu0 %v4343
    %4992 = vmatprep.subr.mxu0 %v4348
    %4993 = vmatpush1.msra.mxu0 %v4347
    %4994 = vmatprep.subr.mxu0 %v4352
    %4995 = vmatpush1.msra.mxu0 %v4351
    %4996 = vmatprep.subr.mxu0 %v4356
    %4997 = vmatpush1.msra.mxu0 %v4355
    %4998 = vmatprep.subr.mxu0 %v4360
    %4999 = vmatpush1.msra.mxu0 %v4359
    %5000 = vmatprep.subr.mxu0 %v4364
    %5001 = vmatpush1.msra.mxu0 %v4363
    %5002 = vmatprep.subr.mxu0 %v4368
    %5003 = vmatpush1.msra.mxu0 %v4367
    %5004 = vmatprep.mubr.f32.mxu0 %v4202
    %5005 = vmatmul.mubr.f32.gmra.mrb[0].mxu0 %v4201
    %v5006 = vpop.f32.mrb[0].mxu0
    %v5007 = vadd.f32 %v4540, %v5006
    %v5008 = vpop.f32.mrb[0].mxu0
    %v5009 = vadd.f32 %v4540, %v5008
    %5010 = vmatprep.mubr.f32.mxu0 %v4207
    %5011 = vmatmul.mubr.f32.gmra.mrb[0].mxu0 %v4206
    %v5012 = vpop.f32.mrb[0].mxu0
    %v5013 = vadd.f32 %v4545, %v5012
    %v5014 = vpop.f32.mrb[0].mxu0
    %v5015 = vadd.f32 %v4545, %v5014
    %5016 = vmatprep.mubr.f32.mxu0 %v4212
    %5017 = vmatmul.mubr.f32.gmra.mrb[0].mxu0 %v4211
    %v5018 = vpop.f32.mrb[0].mxu0
    %v5019 = vadd.f32 %v4550, %v5018
    %v5020 = vpop.f32.mrb[0].mxu0
    %v5021 = vadd.f32 %v4550, %v5020
    %5022 = vmatprep.mubr.f32.mxu0 %v4217
    %5023 = vmatmul.mubr.f32.gmra.mrb[0].mxu0 %v4216
    %v5024 = vpop.f32.mrb[0].mxu0
    %v5025 = vadd.f32 %v4555, %v5024
    %v5026 = vpop.f32.mrb[0].mxu0
    %v5027 = vadd.f32 %v4555, %v5026
    %5028 = vmatprep.mubr.f32.mxu0 %v4222
    %5029 = vmatmul.mubr.f32.gmra.mrb[0].mxu0 %v4221
    %v5030 = vpop.f32.mrb[0].mxu0
    %v5031 = vadd.f32 %v4560, %v5030
    %v5032 = vpop.f32.mrb[0].mxu0
    %v5033 = vadd.f32 %v4560, %v5032
    %5034 = vmatprep.mubr.f32.mxu0 %v4227
    %5035 = vmatmul.mubr.f32.gmra.mrb[0].mxu0 %v4226
    %v5036 = vpop.f32.mrb[0].mxu0
    %v5037 = vadd.f32 %v4565, %v5036
    %v5038 = vpop.f32.mrb[0].mxu0
    %v5039 = vadd.f32 %v4565, %v5038
    %5040 = vmatprep.mubr.f32.mxu0 %v4232
    %5041 = vmatmul.mubr.f32.gmra.mrb[0].mxu0 %v4231
    %v5042 = vpop.f32.mrb[0].mxu0
    %v5043 = vadd.f32 %v4570, %v5042
    %v5044 = vpop.f32.mrb[0].mxu0
    %v5045 = vadd.f32 %v4570, %v5044
    %5046 = vmatprep.mubr.f32.mxu0 %v4237
    %5047 = vmatmul.mubr.f32.gmra.mrb[0].mxu0 %v4236
    %v5048 = vpop.f32.mrb[0].mxu0
    %v5049 = vadd.f32 %v4575, %v5048
    %v5050 = vpop.f32.mrb[0].mxu0
    %v5051 = vadd.f32 %v4575, %v5050
    %5052 = vdwg.mxu0
    %5053 = vmatprep.subr.mxu0 %v4372
    %5054 = vmatpush1.msra.mxu0 %v4371
    %5055 = vmatprep.subr.mxu0 %v4376
    %5056 = vmatpush1.msra.mxu0 %v4375
    %5057 = vmatprep.subr.mxu0 %v4380
    %5058 = vmatpush1.msra.mxu0 %v4379
    %5059 = vmatprep.subr.mxu0 %v4384
    %5060 = vmatpush1.msra.mxu0 %v4383
    %5061 = vmatprep.subr.mxu0 %v4388
    %5062 = vmatpush1.msra.mxu0 %v4387
    %5063 = vmatprep.subr.mxu0 %v4392
    %5064 = vmatpush1.msra.mxu0 %v4391
    %5065 = vmatprep.subr.mxu0 %v4396
    %5066 = vmatpush1.msra.mxu0 %v4395
    %5067 = vmatprep.subr.mxu0 %v4400
    %5068 = vmatpush1.msra.mxu0 %v4399
    %5069 = vmatprep.subr.mxu0 %v4404
    %5070 = vmatpush1.msra.mxu0 %v4403
    %5071 = vmatprep.subr.mxu0 %v4408
    %5072 = vmatpush1.msra.mxu0 %v4407
    %5073 = vmatprep.subr.mxu0 %v4412
    %5074 = vmatpush1.msra.mxu0 %v4411
    %5075 = vmatprep.subr.mxu0 %v4416
    %5076 = vmatpush1.msra.mxu0 %v4415
    %5077 = vmatprep.subr.mxu0 %v4420
    %5078 = vmatpush1.msra.mxu0 %v4419
    %5079 = vmatprep.subr.mxu0 %v4424
    %5080 = vmatpush1.msra.mxu0 %v4423
    %5081 = vmatprep.subr.mxu0 %v4428
    %5082 = vmatpush1.msra.mxu0 %v4427
    %5083 = vmatprep.subr.mxu0 %v4432
    %5084 = vmatpush1.msra.mxu0 %v4431
    %5085 = vmatprep.subr.mxu0 %v4436
    %5086 = vmatpush1.msra.mxu0 %v4435
    %5087 = vmatprep.subr.mxu0 %v4440
    %5088 = vmatpush1.msra.mxu0 %v4439
    %5089 = vmatprep.subr.mxu0 %v4444
    %5090 = vmatpush1.msra.mxu0 %v4443
    %5091 = vmatprep.subr.mxu0 %v4448
    %5092 = vmatpush1.msra.mxu0 %v4447
    %5093 = vmatprep.subr.mxu0 %v4452
    %5094 = vmatpush1.msra.mxu0 %v4451
    %5095 = vmatprep.subr.mxu0 %v4456
    %5096 = vmatpush1.msra.mxu0 %v4455
    %5097 = vmatprep.subr.mxu0 %v4460
    %5098 = vmatpush1.msra.mxu0 %v4459
    %5099 = vmatprep.subr.mxu0 %v4464
    %5100 = vmatpush1.msra.mxu0 %v4463
    %5101 = vmatprep.subr.mxu0 %v4468
    %5102 = vmatpush1.msra.mxu0 %v4467
    %5103 = vmatprep.subr.mxu0 %v4472
    %5104 = vmatpush1.msra.mxu0 %v4471
    %5105 = vmatprep.subr.mxu0 %v4476
    %5106 = vmatpush1.msra.mxu0 %v4475
    %5107 = vmatprep.subr.mxu0 %v4480
    %5108 = vmatpush1.msra.mxu0 %v4479
    %5109 = vmatprep.subr.mxu0 %v4484
    %5110 = vmatpush1.msra.mxu0 %v4483
    %5111 = vmatprep.subr.mxu0 %v4488
    %5112 = vmatpush1.msra.mxu0 %v4487
    %5113 = vmatprep.subr.mxu0 %v4492
    %5114 = vmatpush1.msra.mxu0 %v4491
    %5115 = vmatprep.subr.mxu0 %v4496
    %5116 = vmatpush1.msra.mxu0 %v4495
    %5117 = vmatprep.mubr.f32.mxu0 %v4204
    %5118 = vmatmul.mubr.f32.gmra.mrb[0].mxu0 %v4203
    %v5119 = vpop.f32.mrb[0].mxu0
    %v5120 = vadd.f32 %v5007, %v5119
    %v5121 = vpop.f32.mrb[0].mxu0
    %v5122 = vadd.f32 %v5009, %v5121
    %5123 = vmatprep.mubr.f32.mxu0 %v4209
    %5124 = vmatmul.mubr.f32.gmra.mrb[0].mxu0 %v4208
    %v5125 = vpop.f32.mrb[0].mxu0
    %v5126 = vadd.f32 %v5013, %v5125
    %v5127 = vpop.f32.mrb[0].mxu0
    %v5128 = vadd.f32 %v5015, %v5127
    %5129 = vmatprep.mubr.f32.mxu0 %v4214
    %5130 = vmatmul.mubr.f32.gmra.mrb[0].mxu0 %v4213
    %v5131 = vpop.f32.mrb[0].mxu0
    %v5132 = vadd.f32 %v5019, %v5131
    %v5133 = vpop.f32.mrb[0].mxu0
    %v5134 = vadd.f32 %v5021, %v5133
    %5135 = vmatprep.mubr.f32.mxu0 %v4219
    %5136 = vmatmul.mubr.f32.gmra.mrb[0].mxu0 %v4218
    %v5137 = vpop.f32.mrb[0].mxu0
    %v5138 = vadd.f32 %v5025, %v5137
    %v5139 = vpop.f32.mrb[0].mxu0
    %v5140 = vadd.f32 %v5027, %v5139
    %5141 = vmatprep.mubr.f32.mxu0 %v4224
    %5142 = vmatmul.mubr.f32.gmra.mrb[0].mxu0 %v4223
    %v5143 = vpop.f32.mrb[0].mxu0
    %v5144 = vadd.f32 %v5031, %v5143
    %v5145 = vpop.f32.mrb[0].mxu0
    %v5146 = vadd.f32 %v5033, %v5145
    %5147 = vmatprep.mubr.f32.mxu0 %v4229
    %5148 = vmatmul.mubr.f32.gmra.mrb[0].mxu0 %v4228
    %v5149 = vpop.f32.mrb[0].mxu0
    %v5150 = vadd.f32 %v5037, %v5149
    %v5151 = vpop.f32.mrb[0].mxu0
    %v5152 = vadd.f32 %v5039, %v5151
    %5153 = vmatprep.mubr.f32.mxu0 %v4234
    %5154 = vmatmul.mubr.f32.gmra.mrb[0].mxu0 %v4233
    %v5155 = vpop.f32.mrb[0].mxu0
    %v5156 = vadd.f32 %v5043, %v5155
    %v5157 = vpop.f32.mrb[0].mxu0
    %v5158 = vadd.f32 %v5045, %v5157
    %5159 = vmatprep.mubr.f32.mxu0 %v4239
    %5160 = vmatmul.mubr.f32.gmra.mrb[0].mxu0 %v4238
    %v5161 = vpop.f32.mrb[0].mxu0
    %v5162 = vadd.f32 %v5049, %v5161
    %v5163 = vpop.f32.mrb[0].mxu0
    %v5164 = vadd.f32 %v5051, %v5163
    %5165 = vdwg.mxu0
    %5166 = vmatprep.subr.mxu0 %v4500
    %5167 = vmatpush1.msra.mxu0 %v4499
    %5168 = vmatprep.subr.mxu0 %v4504
    %5169 = vmatpush1.msra.mxu0 %v4503
    %5170 = vmatprep.subr.mxu0 %v4508
    %5171 = vmatpush1.msra.mxu0 %v4507
    %5172 = vmatprep.subr.mxu0 %v4512
    %5173 = vmatpush1.msra.mxu0 %v4511
    %5174 = vmatprep.subr.mxu0 %v4516
    %5175 = vmatpush1.msra.mxu0 %v4515
    %5176 = vmatprep.subr.mxu0 %v4520
    %5177 = vmatpush1.msra.mxu0 %v4519
    %5178 = vmatprep.subr.mxu0 %v4524
    %5179 = vmatpush1.msra.mxu0 %v4523
    %5180 = vmatprep.subr.mxu0 %v4528
    %5181 = vmatpush1.msra.mxu0 %v4527
    %5182 = vmatprep.subr.mxu0 0.0
    %5183 = vmatpush1.msra.mxu0 0.0
    %5184 = vmatprep.subr.mxu0 0.0
    %5185 = vmatpush1.msra.mxu0 0.0
    %5186 = vmatprep.subr.mxu0 0.0
    %5187 = vmatpush1.msra.mxu0 0.0
    %5188 = vmatprep.subr.mxu0 0.0
    %5189 = vmatpush1.msra.mxu0 0.0
    %5190 = vmatprep.subr.mxu0 0.0
    %5191 = vmatpush1.msra.mxu0 0.0
    %5192 = vmatprep.subr.mxu0 0.0
    %5193 = vmatpush1.msra.mxu0 0.0
    %5194 = vmatprep.subr.mxu0 0.0
    %5195 = vmatpush1.msra.mxu0 0.0
    %5196 = vmatprep.subr.mxu0 0.0
    %5197 = vmatpush1.msra.mxu0 0.0
    %5198 = vmatprep.subr.mxu0 0.0
    %5199 = vmatpush1.msra.mxu0 0.0
    %5200 = vmatprep.subr.mxu0 0.0
    %5201 = vmatpush1.msra.mxu0 0.0
    %5202 = vmatprep.subr.mxu0 0.0
    %5203 = vmatpush1.msra.mxu0 0.0
    %5204 = vmatprep.subr.mxu0 0.0
    %5205 = vmatpush1.msra.mxu0 0.0
    %5206 = vmatprep.subr.mxu0 0.0
    %5207 = vmatpush1.msra.mxu0 0.0
    %5208 = vmatprep.subr.mxu0 0.0
    %5209 = vmatpush1.msra.mxu0 0.0
    %5210 = vmatprep.subr.mxu0 0.0
    %5211 = vmatpush1.msra.mxu0 0.0
    %5212 = vmatprep.subr.mxu0 0.0
    %5213 = vmatpush1.msra.mxu0 0.0
    %5214 = vmatprep.subr.mxu0 0.0
    %5215 = vmatpush1.msra.mxu0 0.0
    %5216 = vmatprep.subr.mxu0 0.0
    %5217 = vmatpush1.msra.mxu0 0.0
    %5218 = vmatprep.subr.mxu0 0.0
    %5219 = vmatpush1.msra.mxu0 0.0
    %5220 = vmatprep.subr.mxu0 0.0
    %5221 = vmatpush1.msra.mxu0 0.0
    %5222 = vmatprep.subr.mxu0 0.0
    %5223 = vmatpush1.msra.mxu0 0.0
    %5224 = vmatprep.subr.mxu0 0.0
    %5225 = vmatpush1.msra.mxu0 0.0
    %5226 = vmatprep.subr.mxu0 0.0
    %5227 = vmatpush1.msra.mxu0 0.0
    %5228 = vmatprep.subr.mxu0 0.0
    %5229 = vmatpush1.msra.mxu0 0.0
    %5230 = vmatprep.mubr.f32.mxu0 0.0
    %5231 = vmatmul.mubr.f32.gmra.mrb[0].mxu0 %v4578
    %v5232 = vpop.f32.mrb[0].mxu0
    %v5233 = vadd.f32 %v5120, %v5232
    %v5234 = vpop.f32.mrb[0].mxu0
    %v5235 = vadd.f32 %v5122, %v5234
    %5236 = vmatprep.mubr.f32.mxu0 0.0
    %5237 = vmatmul.mubr.f32.gmra.mrb[0].mxu0 %v4581
    %v5238 = vpop.f32.mrb[0].mxu0
    %v5239 = vadd.f32 %v5126, %v5238
    %v5240 = vpop.f32.mrb[0].mxu0
    %v5241 = vadd.f32 %v5128, %v5240
    %5242 = vmatprep.mubr.f32.mxu0 0.0
    %5243 = vmatmul.mubr.f32.gmra.mrb[0].mxu0 %v4584
    %v5244 = vpop.f32.mrb[0].mxu0
    %v5245 = vadd.f32 %v5132, %v5244
    %v5246 = vpop.f32.mrb[0].mxu0
    %v5247 = vadd.f32 %v5134, %v5246
    %5248 = vmatprep.mubr.f32.mxu0 0.0
    %5249 = vmatmul.mubr.f32.gmra.mrb[0].mxu0 %v4587
    %v5250 = vpop.f32.mrb[0].mxu0
    %v5251 = vadd.f32 %v5138, %v5250
    %v5252 = vpop.f32.mrb[0].mxu0
    %v5253 = vadd.f32 %v5140, %v5252
    %5254 = vmatprep.mubr.f32.mxu0 0.0
    %5255 = vmatmul.mubr.f32.gmra.mrb[0].mxu0 %v4590
    %v5256 = vpop.f32.mrb[0].mxu0
    %v5257 = vadd.f32 %v5144, %v5256
    %v5258 = vpop.f32.mrb[0].mxu0
    %v5259 = vadd.f32 %v5146, %v5258
    %5260 = vmatprep.mubr.f32.mxu0 0.0
    %5261 = vmatmul.mubr.f32.gmra.mrb[0].mxu0 %v4593
    %v5262 = vpop.f32.mrb[0].mxu0
    %v5263 = vadd.f32 %v5150, %v5262
    %v5264 = vpop.f32.mrb[0].mxu0
    %v5265 = vadd.f32 %v5152, %v5264
    %5266 = vmatprep.mubr.f32.mxu0 0.0
    %5267 = vmatmul.mubr.f32.gmra.mrb[0].mxu0 %v4596
    %v5268 = vpop.f32.mrb[0].mxu0
    %v5269 = vadd.f32 %v5156, %v5268
    %v5270 = vpop.f32.mrb[0].mxu0
    %v5271 = vadd.f32 %v5158, %v5270
    %5272 = vmatprep.mubr.f32.mxu0 0.0
    %5273 = vmatmul.mubr.f32.gmra.mrb[0].mxu0 %v4599
    %v5274 = vpop.f32.mrb[0].mxu0
    %v5275 = vadd.f32 %v5162, %v5274
    %v5276 = vpop.f32.mrb[0].mxu0
    %v5277 = vadd.f32 %v5164, %v5276
    %5278 = vdwg.mxu0
    %v5279 = vadd.f32 %v4894, %v65
    %v5280 = vadd.f32 %v4896, %v66
    %v5281 = vadd.f32 %v5233, %v67
    %v5282 = vadd.f32 %v5235, %v68
    %v5283 = vadd.f32 %v4900, %v69
    %v5284 = vadd.f32 %v4902, %v70
    %v5285 = vadd.f32 %v5239, %v71
    %v5286 = vadd.f32 %v5241, %v72
    %v5287 = vadd.f32 %v4906, %v73
    %v5288 = vadd.f32 %v4908, %v74
    %v5289 = vadd.f32 %v5245, %v75
    %v5290 = vadd.f32 %v5247, %v76
    %v5291 = vadd.f32 %v4912, %v77
    %v5292 = vadd.f32 %v4914, %v78
    %v5293 = vadd.f32 %v5251, %v79
    %v5294 = vadd.f32 %v5253, %v80
    %v5295 = vadd.f32 %v4918, %v81
    %v5296 = vadd.f32 %v4920, %v82
    %v5297 = vadd.f32 %v5257, %v83
    %v5298 = vadd.f32 %v5259, %v84
    %v5299 = vadd.f32 %v4924, %v85
    %v5300 = vadd.f32 %v4926, %v86
    %v5301 = vadd.f32 %v5263, %v87
    %v5302 = vadd.f32 %v5265, %v88
    %v5303 = vadd.f32 %v4930, %v89
    %v5304 = vadd.f32 %v4932, %v90
    %v5305 = vadd.f32 %v5269, %v91
    %v5306 = vadd.f32 %v5271, %v92
    %v5307 = vadd.f32 %v4936, %v93
    %v5308 = vadd.f32 %v4938, %v94
    %v5309 = vadd.f32 %v5275, %v95
    %v5310 = vadd.f32 %v5277, %v96
    %5311 = vst [vmem:[#allocation9] sm:$0xff] %v5279
    %5312 = vst [vmem:[#allocation9 + $0x8] sm:$0xff] %v5280
    %5313 = vst [vmem:[#allocation9 + $0x10] sm:$0xff] %v5281
    %5314 = vst [vmem:[#allocation9 + $0x18] sm:$0xff] %v5282
    %5315 = vst [vmem:[#allocation9 + $0x20] sm:$0xff] %v5283
    %5316 = vst [vmem:[#allocation9 + $0x28] sm:$0xff] %v5284
    %5317 = vst [vmem:[#allocation9 + $0x30] sm:$0xff] %v5285
    %5318 = vst [vmem:[#allocation9 + $0x38] sm:$0xff] %v5286
    %5319 = vst [vmem:[#allocation9 + $0x40] sm:$0xff] %v5287
    %5320 = vst [vmem:[#allocation9 + $0x48] sm:$0xff] %v5288
    %5321 = vst [vmem:[#allocation9 + $0x50] sm:$0xff] %v5289
    %5322 = vst [vmem:[#allocation9 + $0x58] sm:$0xff] %v5290
    %5323 = vst [vmem:[#allocation9 + $0x60] sm:$0xff] %v5291
    %5324 = vst [vmem:[#allocation9 + $0x68] sm:$0xff] %v5292
    %5325 = vst [vmem:[#allocation9 + $0x70] sm:$0xff] %v5293
    %5326 = vst [vmem:[#allocation9 + $0x78] sm:$0xff] %v5294
    %5327 = vst [vmem:[#allocation9 + $0x80] sm:$0xff] %v5295
    %5328 = vst [vmem:[#allocation9 + $0x88] sm:$0xff] %v5296
    %5329 = vst [vmem:[#allocation9 + $0x90] sm:$0xff] %v5297
    %5330 = vst [vmem:[#allocation9 + $0x98] sm:$0xff] %v5298
    %5331 = vst [vmem:[#allocation9 + $0xa0] sm:$0xff] %v5299
    %5332 = vst [vmem:[#allocation9 + $0xa8] sm:$0xff] %v5300
    %5333 = vst [vmem:[#allocation9 + $0xb0] sm:$0xff] %v5301
    %5334 = vst [vmem:[#allocation9 + $0xb8] sm:$0xff] %v5302
    %5335 = vst [vmem:[#allocation9 + $0xc0] sm:$0xff] %v5303
    %5336 = vst [vmem:[#allocation9 + $0xc8] sm:$0xff] %v5304
    %5337 = vst [vmem:[#allocation9 + $0xd0] sm:$0xff] %v5305
    %5338 = vst [vmem:[#allocation9 + $0xd8] sm:$0xff] %v5306
    %5339 = vst [vmem:[#allocation9 + $0xe0] sm:$0xff] %v5307
    %5340 = vst [vmem:[#allocation9 + $0xe8] sm:$0xff] %v5308
    %5341 = vst [vmem:[#allocation9 + $0xf0] sm:$0xff] %v5309
    %5342 = vst [vmem:[#allocation9 + $0xf8] sm:$0xff] %v5310
    // Predicated region
    $region38: #{tpu_custom_call.1} parent=1 // pred_check
      _
    $region39: #{tpu_custom_call.1} parent=1 // pred_check_branch
      %5344 = sbr.rel (0) target = $region41
    $region40: #{tpu_custom_call.1} parent=1 // pred_region
      %s5346 = ssub.s32 4096, 4096
      %5347 = vsyncadd [#allocation5], %s5346
      %s5348 = sshll.u32 [#allocation9], 4
      %s5349 = int_to_ptr.vmem [resolvable:$true] %s5348
      %5354 = dma.vmem_to_hbm [thread:$0]  %s5349, 4096, %s6, [#allocation5], 512, 512, 32
    $region41: #{tpu_custom_call.1} parent=1 // pred_fallthru
      _
    // Predicated region
    $region42: #{tpu_custom_call.1} parent=1 // pred_check
      _
    $region43: #{tpu_custom_call.1} parent=1 // pred_check_branch
      %5356 = sbr.rel (0) target = $region45
    $region44: #{tpu_custom_call.1} parent=1 // pred_region
      %5357 = dma.done [#allocation5], 4096
    $region45: #{tpu_custom_call.1} parent=1 // pred_fallthru
      _
    %5358 = vsyncpa [#allocation4], 1
    %5359 = vsyncpa [#allocation7], 1
    %5360 = vsyncpa [#allocation5], 1

</llo_original>
